<compile_context>
chip_gen: v7x
topology: tpu7x:2x2x1
jax: 0.10.0
libtpu: 0.0.40
codegen_flags: <defaults>
</compile_context>

<pallas_src>
import numpy as np
import jax
import jax.numpy as jnp
from jax import lax
from jax.experimental import pallas as pl
from jax.experimental.pallas import tpu as pltpu

_EPS = 1e-5


# -----------------------------------------------------------------------------
# Trace-time (numpy) constant builders, all in the flat (C, H*W) layout.
# -----------------------------------------------------------------------------
def _np_conv_masks(h, w):
    """(9, h*w) {0,1} validity masks for the 3x3 taps (dy-major, dx inner)."""
    yy, xx = np.mgrid[0:h, 0:w]
    rows = []
    for dy in (-1, 0, 1):
        for dx in (-1, 0, 1):
            ok = ((yy + dy >= 0) & (yy + dy < h) &
                  (xx + dx >= 0) & (xx + dx < w))
            rows.append(ok.reshape(-1))
    return np.stack(rows, 0).astype(np.float32)


def _np_pool_select(h, w):
    """(h*w, h*w//4) 0/1 matrix picking the top-left element of each 2x2."""
    ho, wo = h // 2, w // 2
    sel = np.zeros((h * w, ho * wo), np.float32)
    for yq in range(ho):
        for xq in range(wo):
            sel[(2 * yq) * w + 2 * xq, yq * wo + xq] = 1.0
    return sel


def _np_upsample_1d(n):
    """(2n, n) bilinear x2 matrix, align_corners=False (PyTorch convention)."""
    a = np.zeros((2 * n, n), np.float32)
    for o in range(2 * n):
        s = min(max((o + 0.5) * 0.5 - 0.5, 0.0), n - 1.0)
        i0 = int(np.floor(s))
        i1 = min(i0 + 1, n - 1)
        f = s - i0
        a[o, i0] += 1.0 - f
        a[o, i1] += f
    return a


def _np_upsample_mat(h, w):
    """(h*w, 4*h*w): flat (h,w) image @ U -> flat (2h,2w) bilinear upsample."""
    m = np.kron(_np_upsample_1d(h), _np_upsample_1d(w))     # (4hw, hw)
    return np.ascontiguousarray(m.T).astype(np.float32)


# -----------------------------------------------------------------------------
# In-kernel helpers (operate on values in the flat (C, H*W) layout)
# -----------------------------------------------------------------------------
def _shift_flat(x, d):
    """out[:, p] = x[:, (p + d) mod HW]; wrapped positions are masked by caller."""
    if d == 0:
        return x
    return jnp.concatenate([x[:, d:], x[:, :d]], axis=-1)


def _conv3_in_relu(x, w_flat, mask9, w_img):
    """3x3 conv (pad=1, bias-free) + InstanceNorm(no affine) + ReLU.

    x:      (Cin, HW)      f32, flat spatial with image width `w_img`
    w_flat: (Cout, 9*Cin)  bf16, taps ordered dy-major, dx, then ci
    mask9:  (9, HW)        f32 {0,1} tap-validity masks
    """
    taps = []
    k = 0
    for dy in (-1, 0, 1):
        for dx in (-1, 0, 1):
            t = _shift_flat(x, dy * w_img + dx)
            if dy != 0 or dx != 0:
                t = t * mask9[k:k + 1, :]
            taps.append(t)
            k += 1
    xcol = jnp.concatenate(taps, axis=0).astype(jnp.bfloat16)      # (9Cin, HW)
    acc = jnp.dot(w_flat, xcol, preferred_element_type=jnp.float32)  # (Cout,HW)

    # InstanceNorm2d (no affine, biased variance), single-pass statistics.
    inv_hw = 1.0 / acc.shape[-1]
    mean = jnp.sum(acc, axis=-1, keepdims=True) * inv_hw
    var = jnp.sum(acc * acc, axis=-1, keepdims=True) * inv_hw - mean * mean
    var = jnp.maximum(var, 0.0)
    y = (acc - mean) * lax.rsqrt(var + _EPS)
    # ReLU; Dropout2d is identity in eval mode.
    return jnp.maximum(y, 0.0)


def _maxpool2(x, sel, w_img):
    """2x2/stride-2 max-pool on flat (C, HW) -> (C, HW//4)."""
    m = jnp.maximum(jnp.maximum(x, _shift_flat(x, 1)),
                    jnp.maximum(_shift_flat(x, w_img),
                                _shift_flat(x, w_img + 1)))
    return jnp.dot(m, sel, preferred_element_type=jnp.float32)


def _make_unet_kernel(num_pool, widths):
    """Fused per-sample U-Net kernel; widths[l] = image width at level l."""

    def kernel(*refs):
        it = iter(refs)
        x_ref = next(it)
        down_w = [next(it) for _ in range(num_pool)]
        mid_w = next(it)
        up_w = [next(it) for _ in range(num_pool)]
        head_w = next(it)
        head_b = next(it)
        masks = [next(it) for _ in range(num_pool + 1)]
        sels = [next(it) for _ in range(num_pool)]
        ups = [next(it) for _ in range(num_pool)]
        o_ref = next(it)

        x = x_ref[0]                                     # (Cin, HW0) f32
        out = x
        skips = []
        # -------- encoder --------
        for l in range(num_pool):
            out = _conv3_in_relu(out, down_w[l][...], masks[l][...], widths[l])
            skips.append(out)
            out = _maxpool2(out, sels[l][...], widths[l])
        # -------- bottleneck --------
        out = _conv3_in_relu(out, mid_w[...], masks[num_pool][...],
                             widths[num_pool])
        # -------- decoder --------
        for i in range(num_pool):
            lvl = num_pool - 1 - i
            out = jnp.dot(out, ups[i][...],
                          preferred_element_type=jnp.float32)   # bilinear x2
            out = jnp.concatenate([out, skips.pop()], axis=0)   # channel cat
            out = _conv3_in_relu(out, up_w[i][...], masks[lvl][...],
                                 widths[lvl])
        # -------- collapsed 1x1x1 head (conv2) + residual --------
        head = jnp.dot(head_w[...], out,
                       preferred_element_type=jnp.float32) + head_b[...]
        o_ref[0] = (head + x).astype(o_ref.dtype)

    return kernel


# -----------------------------------------------------------------------------
# Fused U-Net pallas_call wrapper
# -----------------------------------------------------------------------------
def _fused_unet(x_flat, params, H, W, out_chans):
    """x_flat: (N, Cin, H*W) f32 -> fs_out (N, out_chans, H*W) f32 (pre-DC)."""
    N, Cin, HW = x_flat.shape
    num_pool = len(params["down"])
    assert H % (1 << num_pool) == 0 and W % (1 << num_pool) == 0

    # ---- flatten conv weights (bias dropped: no-op before non-affine IN) ----
    def flat_w(w):                       # (3,3,cin,cout) -> (cout, 9*cin) bf16
        cin, cout = w.shape[2], w.shape[3]
        return jnp.transpose(w.reshape(9 * cin, cout)).astype(jnp.bfloat16)

    down_w = [flat_w(w) for (w, _b) in params["down"]]
    mid_w = flat_w(params["conv"][0])
    up_w = [flat_w(w) for (w, _b) in params["up"]]

    # ---- collapse the three chained 1x1 convs of conv2 into one ----
    (w1, b1), (w2, b2), (w3, b3) = params["head"]
    head_w = jnp.transpose(w1 @ w2 @ w3)                    # (out_chans, ch)
    head_b = (b1 @ w2 @ w3 + b2 @ w3 + b3).reshape(out_chans, 1)

    # ---- static helper matrices (trace-time numpy constants) ----
    heights = [H >> l for l in range(num_pool + 1)]
    widths = [W >> l for l in range(num_pool + 1)]
    masks = [jnp.asarray(_np_conv_masks(heights[l], widths[l]))
             for l in range(num_pool + 1)]
    sels = [jnp.asarray(_np_pool_select(heights[l], widths[l]))
            for l in range(num_pool)]
    ups = [jnp.asarray(_np_upsample_mat(heights[num_pool - i],
                                        widths[num_pool - i]))
           for i in range(num_pool)]

    operands = ([x_flat] + down_w + [mid_w] + up_w + [head_w, head_b]
                + masks + sels + ups)

    def full_spec(a):
        zeros = (0,) * a.ndim
        return pl.BlockSpec(a.shape, lambda n, _z=zeros: _z)

    in_specs = ([pl.BlockSpec((1, Cin, HW), lambda n: (n, 0, 0))]
                + [full_spec(a) for a in operands[1:]])
    out_spec = pl.BlockSpec((1, out_chans, HW), lambda n: (n, 0, 0))

    # ---- advisory cost estimate for the XLA scheduler ----
    down_cout = [w.shape[3] for (w, _b) in params["down"]]
    up_cout = [w.shape[3] for (w, _b) in params["up"]]
    mid_cout = params["conv"][0].shape[3]
    conv_lvls = (list(range(num_pool)) + [num_pool]
                 + list(range(num_pool - 1, -1, -1)))
    flops = 0
    transcendentals = 0
    for wf, lvl in zip(down_w + [mid_w] + up_w, conv_lvls):
        flops += 2 * wf.shape[0] * wf.shape[1] * heights[lvl] * widths[lvl]
        transcendentals += wf.shape[0]
    for l in range(num_pool):
        flops += 2 * sels[l].shape[0] * sels[l].shape[1] * down_cout[l]
    ups_cin = [mid_cout] + up_cout[:-1]
    for i in range(num_pool):
        flops += 2 * ups[i].shape[0] * ups[i].shape[1] * ups_cin[i]
    flops += 2 * head_w.shape[0] * head_w.shape[1] * HW
    flops *= N
    transcendentals *= N
    bytes_accessed = N * out_chans * HW * 4
    for a in operands:
        bytes_accessed += int(np.prod(a.shape)) * a.dtype.itemsize

    kernel = _make_unet_kernel(num_pool, widths)
    return pl.pallas_call(
        kernel,
        out_shape=jax.ShapeDtypeStruct((N, out_chans, HW), jnp.float32),
        grid_spec=pltpu.PrefetchScalarGridSpec(
            num_scalar_prefetch=0,
            grid=(N,),
            in_specs=in_specs,
            out_specs=out_spec,
        ),
        compiler_params=pltpu.CompilerParams(
            dimension_semantics=("parallel",)),
        cost_estimate=pl.CostEstimate(
            flops=int(flops),
            transcendentals=int(transcendentals),
            bytes_accessed=int(bytes_accessed)),
    )(*operands)


# -----------------------------------------------------------------------------
# Data consistency (FFT-based, plain JAX) and full forward
# -----------------------------------------------------------------------------
def data_consistency(fs_out, us_kspace, us_mask):
    """DataConsistencyLayer.forward; fs_out: (N, C, H, W) -> (N, 1, H, W)."""
    pred = fs_out[:, 0, :, :]
    ksp_pred = jnp.fft.fft2(pred, norm="ortho")
    us_ksp_c = us_kspace[..., 0] + 1j * us_kspace[..., 1]
    updated = us_mask * us_ksp_c + (1.0 - us_mask) * ksp_pred
    img = jnp.fft.ifft2(updated, norm="ortho")
    return jnp.real(img)[:, None, :, :].astype(jnp.float32)


@jax.jit
def unet_forward(params, us_query_input, ksp_query_imgs, ksp_mask_query):
    """UnetModel.forward.

    us_query_input:  (N, in_chans, H, W)   NCHW, like PyTorch
    ksp_query_imgs:  (N, H, W, 2)          real/imag of undersampled k-space
    ksp_mask_query:  (N, H, W)             sampling mask
    returns:         (N, 1, H, W)          float32
    """
    N, Cin, H, W = us_query_input.shape
    out_chans = params["head"][-1][0].shape[-1]
    x_flat = us_query_input.reshape(N, Cin, H * W).astype(jnp.float32)
    fs_flat = _fused_unet(x_flat, params, H, W, out_chans)
    fs_out = fs_flat.reshape(N, out_chans, H, W)
    return data_consistency(fs_out, ksp_query_imgs, ksp_mask_query)


# -----------------------------------------------------------------------------
# Synthetic parameter init (deterministic)
# -----------------------------------------------------------------------------
def _conv3_params(key, cin, cout):
    kw, kb = jax.random.split(key)
    scale = 1.0 / float(9 * cin) ** 0.5
    w = jax.random.normal(kw, (3, 3, cin, cout), jnp.float32) * scale
    # Conv bias kept for parameter-structure parity with PyTorch, but it is a
    # mathematical no-op before the non-affine InstanceNorm and is not used.
    b = jax.random.normal(kb, (cout,), jnp.float32) * 0.01
    return w, b


def _conv1_params(key, cin, cout):
    kw, kb = jax.random.split(key)
    scale = 1.0 / float(cin) ** 0.5
    w = jax.random.normal(kw, (cin, cout), jnp.float32) * scale
    b = jax.random.normal(kb, (cout,), jnp.float32) * 0.01
    return w, b


def init_params(key, in_chans, out_chans, chans, num_pool_layers):
    keys = iter(jax.random.split(key, 2 * num_pool_layers + 4))
    down = [_conv3_params(next(keys), in_chans, chans)]
    ch = chans
    for _ in range(num_pool_layers - 1):
        down.append(_conv3_params(next(keys), ch, ch * 2))
        ch *= 2
    mid = _conv3_params(next(keys), ch, ch)
    up = []
    for _ in range(num_pool_layers - 1):
        up.append(_conv3_params(next(keys), ch * 2, ch // 2))
        ch //= 2
    up.append(_conv3_params(next(keys), ch * 2, ch))
    head = [_conv1_params(next(keys), ch, ch // 2),
            _conv1_params(next(keys), ch // 2, out_chans),
            _conv1_params(next(keys), out_chans, out_chans)]
    return {"down": down, "conv": mid, "up": up, "head": head}


# -----------------------------------------------------------------------------
# Main
# -----------------------------------------------------------------------------
if __name__ == "__main__":
    key = jax.random.PRNGKey(0)
    k_param, k_x, k_ksp, k_mask = jax.random.split(key, 4)

    N, H, W = 2, 16, 16
    in_chans, out_chans = 1, 1
    chans, num_pool_layers = 8, 2

    params = init_params(k_param, in_chans, out_chans, chans, num_pool_layers)

    us_query_input = jax.random.normal(k_x, (N, in_chans, H, W), jnp.float32)
    ksp_query_imgs = jax.random.normal(k_ksp, (N, H, W, 2), jnp.float32)
    ksp_mask_query = (jax.random.uniform(k_mask, (N, H, W)) > 0.5).astype(
        jnp.float32)

    out = unet_forward(params, us_query_input, ksp_query_imgs, ksp_mask_query)
    out = jax.block_until_ready(out)
    assert out.shape == (N, 1, H, W) and out.dtype == jnp.float32
    assert bool(jnp.all(jnp.isfinite(out)))
    print("KERNEL_OK")
</pallas_src>

<mosaic_0001>
module attributes {stable_mosaic.version = 11 : i64} {
  func.func @kernel(%arg0: i32, %arg1: memref<1x1x256xf32, #tpu.memory_space<vmem>>, %arg2: memref<8x9xbf16, #tpu.memory_space<vmem>>, %arg3: memref<16x72xbf16, #tpu.memory_space<vmem>>, %arg4: memref<16x144xbf16, #tpu.memory_space<vmem>>, %arg5: memref<8x288xbf16, #tpu.memory_space<vmem>>, %arg6: memref<8x144xbf16, #tpu.memory_space<vmem>>, %arg7: memref<1x8xf32, #tpu.memory_space<vmem>>, %arg8: memref<1x1xf32, #tpu.memory_space<vmem>>, %arg9: memref<9x256xf32, #tpu.memory_space<vmem>>, %arg10: memref<9x64xf32, #tpu.memory_space<vmem>>, %arg11: memref<9x16xf32, #tpu.memory_space<vmem>>, %arg12: memref<256x64xf32, #tpu.memory_space<vmem>>, %arg13: memref<64x16xf32, #tpu.memory_space<vmem>>, %arg14: memref<16x64xf32, #tpu.memory_space<vmem>>, %arg15: memref<64x256xf32, #tpu.memory_space<vmem>>, %arg16: memref<1x1x256xf32, #tpu.memory_space<vmem>>) attributes {dimension_semantics = [#tpu.dimension_semantics<parallel>], iteration_bounds = array<i64: 2>, scalar_prefetch = 0 : i64, scratch_operands = 0 : i64, tpu.core_type = #tpu.core_type<tc>, window_params = [{transform_indices = @transform_0, window_bounds = array<i64: 1, 1, 256>}, {pipeline_mode = #tpu.pipeline_mode<synchronous>, transform_indices = @transform_1, window_bounds = array<i64: 8, 9>}, {pipeline_mode = #tpu.pipeline_mode<synchronous>, transform_indices = @transform_2, window_bounds = array<i64: 16, 72>}, {pipeline_mode = #tpu.pipeline_mode<synchronous>, transform_indices = @transform_3, window_bounds = array<i64: 16, 144>}, {pipeline_mode = #tpu.pipeline_mode<synchronous>, transform_indices = @transform_4, window_bounds = array<i64: 8, 288>}, {pipeline_mode = #tpu.pipeline_mode<synchronous>, transform_indices = @transform_5, window_bounds = array<i64: 8, 144>}, {pipeline_mode = #tpu.pipeline_mode<synchronous>, transform_indices = @transform_6, window_bounds = array<i64: 1, 8>}, {pipeline_mode = #tpu.pipeline_mode<synchronous>, transform_indices = @transform_7, window_bounds = array<i64: 1, 1>}, {pipeline_mode = #tpu.pipeline_mode<synchronous>, transform_indices = @transform_8, window_bounds = array<i64: 9, 256>}, {pipeline_mode = #tpu.pipeline_mode<synchronous>, transform_indices = @transform_9, window_bounds = array<i64: 9, 64>}, {pipeline_mode = #tpu.pipeline_mode<synchronous>, transform_indices = @transform_10, window_bounds = array<i64: 9, 16>}, {pipeline_mode = #tpu.pipeline_mode<synchronous>, transform_indices = @transform_11, window_bounds = array<i64: 256, 64>}, {pipeline_mode = #tpu.pipeline_mode<synchronous>, transform_indices = @transform_12, window_bounds = array<i64: 64, 16>}, {pipeline_mode = #tpu.pipeline_mode<synchronous>, transform_indices = @transform_13, window_bounds = array<i64: 16, 64>}, {pipeline_mode = #tpu.pipeline_mode<synchronous>, transform_indices = @transform_14, window_bounds = array<i64: 64, 256>}, {transform_indices = @transform_15, window_bounds = array<i64: 1, 1, 256>}]} {
    %c0 = arith.constant 0 : index
    %c0_0 = arith.constant 0 : index
    %c0_1 = arith.constant 0 : index
    %0 = vector.load %arg1[%c0, %c0_0, %c0_1] : memref<1x1x256xf32, #tpu.memory_space<vmem>>, vector<1x1x256xf32>
    %1 = vector.shape_cast %0 : vector<1x1x256xf32> to vector<1x256xf32>
    %c0_2 = arith.constant 0 : index
    %c0_3 = arith.constant 0 : index
    %2 = vector.load %arg2[%c0_2, %c0_3] : memref<8x9xbf16, #tpu.memory_space<vmem>>, vector<8x9xbf16>
    %c0_4 = arith.constant 0 : index
    %c0_5 = arith.constant 0 : index
    %3 = vector.load %arg9[%c0_4, %c0_5] : memref<9x256xf32, #tpu.memory_space<vmem>>, vector<9x256xf32>
    %4 = vector.extract_strided_slice %1 {offsets = [0, 239], sizes = [1, 17], strides = [1, 1]} : vector<1x256xf32> to vector<1x17xf32>
    %5 = vector.extract_strided_slice %1 {offsets = [0, 0], sizes = [1, 239], strides = [1, 1]} : vector<1x256xf32> to vector<1x239xf32>
    %6 = tpu.concatenate %4, %5 in 1 : vector<1x17xf32>, vector<1x239xf32> -> vector<1x256xf32>
    %7 = vector.extract_strided_slice %3 {offsets = [0, 0], sizes = [1, 256], strides = [1, 1]} : vector<9x256xf32> to vector<1x256xf32>
    %8 = arith.mulf %6, %7 : vector<1x256xf32>
    %9 = vector.extract_strided_slice %1 {offsets = [0, 240], sizes = [1, 16], strides = [1, 1]} : vector<1x256xf32> to vector<1x16xf32>
    %10 = vector.extract_strided_slice %1 {offsets = [0, 0], sizes = [1, 240], strides = [1, 1]} : vector<1x256xf32> to vector<1x240xf32>
    %11 = tpu.concatenate %9, %10 in 1 : vector<1x16xf32>, vector<1x240xf32> -> vector<1x256xf32>
    %12 = vector.extract_strided_slice %3 {offsets = [1, 0], sizes = [1, 256], strides = [1, 1]} : vector<9x256xf32> to vector<1x256xf32>
    %13 = arith.mulf %11, %12 : vector<1x256xf32>
    %14 = vector.extract_strided_slice %1 {offsets = [0, 241], sizes = [1, 15], strides = [1, 1]} : vector<1x256xf32> to vector<1x15xf32>
    %15 = vector.extract_strided_slice %1 {offsets = [0, 0], sizes = [1, 241], strides = [1, 1]} : vector<1x256xf32> to vector<1x241xf32>
    %16 = tpu.concatenate %14, %15 in 1 : vector<1x15xf32>, vector<1x241xf32> -> vector<1x256xf32>
    %17 = vector.extract_strided_slice %3 {offsets = [2, 0], sizes = [1, 256], strides = [1, 1]} : vector<9x256xf32> to vector<1x256xf32>
    %18 = arith.mulf %16, %17 : vector<1x256xf32>
    %19 = vector.extract_strided_slice %1 {offsets = [0, 255], sizes = [1, 1], strides = [1, 1]} : vector<1x256xf32> to vector<1x1xf32>
    %20 = vector.extract_strided_slice %1 {offsets = [0, 0], sizes = [1, 255], strides = [1, 1]} : vector<1x256xf32> to vector<1x255xf32>
    %21 = tpu.concatenate %19, %20 in 1 : vector<1x1xf32>, vector<1x255xf32> -> vector<1x256xf32>
    %22 = vector.extract_strided_slice %3 {offsets = [3, 0], sizes = [1, 256], strides = [1, 1]} : vector<9x256xf32> to vector<1x256xf32>
    %23 = arith.mulf %21, %22 : vector<1x256xf32>
    %24 = vector.extract_strided_slice %1 {offsets = [0, 1], sizes = [1, 255], strides = [1, 1]} : vector<1x256xf32> to vector<1x255xf32>
    %25 = vector.extract_strided_slice %1 {offsets = [0, 0], sizes = [1, 1], strides = [1, 1]} : vector<1x256xf32> to vector<1x1xf32>
    %26 = tpu.concatenate %24, %25 in 1 : vector<1x255xf32>, vector<1x1xf32> -> vector<1x256xf32>
    %27 = vector.extract_strided_slice %3 {offsets = [5, 0], sizes = [1, 256], strides = [1, 1]} : vector<9x256xf32> to vector<1x256xf32>
    %28 = arith.mulf %26, %27 : vector<1x256xf32>
    %29 = vector.extract_strided_slice %1 {offsets = [0, 15], sizes = [1, 241], strides = [1, 1]} : vector<1x256xf32> to vector<1x241xf32>
    %30 = vector.extract_strided_slice %1 {offsets = [0, 0], sizes = [1, 15], strides = [1, 1]} : vector<1x256xf32> to vector<1x15xf32>
    %31 = tpu.concatenate %29, %30 in 1 : vector<1x241xf32>, vector<1x15xf32> -> vector<1x256xf32>
    %32 = vector.extract_strided_slice %3 {offsets = [6, 0], sizes = [1, 256], strides = [1, 1]} : vector<9x256xf32> to vector<1x256xf32>
    %33 = arith.mulf %31, %32 : vector<1x256xf32>
    %34 = vector.extract_strided_slice %1 {offsets = [0, 16], sizes = [1, 240], strides = [1, 1]} : vector<1x256xf32> to vector<1x240xf32>
    %35 = vector.extract_strided_slice %1 {offsets = [0, 0], sizes = [1, 16], strides = [1, 1]} : vector<1x256xf32> to vector<1x16xf32>
    %36 = tpu.concatenate %34, %35 in 1 : vector<1x240xf32>, vector<1x16xf32> -> vector<1x256xf32>
    %37 = vector.extract_strided_slice %3 {offsets = [7, 0], sizes = [1, 256], strides = [1, 1]} : vector<9x256xf32> to vector<1x256xf32>
    %38 = arith.mulf %36, %37 : vector<1x256xf32>
    %39 = vector.extract_strided_slice %1 {offsets = [0, 17], sizes = [1, 239], strides = [1, 1]} : vector<1x256xf32> to vector<1x239xf32>
    %40 = vector.extract_strided_slice %1 {offsets = [0, 0], sizes = [1, 17], strides = [1, 1]} : vector<1x256xf32> to vector<1x17xf32>
    %41 = tpu.concatenate %39, %40 in 1 : vector<1x239xf32>, vector<1x17xf32> -> vector<1x256xf32>
    %42 = vector.extract_strided_slice %3 {offsets = [8, 0], sizes = [1, 256], strides = [1, 1]} : vector<9x256xf32> to vector<1x256xf32>
    %43 = arith.mulf %41, %42 : vector<1x256xf32>
    %44 = tpu.concatenate %8, %13, %18, %23, %1, %28, %33, %38, %43 in 0 : vector<1x256xf32>, vector<1x256xf32>, vector<1x256xf32>, vector<1x256xf32>, vector<1x256xf32>, vector<1x256xf32>, vector<1x256xf32>, vector<1x256xf32>, vector<1x256xf32> -> vector<9x256xf32>
    %45 = arith.truncf %44 : vector<9x256xf32> to vector<9x256xbf16>
    %cst = arith.constant dense<0.000000e+00> : vector<8x256xf32>
    %46 = tpu.matmul %2, %45, %cst {dimension_numbers = #tpu.dot_dimension_numbers<[1], [0], [0], [1], [0, 0, 1, 1], [], []>} : vector<8x9xbf16>, vector<9x256xbf16>, vector<8x256xf32> -> vector<8x256xf32>
    %cst_6 = arith.constant dense<0.000000e+00> : vector<8xf32>
    %47 = vector.multi_reduction <add>, %46, %cst_6 [1] : vector<8x256xf32> to vector<8xf32>
    %48 = vector.shape_cast %47 : vector<8xf32> to vector<8x1xf32>
    %cst_7 = arith.constant 3.906250e-03 : f32
    %49 = vector.broadcast %cst_7 : f32 to vector<8x1xf32>
    %50 = arith.mulf %48, %49 : vector<8x1xf32>
    %51 = arith.mulf %46, %46 : vector<8x256xf32>
    %cst_8 = arith.constant dense<0.000000e+00> : vector<8xf32>
    %52 = vector.multi_reduction <add>, %51, %cst_8 [1] : vector<8x256xf32> to vector<8xf32>
    %53 = vector.shape_cast %52 : vector<8xf32> to vector<8x1xf32>
    %cst_9 = arith.constant 3.906250e-03 : f32
    %54 = vector.broadcast %cst_9 : f32 to vector<8x1xf32>
    %55 = arith.mulf %53, %54 : vector<8x1xf32>
    %56 = arith.mulf %50, %50 : vector<8x1xf32>
    %57 = arith.subf %55, %56 : vector<8x1xf32>
    %cst_10 = arith.constant 0.000000e+00 : f32
    %58 = vector.broadcast %cst_10 : f32 to vector<8x1xf32>
    %59 = arith.maximumf %57, %58 : vector<8x1xf32>
    %60 = vector.broadcast %50 : vector<8x1xf32> to vector<8x256xf32>
    %61 = arith.subf %46, %60 : vector<8x256xf32>
    %cst_11 = arith.constant 9.99999974E-6 : f32
    %62 = vector.broadcast %cst_11 : f32 to vector<8x1xf32>
    %63 = arith.addf %59, %62 : vector<8x1xf32>
    %64 = math.rsqrt %63 : vector<8x1xf32>
    %65 = vector.broadcast %64 : vector<8x1xf32> to vector<8x256xf32>
    %66 = arith.mulf %61, %65 : vector<8x256xf32>
    %cst_12 = arith.constant 0.000000e+00 : f32
    %67 = vector.broadcast %cst_12 : f32 to vector<8x256xf32>
    %68 = arith.maximumf %66, %67 : vector<8x256xf32>
    %c0_13 = arith.constant 0 : index
    %c0_14 = arith.constant 0 : index
    %69 = vector.load %arg12[%c0_13, %c0_14] : memref<256x64xf32, #tpu.memory_space<vmem>>, vector<256x64xf32>
    %70 = vector.extract_strided_slice %68 {offsets = [0, 1], sizes = [8, 255], strides = [1, 1]} : vector<8x256xf32> to vector<8x255xf32>
    %71 = vector.extract_strided_slice %68 {offsets = [0, 0], sizes = [8, 1], strides = [1, 1]} : vector<8x256xf32> to vector<8x1xf32>
    %72 = tpu.concatenate %70, %71 in 1 : vector<8x255xf32>, vector<8x1xf32> -> vector<8x256xf32>
    %73 = arith.maximumf %68, %72 : vector<8x256xf32>
    %74 = vector.extract_strided_slice %68 {offsets = [0, 16], sizes = [8, 240], strides = [1, 1]} : vector<8x256xf32> to vector<8x240xf32>
    %75 = vector.extract_strided_slice %68 {offsets = [0, 0], sizes = [8, 16], strides = [1, 1]} : vector<8x256xf32> to vector<8x16xf32>
    %76 = tpu.concatenate %74, %75 in 1 : vector<8x240xf32>, vector<8x16xf32> -> vector<8x256xf32>
    %77 = vector.extract_strided_slice %68 {offsets = [0, 17], sizes = [8, 239], strides = [1, 1]} : vector<8x256xf32> to vector<8x239xf32>
    %78 = vector.extract_strided_slice %68 {offsets = [0, 0], sizes = [8, 17], strides = [1, 1]} : vector<8x256xf32> to vector<8x17xf32>
    %79 = tpu.concatenate %77, %78 in 1 : vector<8x239xf32>, vector<8x17xf32> -> vector<8x256xf32>
    %80 = arith.maximumf %76, %79 : vector<8x256xf32>
    %81 = arith.maximumf %73, %80 : vector<8x256xf32>
    %cst_15 = arith.constant dense<0.000000e+00> : vector<8x64xf32>
    %82 = tpu.matmul %81, %69, %cst_15 {dimension_numbers = #tpu.dot_dimension_numbers<[1], [0], [0], [1], [0, 0, 1, 1], [], []>} : vector<8x256xf32>, vector<256x64xf32>, vector<8x64xf32> -> vector<8x64xf32>
    %c0_16 = arith.constant 0 : index
    %c0_17 = arith.constant 0 : index
    %83 = vector.load %arg3[%c0_16, %c0_17] : memref<16x72xbf16, #tpu.memory_space<vmem>>, vector<16x72xbf16>
    %c0_18 = arith.constant 0 : index
    %c0_19 = arith.constant 0 : index
    %84 = vector.load %arg10[%c0_18, %c0_19] : memref<9x64xf32, #tpu.memory_space<vmem>>, vector<9x64xf32>
    %85 = vector.extract_strided_slice %82 {offsets = [0, 55], sizes = [8, 9], strides = [1, 1]} : vector<8x64xf32> to vector<8x9xf32>
    %86 = vector.extract_strided_slice %82 {offsets = [0, 0], sizes = [8, 55], strides = [1, 1]} : vector<8x64xf32> to vector<8x55xf32>
    %87 = tpu.concatenate %85, %86 in 1 : vector<8x9xf32>, vector<8x55xf32> -> vector<8x64xf32>
    %88 = vector.extract_strided_slice %84 {offsets = [0, 0], sizes = [1, 64], strides = [1, 1]} : vector<9x64xf32> to vector<1x64xf32>
    %89 = vector.broadcast %88 : vector<1x64xf32> to vector<8x64xf32>
    %90 = arith.mulf %87, %89 : vector<8x64xf32>
    %91 = vector.extract_strided_slice %82 {offsets = [0, 56], sizes = [8, 8], strides = [1, 1]} : vector<8x64xf32> to vector<8x8xf32>
    %92 = vector.extract_strided_slice %82 {offsets = [0, 0], sizes = [8, 56], strides = [1, 1]} : vector<8x64xf32> to vector<8x56xf32>
    %93 = tpu.concatenate %91, %92 in 1 : vector<8x8xf32>, vector<8x56xf32> -> vector<8x64xf32>
    %94 = vector.extract_strided_slice %84 {offsets = [1, 0], sizes = [1, 64], strides = [1, 1]} : vector<9x64xf32> to vector<1x64xf32>
    %95 = vector.broadcast %94 : vector<1x64xf32> to vector<8x64xf32>
    %96 = arith.mulf %93, %95 : vector<8x64xf32>
    %97 = vector.extract_strided_slice %82 {offsets = [0, 57], sizes = [8, 7], strides = [1, 1]} : vector<8x64xf32> to vector<8x7xf32>
    %98 = vector.extract_strided_slice %82 {offsets = [0, 0], sizes = [8, 57], strides = [1, 1]} : vector<8x64xf32> to vector<8x57xf32>
    %99 = tpu.concatenate %97, %98 in 1 : vector<8x7xf32>, vector<8x57xf32> -> vector<8x64xf32>
    %100 = vector.extract_strided_slice %84 {offsets = [2, 0], sizes = [1, 64], strides = [1, 1]} : vector<9x64xf32> to vector<1x64xf32>
    %101 = vector.broadcast %100 : vector<1x64xf32> to vector<8x64xf32>
    %102 = arith.mulf %99, %101 : vector<8x64xf32>
    %103 = vector.extract_strided_slice %82 {offsets = [0, 63], sizes = [8, 1], strides = [1, 1]} : vector<8x64xf32> to vector<8x1xf32>
    %104 = vector.extract_strided_slice %82 {offsets = [0, 0], sizes = [8, 63], strides = [1, 1]} : vector<8x64xf32> to vector<8x63xf32>
    %105 = tpu.concatenate %103, %104 in 1 : vector<8x1xf32>, vector<8x63xf32> -> vector<8x64xf32>
    %106 = vector.extract_strided_slice %84 {offsets = [3, 0], sizes = [1, 64], strides = [1, 1]} : vector<9x64xf32> to vector<1x64xf32>
    %107 = vector.broadcast %106 : vector<1x64xf32> to vector<8x64xf32>
    %108 = arith.mulf %105, %107 : vector<8x64xf32>
    %109 = vector.extract_strided_slice %82 {offsets = [0, 1], sizes = [8, 63], strides = [1, 1]} : vector<8x64xf32> to vector<8x63xf32>
    %110 = vector.extract_strided_slice %82 {offsets = [0, 0], sizes = [8, 1], strides = [1, 1]} : vector<8x64xf32> to vector<8x1xf32>
    %111 = tpu.concatenate %109, %110 in 1 : vector<8x63xf32>, vector<8x1xf32> -> vector<8x64xf32>
    %112 = vector.extract_strided_slice %84 {offsets = [5, 0], sizes = [1, 64], strides = [1, 1]} : vector<9x64xf32> to vector<1x64xf32>
    %113 = vector.broadcast %112 : vector<1x64xf32> to vector<8x64xf32>
    %114 = arith.mulf %111, %113 : vector<8x64xf32>
    %115 = vector.extract_strided_slice %82 {offsets = [0, 7], sizes = [8, 57], strides = [1, 1]} : vector<8x64xf32> to vector<8x57xf32>
    %116 = vector.extract_strided_slice %82 {offsets = [0, 0], sizes = [8, 7], strides = [1, 1]} : vector<8x64xf32> to vector<8x7xf32>
    %117 = tpu.concatenate %115, %116 in 1 : vector<8x57xf32>, vector<8x7xf32> -> vector<8x64xf32>
    %118 = vector.extract_strided_slice %84 {offsets = [6, 0], sizes = [1, 64], strides = [1, 1]} : vector<9x64xf32> to vector<1x64xf32>
    %119 = vector.broadcast %118 : vector<1x64xf32> to vector<8x64xf32>
    %120 = arith.mulf %117, %119 : vector<8x64xf32>
    %121 = vector.extract_strided_slice %82 {offsets = [0, 8], sizes = [8, 56], strides = [1, 1]} : vector<8x64xf32> to vector<8x56xf32>
    %122 = vector.extract_strided_slice %82 {offsets = [0, 0], sizes = [8, 8], strides = [1, 1]} : vector<8x64xf32> to vector<8x8xf32>
    %123 = tpu.concatenate %121, %122 in 1 : vector<8x56xf32>, vector<8x8xf32> -> vector<8x64xf32>
    %124 = vector.extract_strided_slice %84 {offsets = [7, 0], sizes = [1, 64], strides = [1, 1]} : vector<9x64xf32> to vector<1x64xf32>
    %125 = vector.broadcast %124 : vector<1x64xf32> to vector<8x64xf32>
    %126 = arith.mulf %123, %125 : vector<8x64xf32>
    %127 = vector.extract_strided_slice %82 {offsets = [0, 9], sizes = [8, 55], strides = [1, 1]} : vector<8x64xf32> to vector<8x55xf32>
    %128 = vector.extract_strided_slice %82 {offsets = [0, 0], sizes = [8, 9], strides = [1, 1]} : vector<8x64xf32> to vector<8x9xf32>
    %129 = tpu.concatenate %127, %128 in 1 : vector<8x55xf32>, vector<8x9xf32> -> vector<8x64xf32>
    %130 = vector.extract_strided_slice %84 {offsets = [8, 0], sizes = [1, 64], strides = [1, 1]} : vector<9x64xf32> to vector<1x64xf32>
    %131 = vector.broadcast %130 : vector<1x64xf32> to vector<8x64xf32>
    %132 = arith.mulf %129, %131 : vector<8x64xf32>
    %133 = tpu.concatenate %90, %96, %102, %108, %82, %114, %120, %126, %132 in 0 : vector<8x64xf32>, vector<8x64xf32>, vector<8x64xf32>, vector<8x64xf32>, vector<8x64xf32>, vector<8x64xf32>, vector<8x64xf32>, vector<8x64xf32>, vector<8x64xf32> -> vector<72x64xf32>
    %134 = arith.truncf %133 : vector<72x64xf32> to vector<72x64xbf16>
    %cst_20 = arith.constant dense<0.000000e+00> : vector<16x64xf32>
    %135 = tpu.matmul %83, %134, %cst_20 {dimension_numbers = #tpu.dot_dimension_numbers<[1], [0], [0], [1], [0, 0, 1, 1], [], []>} : vector<16x72xbf16>, vector<72x64xbf16>, vector<16x64xf32> -> vector<16x64xf32>
    %cst_21 = arith.constant dense<0.000000e+00> : vector<16xf32>
    %136 = vector.multi_reduction <add>, %135, %cst_21 [1] : vector<16x64xf32> to vector<16xf32>
    %137 = vector.shape_cast %136 : vector<16xf32> to vector<16x1xf32>
    %cst_22 = arith.constant 1.562500e-02 : f32
    %138 = vector.broadcast %cst_22 : f32 to vector<16x1xf32>
    %139 = arith.mulf %137, %138 : vector<16x1xf32>
    %140 = arith.mulf %135, %135 : vector<16x64xf32>
    %cst_23 = arith.constant dense<0.000000e+00> : vector<16xf32>
    %141 = vector.multi_reduction <add>, %140, %cst_23 [1] : vector<16x64xf32> to vector<16xf32>
    %142 = vector.shape_cast %141 : vector<16xf32> to vector<16x1xf32>
    %cst_24 = arith.constant 1.562500e-02 : f32
    %143 = vector.broadcast %cst_24 : f32 to vector<16x1xf32>
    %144 = arith.mulf %142, %143 : vector<16x1xf32>
    %145 = arith.mulf %139, %139 : vector<16x1xf32>
    %146 = arith.subf %144, %145 : vector<16x1xf32>
    %cst_25 = arith.constant 0.000000e+00 : f32
    %147 = vector.broadcast %cst_25 : f32 to vector<16x1xf32>
    %148 = arith.maximumf %146, %147 : vector<16x1xf32>
    %149 = vector.broadcast %139 : vector<16x1xf32> to vector<16x64xf32>
    %150 = arith.subf %135, %149 : vector<16x64xf32>
    %cst_26 = arith.constant 9.99999974E-6 : f32
    %151 = vector.broadcast %cst_26 : f32 to vector<16x1xf32>
    %152 = arith.addf %148, %151 : vector<16x1xf32>
    %153 = math.rsqrt %152 : vector<16x1xf32>
    %154 = vector.broadcast %153 : vector<16x1xf32> to vector<16x64xf32>
    %155 = arith.mulf %150, %154 : vector<16x64xf32>
    %cst_27 = arith.constant 0.000000e+00 : f32
    %156 = vector.broadcast %cst_27 : f32 to vector<16x64xf32>
    %157 = arith.maximumf %155, %156 : vector<16x64xf32>
    %c0_28 = arith.constant 0 : index
    %c0_29 = arith.constant 0 : index
    %158 = vector.load %arg13[%c0_28, %c0_29] : memref<64x16xf32, #tpu.memory_space<vmem>>, vector<64x16xf32>
    %159 = vector.extract_strided_slice %157 {offsets = [0, 1], sizes = [16, 63], strides = [1, 1]} : vector<16x64xf32> to vector<16x63xf32>
    %160 = vector.extract_strided_slice %157 {offsets = [0, 0], sizes = [16, 1], strides = [1, 1]} : vector<16x64xf32> to vector<16x1xf32>
    %161 = tpu.concatenate %159, %160 in 1 : vector<16x63xf32>, vector<16x1xf32> -> vector<16x64xf32>
    %162 = arith.maximumf %157, %161 : vector<16x64xf32>
    %163 = vector.extract_strided_slice %157 {offsets = [0, 8], sizes = [16, 56], strides = [1, 1]} : vector<16x64xf32> to vector<16x56xf32>
    %164 = vector.extract_strided_slice %157 {offsets = [0, 0], sizes = [16, 8], strides = [1, 1]} : vector<16x64xf32> to vector<16x8xf32>
    %165 = tpu.concatenate %163, %164 in 1 : vector<16x56xf32>, vector<16x8xf32> -> vector<16x64xf32>
    %166 = vector.extract_strided_slice %157 {offsets = [0, 9], sizes = [16, 55], strides = [1, 1]} : vector<16x64xf32> to vector<16x55xf32>
    %167 = vector.extract_strided_slice %157 {offsets = [0, 0], sizes = [16, 9], strides = [1, 1]} : vector<16x64xf32> to vector<16x9xf32>
    %168 = tpu.concatenate %166, %167 in 1 : vector<16x55xf32>, vector<16x9xf32> -> vector<16x64xf32>
    %169 = arith.maximumf %165, %168 : vector<16x64xf32>
    %170 = arith.maximumf %162, %169 : vector<16x64xf32>
    %cst_30 = arith.constant dense<0.000000e+00> : vector<16x16xf32>
    %171 = tpu.matmul %170, %158, %cst_30 {dimension_numbers = #tpu.dot_dimension_numbers<[1], [0], [0], [1], [0, 0, 1, 1], [], []>} : vector<16x64xf32>, vector<64x16xf32>, vector<16x16xf32> -> vector<16x16xf32>
    %c0_31 = arith.constant 0 : index
    %c0_32 = arith.constant 0 : index
    %172 = vector.load %arg4[%c0_31, %c0_32] : memref<16x144xbf16, #tpu.memory_space<vmem>>, vector<16x144xbf16>
    %c0_33 = arith.constant 0 : index
    %c0_34 = arith.constant 0 : index
    %173 = vector.load %arg11[%c0_33, %c0_34] : memref<9x16xf32, #tpu.memory_space<vmem>>, vector<9x16xf32>
    %174 = vector.extract_strided_slice %171 {offsets = [0, 11], sizes = [16, 5], strides = [1, 1]} : vector<16x16xf32> to vector<16x5xf32>
    %175 = vector.extract_strided_slice %171 {offsets = [0, 0], sizes = [16, 11], strides = [1, 1]} : vector<16x16xf32> to vector<16x11xf32>
    %176 = tpu.concatenate %174, %175 in 1 : vector<16x5xf32>, vector<16x11xf32> -> vector<16x16xf32>
    %177 = vector.extract_strided_slice %173 {offsets = [0, 0], sizes = [1, 16], strides = [1, 1]} : vector<9x16xf32> to vector<1x16xf32>
    %178 = vector.broadcast %177 : vector<1x16xf32> to vector<16x16xf32>
    %179 = arith.mulf %176, %178 : vector<16x16xf32>
    %180 = vector.extract_strided_slice %171 {offsets = [0, 12], sizes = [16, 4], strides = [1, 1]} : vector<16x16xf32> to vector<16x4xf32>
    %181 = vector.extract_strided_slice %171 {offsets = [0, 0], sizes = [16, 12], strides = [1, 1]} : vector<16x16xf32> to vector<16x12xf32>
    %182 = tpu.concatenate %180, %181 in 1 : vector<16x4xf32>, vector<16x12xf32> -> vector<16x16xf32>
    %183 = vector.extract_strided_slice %173 {offsets = [1, 0], sizes = [1, 16], strides = [1, 1]} : vector<9x16xf32> to vector<1x16xf32>
    %184 = vector.broadcast %183 : vector<1x16xf32> to vector<16x16xf32>
    %185 = arith.mulf %182, %184 : vector<16x16xf32>
    %186 = vector.extract_strided_slice %171 {offsets = [0, 13], sizes = [16, 3], strides = [1, 1]} : vector<16x16xf32> to vector<16x3xf32>
    %187 = vector.extract_strided_slice %171 {offsets = [0, 0], sizes = [16, 13], strides = [1, 1]} : vector<16x16xf32> to vector<16x13xf32>
    %188 = tpu.concatenate %186, %187 in 1 : vector<16x3xf32>, vector<16x13xf32> -> vector<16x16xf32>
    %189 = vector.extract_strided_slice %173 {offsets = [2, 0], sizes = [1, 16], strides = [1, 1]} : vector<9x16xf32> to vector<1x16xf32>
    %190 = vector.broadcast %189 : vector<1x16xf32> to vector<16x16xf32>
    %191 = arith.mulf %188, %190 : vector<16x16xf32>
    %192 = vector.extract_strided_slice %171 {offsets = [0, 15], sizes = [16, 1], strides = [1, 1]} : vector<16x16xf32> to vector<16x1xf32>
    %193 = vector.extract_strided_slice %171 {offsets = [0, 0], sizes = [16, 15], strides = [1, 1]} : vector<16x16xf32> to vector<16x15xf32>
    %194 = tpu.concatenate %192, %193 in 1 : vector<16x1xf32>, vector<16x15xf32> -> vector<16x16xf32>
    %195 = vector.extract_strided_slice %173 {offsets = [3, 0], sizes = [1, 16], strides = [1, 1]} : vector<9x16xf32> to vector<1x16xf32>
    %196 = vector.broadcast %195 : vector<1x16xf32> to vector<16x16xf32>
    %197 = arith.mulf %194, %196 : vector<16x16xf32>
    %198 = vector.extract_strided_slice %171 {offsets = [0, 1], sizes = [16, 15], strides = [1, 1]} : vector<16x16xf32> to vector<16x15xf32>
    %199 = vector.extract_strided_slice %171 {offsets = [0, 0], sizes = [16, 1], strides = [1, 1]} : vector<16x16xf32> to vector<16x1xf32>
    %200 = tpu.concatenate %198, %199 in 1 : vector<16x15xf32>, vector<16x1xf32> -> vector<16x16xf32>
    %201 = vector.extract_strided_slice %173 {offsets = [5, 0], sizes = [1, 16], strides = [1, 1]} : vector<9x16xf32> to vector<1x16xf32>
    %202 = vector.broadcast %201 : vector<1x16xf32> to vector<16x16xf32>
    %203 = arith.mulf %200, %202 : vector<16x16xf32>
    %204 = vector.extract_strided_slice %171 {offsets = [0, 3], sizes = [16, 13], strides = [1, 1]} : vector<16x16xf32> to vector<16x13xf32>
    %205 = vector.extract_strided_slice %171 {offsets = [0, 0], sizes = [16, 3], strides = [1, 1]} : vector<16x16xf32> to vector<16x3xf32>
    %206 = tpu.concatenate %204, %205 in 1 : vector<16x13xf32>, vector<16x3xf32> -> vector<16x16xf32>
    %207 = vector.extract_strided_slice %173 {offsets = [6, 0], sizes = [1, 16], strides = [1, 1]} : vector<9x16xf32> to vector<1x16xf32>
    %208 = vector.broadcast %207 : vector<1x16xf32> to vector<16x16xf32>
    %209 = arith.mulf %206, %208 : vector<16x16xf32>
    %210 = vector.extract_strided_slice %171 {offsets = [0, 4], sizes = [16, 12], strides = [1, 1]} : vector<16x16xf32> to vector<16x12xf32>
    %211 = vector.extract_strided_slice %171 {offsets = [0, 0], sizes = [16, 4], strides = [1, 1]} : vector<16x16xf32> to vector<16x4xf32>
    %212 = tpu.concatenate %210, %211 in 1 : vector<16x12xf32>, vector<16x4xf32> -> vector<16x16xf32>
    %213 = vector.extract_strided_slice %173 {offsets = [7, 0], sizes = [1, 16], strides = [1, 1]} : vector<9x16xf32> to vector<1x16xf32>
    %214 = vector.broadcast %213 : vector<1x16xf32> to vector<16x16xf32>
    %215 = arith.mulf %212, %214 : vector<16x16xf32>
    %216 = vector.extract_strided_slice %171 {offsets = [0, 5], sizes = [16, 11], strides = [1, 1]} : vector<16x16xf32> to vector<16x11xf32>
    %217 = vector.extract_strided_slice %171 {offsets = [0, 0], sizes = [16, 5], strides = [1, 1]} : vector<16x16xf32> to vector<16x5xf32>
    %218 = tpu.concatenate %216, %217 in 1 : vector<16x11xf32>, vector<16x5xf32> -> vector<16x16xf32>
    %219 = vector.extract_strided_slice %173 {offsets = [8, 0], sizes = [1, 16], strides = [1, 1]} : vector<9x16xf32> to vector<1x16xf32>
    %220 = vector.broadcast %219 : vector<1x16xf32> to vector<16x16xf32>
    %221 = arith.mulf %218, %220 : vector<16x16xf32>
    %222 = tpu.concatenate %179, %185, %191, %197, %171, %203, %209, %215, %221 in 0 : vector<16x16xf32>, vector<16x16xf32>, vector<16x16xf32>, vector<16x16xf32>, vector<16x16xf32>, vector<16x16xf32>, vector<16x16xf32>, vector<16x16xf32>, vector<16x16xf32> -> vector<144x16xf32>
    %223 = arith.truncf %222 : vector<144x16xf32> to vector<144x16xbf16>
    %cst_35 = arith.constant dense<0.000000e+00> : vector<16x16xf32>
    %224 = tpu.matmul %172, %223, %cst_35 {dimension_numbers = #tpu.dot_dimension_numbers<[1], [0], [0], [1], [0, 0, 1, 1], [], []>} : vector<16x144xbf16>, vector<144x16xbf16>, vector<16x16xf32> -> vector<16x16xf32>
    %cst_36 = arith.constant dense<0.000000e+00> : vector<16xf32>
    %225 = vector.multi_reduction <add>, %224, %cst_36 [1] : vector<16x16xf32> to vector<16xf32>
    %226 = vector.shape_cast %225 : vector<16xf32> to vector<16x1xf32>
    %cst_37 = arith.constant 6.250000e-02 : f32
    %227 = vector.broadcast %cst_37 : f32 to vector<16x1xf32>
    %228 = arith.mulf %226, %227 : vector<16x1xf32>
    %229 = arith.mulf %224, %224 : vector<16x16xf32>
    %cst_38 = arith.constant dense<0.000000e+00> : vector<16xf32>
    %230 = vector.multi_reduction <add>, %229, %cst_38 [1] : vector<16x16xf32> to vector<16xf32>
    %231 = vector.shape_cast %230 : vector<16xf32> to vector<16x1xf32>
    %cst_39 = arith.constant 6.250000e-02 : f32
    %232 = vector.broadcast %cst_39 : f32 to vector<16x1xf32>
    %233 = arith.mulf %231, %232 : vector<16x1xf32>
    %234 = arith.mulf %228, %228 : vector<16x1xf32>
    %235 = arith.subf %233, %234 : vector<16x1xf32>
    %cst_40 = arith.constant 0.000000e+00 : f32
    %236 = vector.broadcast %cst_40 : f32 to vector<16x1xf32>
    %237 = arith.maximumf %235, %236 : vector<16x1xf32>
    %238 = vector.broadcast %228 : vector<16x1xf32> to vector<16x16xf32>
    %239 = arith.subf %224, %238 : vector<16x16xf32>
    %cst_41 = arith.constant 9.99999974E-6 : f32
    %240 = vector.broadcast %cst_41 : f32 to vector<16x1xf32>
    %241 = arith.addf %237, %240 : vector<16x1xf32>
    %242 = math.rsqrt %241 : vector<16x1xf32>
    %243 = vector.broadcast %242 : vector<16x1xf32> to vector<16x16xf32>
    %244 = arith.mulf %239, %243 : vector<16x16xf32>
    %cst_42 = arith.constant 0.000000e+00 : f32
    %245 = vector.broadcast %cst_42 : f32 to vector<16x16xf32>
    %246 = arith.maximumf %244, %245 : vector<16x16xf32>
    %c0_43 = arith.constant 0 : index
    %c0_44 = arith.constant 0 : index
    %247 = vector.load %arg14[%c0_43, %c0_44] : memref<16x64xf32, #tpu.memory_space<vmem>>, vector<16x64xf32>
    %cst_45 = arith.constant dense<0.000000e+00> : vector<16x64xf32>
    %248 = tpu.matmul %246, %247, %cst_45 {dimension_numbers = #tpu.dot_dimension_numbers<[1], [0], [0], [1], [0, 0, 1, 1], [], []>} : vector<16x16xf32>, vector<16x64xf32>, vector<16x64xf32> -> vector<16x64xf32>
    %249 = tpu.concatenate %248, %157 in 0 : vector<16x64xf32>, vector<16x64xf32> -> vector<32x64xf32>
    %c0_46 = arith.constant 0 : index
    %c0_47 = arith.constant 0 : index
    %250 = vector.load %arg5[%c0_46, %c0_47] : memref<8x288xbf16, #tpu.memory_space<vmem>>, vector<8x288xbf16>
    %c0_48 = arith.constant 0 : index
    %c0_49 = arith.constant 0 : index
    %251 = vector.load %arg10[%c0_48, %c0_49] : memref<9x64xf32, #tpu.memory_space<vmem>>, vector<9x64xf32>
    %252 = vector.extract_strided_slice %249 {offsets = [0, 55], sizes = [32, 9], strides = [1, 1]} : vector<32x64xf32> to vector<32x9xf32>
    %253 = vector.extract_strided_slice %249 {offsets = [0, 0], sizes = [32, 55], strides = [1, 1]} : vector<32x64xf32> to vector<32x55xf32>
    %254 = tpu.concatenate %252, %253 in 1 : vector<32x9xf32>, vector<32x55xf32> -> vector<32x64xf32>
    %255 = vector.extract_strided_slice %251 {offsets = [0, 0], sizes = [1, 64], strides = [1, 1]} : vector<9x64xf32> to vector<1x64xf32>
    %256 = vector.broadcast %255 : vector<1x64xf32> to vector<32x64xf32>
    %257 = arith.mulf %254, %256 : vector<32x64xf32>
    %258 = vector.extract_strided_slice %249 {offsets = [0, 56], sizes = [32, 8], strides = [1, 1]} : vector<32x64xf32> to vector<32x8xf32>
    %259 = vector.extract_strided_slice %249 {offsets = [0, 0], sizes = [32, 56], strides = [1, 1]} : vector<32x64xf32> to vector<32x56xf32>
    %260 = tpu.concatenate %258, %259 in 1 : vector<32x8xf32>, vector<32x56xf32> -> vector<32x64xf32>
    %261 = vector.extract_strided_slice %251 {offsets = [1, 0], sizes = [1, 64], strides = [1, 1]} : vector<9x64xf32> to vector<1x64xf32>
    %262 = vector.broadcast %261 : vector<1x64xf32> to vector<32x64xf32>
    %263 = arith.mulf %260, %262 : vector<32x64xf32>
    %264 = vector.extract_strided_slice %249 {offsets = [0, 57], sizes = [32, 7], strides = [1, 1]} : vector<32x64xf32> to vector<32x7xf32>
    %265 = vector.extract_strided_slice %249 {offsets = [0, 0], sizes = [32, 57], strides = [1, 1]} : vector<32x64xf32> to vector<32x57xf32>
    %266 = tpu.concatenate %264, %265 in 1 : vector<32x7xf32>, vector<32x57xf32> -> vector<32x64xf32>
    %267 = vector.extract_strided_slice %251 {offsets = [2, 0], sizes = [1, 64], strides = [1, 1]} : vector<9x64xf32> to vector<1x64xf32>
    %268 = vector.broadcast %267 : vector<1x64xf32> to vector<32x64xf32>
    %269 = arith.mulf %266, %268 : vector<32x64xf32>
    %270 = vector.extract_strided_slice %249 {offsets = [0, 63], sizes = [32, 1], strides = [1, 1]} : vector<32x64xf32> to vector<32x1xf32>
    %271 = vector.extract_strided_slice %249 {offsets = [0, 0], sizes = [32, 63], strides = [1, 1]} : vector<32x64xf32> to vector<32x63xf32>
    %272 = tpu.concatenate %270, %271 in 1 : vector<32x1xf32>, vector<32x63xf32> -> vector<32x64xf32>
    %273 = vector.extract_strided_slice %251 {offsets = [3, 0], sizes = [1, 64], strides = [1, 1]} : vector<9x64xf32> to vector<1x64xf32>
    %274 = vector.broadcast %273 : vector<1x64xf32> to vector<32x64xf32>
    %275 = arith.mulf %272, %274 : vector<32x64xf32>
    %276 = vector.extract_strided_slice %249 {offsets = [0, 1], sizes = [32, 63], strides = [1, 1]} : vector<32x64xf32> to vector<32x63xf32>
    %277 = vector.extract_strided_slice %249 {offsets = [0, 0], sizes = [32, 1], strides = [1, 1]} : vector<32x64xf32> to vector<32x1xf32>
    %278 = tpu.concatenate %276, %277 in 1 : vector<32x63xf32>, vector<32x1xf32> -> vector<32x64xf32>
    %279 = vector.extract_strided_slice %251 {offsets = [5, 0], sizes = [1, 64], strides = [1, 1]} : vector<9x64xf32> to vector<1x64xf32>
    %280 = vector.broadcast %279 : vector<1x64xf32> to vector<32x64xf32>
    %281 = arith.mulf %278, %280 : vector<32x64xf32>
    %282 = vector.extract_strided_slice %249 {offsets = [0, 7], sizes = [32, 57], strides = [1, 1]} : vector<32x64xf32> to vector<32x57xf32>
    %283 = vector.extract_strided_slice %249 {offsets = [0, 0], sizes = [32, 7], strides = [1, 1]} : vector<32x64xf32> to vector<32x7xf32>
    %284 = tpu.concatenate %282, %283 in 1 : vector<32x57xf32>, vector<32x7xf32> -> vector<32x64xf32>
    %285 = vector.extract_strided_slice %251 {offsets = [6, 0], sizes = [1, 64], strides = [1, 1]} : vector<9x64xf32> to vector<1x64xf32>
    %286 = vector.broadcast %285 : vector<1x64xf32> to vector<32x64xf32>
    %287 = arith.mulf %284, %286 : vector<32x64xf32>
    %288 = vector.extract_strided_slice %249 {offsets = [0, 8], sizes = [32, 56], strides = [1, 1]} : vector<32x64xf32> to vector<32x56xf32>
    %289 = vector.extract_strided_slice %249 {offsets = [0, 0], sizes = [32, 8], strides = [1, 1]} : vector<32x64xf32> to vector<32x8xf32>
    %290 = tpu.concatenate %288, %289 in 1 : vector<32x56xf32>, vector<32x8xf32> -> vector<32x64xf32>
    %291 = vector.extract_strided_slice %251 {offsets = [7, 0], sizes = [1, 64], strides = [1, 1]} : vector<9x64xf32> to vector<1x64xf32>
    %292 = vector.broadcast %291 : vector<1x64xf32> to vector<32x64xf32>
    %293 = arith.mulf %290, %292 : vector<32x64xf32>
    %294 = vector.extract_strided_slice %249 {offsets = [0, 9], sizes = [32, 55], strides = [1, 1]} : vector<32x64xf32> to vector<32x55xf32>
    %295 = vector.extract_strided_slice %249 {offsets = [0, 0], sizes = [32, 9], strides = [1, 1]} : vector<32x64xf32> to vector<32x9xf32>
    %296 = tpu.concatenate %294, %295 in 1 : vector<32x55xf32>, vector<32x9xf32> -> vector<32x64xf32>
    %297 = vector.extract_strided_slice %251 {offsets = [8, 0], sizes = [1, 64], strides = [1, 1]} : vector<9x64xf32> to vector<1x64xf32>
    %298 = vector.broadcast %297 : vector<1x64xf32> to vector<32x64xf32>
    %299 = arith.mulf %296, %298 : vector<32x64xf32>
    %300 = tpu.concatenate %257, %263, %269, %275, %249, %281, %287, %293, %299 in 0 : vector<32x64xf32>, vector<32x64xf32>, vector<32x64xf32>, vector<32x64xf32>, vector<32x64xf32>, vector<32x64xf32>, vector<32x64xf32>, vector<32x64xf32>, vector<32x64xf32> -> vector<288x64xf32>
    %301 = arith.truncf %300 : vector<288x64xf32> to vector<288x64xbf16>
    %cst_50 = arith.constant dense<0.000000e+00> : vector<8x64xf32>
    %302 = tpu.matmul %250, %301, %cst_50 {dimension_numbers = #tpu.dot_dimension_numbers<[1], [0], [0], [1], [0, 0, 1, 1], [], []>} : vector<8x288xbf16>, vector<288x64xbf16>, vector<8x64xf32> -> vector<8x64xf32>
    %cst_51 = arith.constant dense<0.000000e+00> : vector<8xf32>
    %303 = vector.multi_reduction <add>, %302, %cst_51 [1] : vector<8x64xf32> to vector<8xf32>
    %304 = vector.shape_cast %303 : vector<8xf32> to vector<8x1xf32>
    %cst_52 = arith.constant 1.562500e-02 : f32
    %305 = vector.broadcast %cst_52 : f32 to vector<8x1xf32>
    %306 = arith.mulf %304, %305 : vector<8x1xf32>
    %307 = arith.mulf %302, %302 : vector<8x64xf32>
    %cst_53 = arith.constant dense<0.000000e+00> : vector<8xf32>
    %308 = vector.multi_reduction <add>, %307, %cst_53 [1] : vector<8x64xf32> to vector<8xf32>
    %309 = vector.shape_cast %308 : vector<8xf32> to vector<8x1xf32>
    %cst_54 = arith.constant 1.562500e-02 : f32
    %310 = vector.broadcast %cst_54 : f32 to vector<8x1xf32>
    %311 = arith.mulf %309, %310 : vector<8x1xf32>
    %312 = arith.mulf %306, %306 : vector<8x1xf32>
    %313 = arith.subf %311, %312 : vector<8x1xf32>
    %cst_55 = arith.constant 0.000000e+00 : f32
    %314 = vector.broadcast %cst_55 : f32 to vector<8x1xf32>
    %315 = arith.maximumf %313, %314 : vector<8x1xf32>
    %316 = vector.broadcast %306 : vector<8x1xf32> to vector<8x64xf32>
    %317 = arith.subf %302, %316 : vector<8x64xf32>
    %cst_56 = arith.constant 9.99999974E-6 : f32
    %318 = vector.broadcast %cst_56 : f32 to vector<8x1xf32>
    %319 = arith.addf %315, %318 : vector<8x1xf32>
    %320 = math.rsqrt %319 : vector<8x1xf32>
    %321 = vector.broadcast %320 : vector<8x1xf32> to vector<8x64xf32>
    %322 = arith.mulf %317, %321 : vector<8x64xf32>
    %cst_57 = arith.constant 0.000000e+00 : f32
    %323 = vector.broadcast %cst_57 : f32 to vector<8x64xf32>
    %324 = arith.maximumf %322, %323 : vector<8x64xf32>
    %c0_58 = arith.constant 0 : index
    %c0_59 = arith.constant 0 : index
    %325 = vector.load %arg15[%c0_58, %c0_59] : memref<64x256xf32, #tpu.memory_space<vmem>>, vector<64x256xf32>
    %cst_60 = arith.constant dense<0.000000e+00> : vector<8x256xf32>
    %326 = tpu.matmul %324, %325, %cst_60 {dimension_numbers = #tpu.dot_dimension_numbers<[1], [0], [0], [1], [0, 0, 1, 1], [], []>} : vector<8x64xf32>, vector<64x256xf32>, vector<8x256xf32> -> vector<8x256xf32>
    %327 = tpu.concatenate %326, %68 in 0 : vector<8x256xf32>, vector<8x256xf32> -> vector<16x256xf32>
    %c0_61 = arith.constant 0 : index
    %c0_62 = arith.constant 0 : index
    %328 = vector.load %arg6[%c0_61, %c0_62] : memref<8x144xbf16, #tpu.memory_space<vmem>>, vector<8x144xbf16>
    %c0_63 = arith.constant 0 : index
    %c0_64 = arith.constant 0 : index
    %329 = vector.load %arg9[%c0_63, %c0_64] : memref<9x256xf32, #tpu.memory_space<vmem>>, vector<9x256xf32>
    %330 = vector.extract_strided_slice %327 {offsets = [0, 239], sizes = [16, 17], strides = [1, 1]} : vector<16x256xf32> to vector<16x17xf32>
    %331 = vector.extract_strided_slice %327 {offsets = [0, 0], sizes = [16, 239], strides = [1, 1]} : vector<16x256xf32> to vector<16x239xf32>
    %332 = tpu.concatenate %330, %331 in 1 : vector<16x17xf32>, vector<16x239xf32> -> vector<16x256xf32>
    %333 = vector.extract_strided_slice %329 {offsets = [0, 0], sizes = [1, 256], strides = [1, 1]} : vector<9x256xf32> to vector<1x256xf32>
    %334 = vector.broadcast %333 : vector<1x256xf32> to vector<16x256xf32>
    %335 = arith.mulf %332, %334 : vector<16x256xf32>
    %336 = vector.extract_strided_slice %327 {offsets = [0, 240], sizes = [16, 16], strides = [1, 1]} : vector<16x256xf32> to vector<16x16xf32>
    %337 = vector.extract_strided_slice %327 {offsets = [0, 0], sizes = [16, 240], strides = [1, 1]} : vector<16x256xf32> to vector<16x240xf32>
    %338 = tpu.concatenate %336, %337 in 1 : vector<16x16xf32>, vector<16x240xf32> -> vector<16x256xf32>
    %339 = vector.extract_strided_slice %329 {offsets = [1, 0], sizes = [1, 256], strides = [1, 1]} : vector<9x256xf32> to vector<1x256xf32>
    %340 = vector.broadcast %339 : vector<1x256xf32> to vector<16x256xf32>
    %341 = arith.mulf %338, %340 : vector<16x256xf32>
    %342 = vector.extract_strided_slice %327 {offsets = [0, 241], sizes = [16, 15], strides = [1, 1]} : vector<16x256xf32> to vector<16x15xf32>
    %343 = vector.extract_strided_slice %327 {offsets = [0, 0], sizes = [16, 241], strides = [1, 1]} : vector<16x256xf32> to vector<16x241xf32>
    %344 = tpu.concatenate %342, %343 in 1 : vector<16x15xf32>, vector<16x241xf32> -> vector<16x256xf32>
    %345 = vector.extract_strided_slice %329 {offsets = [2, 0], sizes = [1, 256], strides = [1, 1]} : vector<9x256xf32> to vector<1x256xf32>
    %346 = vector.broadcast %345 : vector<1x256xf32> to vector<16x256xf32>
    %347 = arith.mulf %344, %346 : vector<16x256xf32>
    %348 = vector.extract_strided_slice %327 {offsets = [0, 255], sizes = [16, 1], strides = [1, 1]} : vector<16x256xf32> to vector<16x1xf32>
    %349 = vector.extract_strided_slice %327 {offsets = [0, 0], sizes = [16, 255], strides = [1, 1]} : vector<16x256xf32> to vector<16x255xf32>
    %350 = tpu.concatenate %348, %349 in 1 : vector<16x1xf32>, vector<16x255xf32> -> vector<16x256xf32>
    %351 = vector.extract_strided_slice %329 {offsets = [3, 0], sizes = [1, 256], strides = [1, 1]} : vector<9x256xf32> to vector<1x256xf32>
    %352 = vector.broadcast %351 : vector<1x256xf32> to vector<16x256xf32>
    %353 = arith.mulf %350, %352 : vector<16x256xf32>
    %354 = vector.extract_strided_slice %327 {offsets = [0, 1], sizes = [16, 255], strides = [1, 1]} : vector<16x256xf32> to vector<16x255xf32>
    %355 = vector.extract_strided_slice %327 {offsets = [0, 0], sizes = [16, 1], strides = [1, 1]} : vector<16x256xf32> to vector<16x1xf32>
    %356 = tpu.concatenate %354, %355 in 1 : vector<16x255xf32>, vector<16x1xf32> -> vector<16x256xf32>
    %357 = vector.extract_strided_slice %329 {offsets = [5, 0], sizes = [1, 256], strides = [1, 1]} : vector<9x256xf32> to vector<1x256xf32>
    %358 = vector.broadcast %357 : vector<1x256xf32> to vector<16x256xf32>
    %359 = arith.mulf %356, %358 : vector<16x256xf32>
    %360 = vector.extract_strided_slice %327 {offsets = [0, 15], sizes = [16, 241], strides = [1, 1]} : vector<16x256xf32> to vector<16x241xf32>
    %361 = vector.extract_strided_slice %327 {offsets = [0, 0], sizes = [16, 15], strides = [1, 1]} : vector<16x256xf32> to vector<16x15xf32>
    %362 = tpu.concatenate %360, %361 in 1 : vector<16x241xf32>, vector<16x15xf32> -> vector<16x256xf32>
    %363 = vector.extract_strided_slice %329 {offsets = [6, 0], sizes = [1, 256], strides = [1, 1]} : vector<9x256xf32> to vector<1x256xf32>
    %364 = vector.broadcast %363 : vector<1x256xf32> to vector<16x256xf32>
    %365 = arith.mulf %362, %364 : vector<16x256xf32>
    %366 = vector.extract_strided_slice %327 {offsets = [0, 16], sizes = [16, 240], strides = [1, 1]} : vector<16x256xf32> to vector<16x240xf32>
    %367 = vector.extract_strided_slice %327 {offsets = [0, 0], sizes = [16, 16], strides = [1, 1]} : vector<16x256xf32> to vector<16x16xf32>
    %368 = tpu.concatenate %366, %367 in 1 : vector<16x240xf32>, vector<16x16xf32> -> vector<16x256xf32>
    %369 = vector.extract_strided_slice %329 {offsets = [7, 0], sizes = [1, 256], strides = [1, 1]} : vector<9x256xf32> to vector<1x256xf32>
    %370 = vector.broadcast %369 : vector<1x256xf32> to vector<16x256xf32>
    %371 = arith.mulf %368, %370 : vector<16x256xf32>
    %372 = vector.extract_strided_slice %327 {offsets = [0, 17], sizes = [16, 239], strides = [1, 1]} : vector<16x256xf32> to vector<16x239xf32>
    %373 = vector.extract_strided_slice %327 {offsets = [0, 0], sizes = [16, 17], strides = [1, 1]} : vector<16x256xf32> to vector<16x17xf32>
    %374 = tpu.concatenate %372, %373 in 1 : vector<16x239xf32>, vector<16x17xf32> -> vector<16x256xf32>
    %375 = vector.extract_strided_slice %329 {offsets = [8, 0], sizes = [1, 256], strides = [1, 1]} : vector<9x256xf32> to vector<1x256xf32>
    %376 = vector.broadcast %375 : vector<1x256xf32> to vector<16x256xf32>
    %377 = arith.mulf %374, %376 : vector<16x256xf32>
    %378 = tpu.concatenate %335, %341, %347, %353, %327, %359, %365, %371, %377 in 0 : vector<16x256xf32>, vector<16x256xf32>, vector<16x256xf32>, vector<16x256xf32>, vector<16x256xf32>, vector<16x256xf32>, vector<16x256xf32>, vector<16x256xf32>, vector<16x256xf32> -> vector<144x256xf32>
    %379 = arith.truncf %378 : vector<144x256xf32> to vector<144x256xbf16>
    %cst_65 = arith.constant dense<0.000000e+00> : vector<8x256xf32>
    %380 = tpu.matmul %328, %379, %cst_65 {dimension_numbers = #tpu.dot_dimension_numbers<[1], [0], [0], [1], [0, 0, 1, 1], [], []>} : vector<8x144xbf16>, vector<144x256xbf16>, vector<8x256xf32> -> vector<8x256xf32>
    %cst_66 = arith.constant dense<0.000000e+00> : vector<8xf32>
    %381 = vector.multi_reduction <add>, %380, %cst_66 [1] : vector<8x256xf32> to vector<8xf32>
    %382 = vector.shape_cast %381 : vector<8xf32> to vector<8x1xf32>
    %cst_67 = arith.constant 3.906250e-03 : f32
    %383 = vector.broadcast %cst_67 : f32 to vector<8x1xf32>
    %384 = arith.mulf %382, %383 : vector<8x1xf32>
    %385 = arith.mulf %380, %380 : vector<8x256xf32>
    %cst_68 = arith.constant dense<0.000000e+00> : vector<8xf32>
    %386 = vector.multi_reduction <add>, %385, %cst_68 [1] : vector<8x256xf32> to vector<8xf32>
    %387 = vector.shape_cast %386 : vector<8xf32> to vector<8x1xf32>
    %cst_69 = arith.constant 3.906250e-03 : f32
    %388 = vector.broadcast %cst_69 : f32 to vector<8x1xf32>
    %389 = arith.mulf %387, %388 : vector<8x1xf32>
    %390 = arith.mulf %384, %384 : vector<8x1xf32>
    %391 = arith.subf %389, %390 : vector<8x1xf32>
    %cst_70 = arith.constant 0.000000e+00 : f32
    %392 = vector.broadcast %cst_70 : f32 to vector<8x1xf32>
    %393 = arith.maximumf %391, %392 : vector<8x1xf32>
    %394 = vector.broadcast %384 : vector<8x1xf32> to vector<8x256xf32>
    %395 = arith.subf %380, %394 : vector<8x256xf32>
    %cst_71 = arith.constant 9.99999974E-6 : f32
    %396 = vector.broadcast %cst_71 : f32 to vector<8x1xf32>
    %397 = arith.addf %393, %396 : vector<8x1xf32>
    %398 = math.rsqrt %397 : vector<8x1xf32>
    %399 = vector.broadcast %398 : vector<8x1xf32> to vector<8x256xf32>
    %400 = arith.mulf %395, %399 : vector<8x256xf32>
    %cst_72 = arith.constant 0.000000e+00 : f32
    %401 = vector.broadcast %cst_72 : f32 to vector<8x256xf32>
    %402 = arith.maximumf %400, %401 : vector<8x256xf32>
    %c0_73 = arith.constant 0 : index
    %c0_74 = arith.constant 0 : index
    %403 = vector.load %arg7[%c0_73, %c0_74] : memref<1x8xf32, #tpu.memory_space<vmem>>, vector<1x8xf32>
    %cst_75 = arith.constant dense<0.000000e+00> : vector<1x256xf32>
    %404 = tpu.matmul %403, %402, %cst_75 {dimension_numbers = #tpu.dot_dimension_numbers<[1], [0], [0], [1], [0, 0, 1, 1], [], []>} : vector<1x8xf32>, vector<8x256xf32>, vector<1x256xf32> -> vector<1x256xf32>
    %c0_76 = arith.constant 0 : index
    %c0_77 = arith.constant 0 : index
    %405 = vector.load %arg8[%c0_76, %c0_77] : memref<1x1xf32, #tpu.memory_space<vmem>>, vector<1x1xf32>
    %406 = vector.broadcast %405 : vector<1x1xf32> to vector<1x256xf32>
    %407 = arith.addf %404, %406 : vector<1x256xf32>
    %408 = arith.addf %407, %1 : vector<1x256xf32>
    %c0_78 = arith.constant 0 : index
    %c0_79 = arith.constant 0 : index
    %c0_80 = arith.constant 0 : index
    %409 = vector.load %arg16[%c0_78, %c0_79, %c0_80] : memref<1x1x256xf32, #tpu.memory_space<vmem>>, vector<1x1x256xf32>
    %410 = vector.shape_cast %409 : vector<1x1x256xf32> to vector<1x256xf32>
    %411 = vector.shape_cast %408 : vector<1x256xf32> to vector<1x1x256xf32>
    tpu.vector_store %arg16[%c0_78, %c0_79, %c0_80], %411 {strides = array<i32>} : memref<1x1x256xf32, #tpu.memory_space<vmem>>, vector<1x1x256xf32>,
    return
  }
  func.func @transform_0(%arg0: i32) -> (i32, i32, i32) {
    %c0_i32 = arith.constant 0 : i32
    %c0_i32_0 = arith.constant 0 : i32
    %c0_i32_1 = arith.constant 0 : i32
    return %arg0, %c0_i32, %c0_i32_0 : i32, i32, i32
  }
  func.func @transform_1(%arg0: i32) -> (i32, i32) {
    %c0_i32 = arith.constant 0 : i32
    %c0_i32_0 = arith.constant 0 : i32
    %c0_i32_1 = arith.constant 0 : i32
    return %c0_i32, %c0_i32_0 : i32, i32
  }
  func.func @transform_2(%arg0: i32) -> (i32, i32) {
    %c0_i32 = arith.constant 0 : i32
    %c0_i32_0 = arith.constant 0 : i32
    %c0_i32_1 = arith.constant 0 : i32
    return %c0_i32, %c0_i32_0 : i32, i32
  }
  func.func @transform_3(%arg0: i32) -> (i32, i32) {
    %c0_i32 = arith.constant 0 : i32
    %c0_i32_0 = arith.constant 0 : i32
    %c0_i32_1 = arith.constant 0 : i32
    return %c0_i32, %c0_i32_0 : i32, i32
  }
  func.func @transform_4(%arg0: i32) -> (i32, i32) {
    %c0_i32 = arith.constant 0 : i32
    %c0_i32_0 = arith.constant 0 : i32
    %c0_i32_1 = arith.constant 0 : i32
    return %c0_i32, %c0_i32_0 : i32, i32
  }
  func.func @transform_5(%arg0: i32) -> (i32, i32) {
    %c0_i32 = arith.constant 0 : i32
    %c0_i32_0 = arith.constant 0 : i32
    %c0_i32_1 = arith.constant 0 : i32
    return %c0_i32, %c0_i32_0 : i32, i32
  }
  func.func @transform_6(%arg0: i32) -> (i32, i32) {
    %c0_i32 = arith.constant 0 : i32
    %c0_i32_0 = arith.constant 0 : i32
    %c0_i32_1 = arith.constant 0 : i32
    return %c0_i32, %c0_i32_0 : i32, i32
  }
  func.func @transform_7(%arg0: i32) -> (i32, i32) {
    %c0_i32 = arith.constant 0 : i32
    %c0_i32_0 = arith.constant 0 : i32
    %c0_i32_1 = arith.constant 0 : i32
    return %c0_i32, %c0_i32_0 : i32, i32
  }
  func.func @transform_8(%arg0: i32) -> (i32, i32) {
    %c0_i32 = arith.constant 0 : i32
    %c0_i32_0 = arith.constant 0 : i32
    %c0_i32_1 = arith.constant 0 : i32
    return %c0_i32, %c0_i32_0 : i32, i32
  }
  func.func @transform_9(%arg0: i32) -> (i32, i32) {
    %c0_i32 = arith.constant 0 : i32
    %c0_i32_0 = arith.constant 0 : i32
    %c0_i32_1 = arith.constant 0 : i32
    return %c0_i32, %c0_i32_0 : i32, i32
  }
  func.func @transform_10(%arg0: i32) -> (i32, i32) {
    %c0_i32 = arith.constant 0 : i32
    %c0_i32_0 = arith.constant 0 : i32
    %c0_i32_1 = arith.constant 0 : i32
    return %c0_i32, %c0_i32_0 : i32, i32
  }
  func.func @transform_11(%arg0: i32) -> (i32, i32) {
    %c0_i32 = arith.constant 0 : i32
    %c0_i32_0 = arith.constant 0 : i32
    %c0_i32_1 = arith.constant 0 : i32
    return %c0_i32, %c0_i32_0 : i32, i32
  }
  func.func @transform_12(%arg0: i32) -> (i32, i32) {
    %c0_i32 = arith.constant 0 : i32
    %c0_i32_0 = arith.constant 0 : i32
    %c0_i32_1 = arith.constant 0 : i32
    return %c0_i32, %c0_i32_0 : i32, i32
  }
  func.func @transform_13(%arg0: i32) -> (i32, i32) {
    %c0_i32 = arith.constant 0 : i32
    %c0_i32_0 = arith.constant 0 : i32
    %c0_i32_1 = arith.constant 0 : i32
    return %c0_i32, %c0_i32_0 : i32, i32
  }
  func.func @transform_14(%arg0: i32) -> (i32, i32) {
    %c0_i32 = arith.constant 0 : i32
    %c0_i32_0 = arith.constant 0 : i32
    %c0_i32_1 = arith.constant 0 : i32
    return %c0_i32, %c0_i32_0 : i32, i32
  }
  func.func @transform_15(%arg0: i32) -> (i32, i32, i32) {
    %c0_i32 = arith.constant 0 : i32
    %c0_i32_0 = arith.constant 0 : i32
    %c0_i32_1 = arith.constant 0 : i32
    return %arg0, %c0_i32, %c0_i32_0 : i32, i32, i32
  }
}

</mosaic_0001>

<llo_original>
// kernel: unet_forward.1
$region0: #{unet_forward.1}
  #allocation0 [shape = 'u32[]', space=smem, size = 0x4, offset = 0x4, fixed_abs, tag = 'smem constant byte address 0x4 - core index']
  #allocation1 [shape = 'u32[144,128]{1,0:T(1,128)}', space=vmem, size = 0x12000, scoped, tag = 'internal scratch']
  #allocation2 [shape = 'f32[1,1]{1,0:T(1,128)S(1)}', space=vmem, size = 0x200, scoped, tag = 'scoped memory for unet_forward.1']
  %s0 = inlined_call_operand.vmem [shape: f32[2,1,256], index: 0, kind: input, shape index: {}]
  %s1 = inlined_call_operand.vmem [shape: bf16[8,9], index: 1, kind: input, shape index: {}]
  %s2 = inlined_call_operand.vmem [shape: bf16[16,72], index: 2, kind: input, shape index: {}]
  %s3 = inlined_call_operand.vmem [shape: bf16[16,144], index: 3, kind: input, shape index: {}]
  %s4 = inlined_call_operand.vmem [shape: bf16[8,288], index: 4, kind: input, shape index: {}]
  %s5 = inlined_call_operand.vmem [shape: bf16[8,144], index: 5, kind: input, shape index: {}]
  %s6 = inlined_call_operand.vmem [shape: f32[1,8], index: 6, kind: input, shape index: {}]
  %s7 = inlined_call_operand.<no memory space> [shape: f32[1,1], index: 7, kind: input, shape index: {}]
  %s8 = inlined_call_operand.vmem [shape: f32[9,256], index: 8, kind: input, shape index: {}]
  %s9 = inlined_call_operand.vmem [shape: f32[9,64], index: 9, kind: input, shape index: {}]
  %s10 = inlined_call_operand.vmem [shape: f32[9,16], index: 10, kind: input, shape index: {}]
  %s11 = inlined_call_operand.vmem [shape: f32[256,64], index: 11, kind: input, shape index: {}]
  %s12 = inlined_call_operand.vmem [shape: f32[64,16], index: 12, kind: input, shape index: {}]
  %s13 = inlined_call_operand.vmem [shape: f32[16,64], index: 13, kind: input, shape index: {}]
  %s14 = inlined_call_operand.vmem [shape: f32[64,256], index: 14, kind: input, shape index: {}]
  %s15 = inlined_call_operand.vmem [shape: f32[2,1,256], index: 15, kind: output, shape index: {}]
  %s16 = sld [smem:[#allocation0]]
  $region93: #{unet_forward.1} parent=0
    _
  %s18 = ssub.s32 1, %s16
  %s19 = scalar_select 0, %s18, %s16
  %v20 = vstv %s7
  %21 = vst [vmem:[#allocation2] sm:$0x1] %v20
  loop: start=0, step=1, limit=4
  $region2: #{unet_forward.1} parent=0 // loop_pre_header
    _
  $region3: #{unet_forward.1} parent=0 // loop_header
    %s23 = sphi 0, %s27
    %p24 = scmp.ge.s32.totalorder %s23, 4
    %s33 = sphi 0, %s35
    %s36 = sphi 0, %s33
    %s37 = sphi 0, %s36
    %s53 = sphi 0, %s37
    %s57 = sphi 0, %s57
    %s59 = sphi 0, %s57
    %s60 = sphi 0, %s59
    %s74 = sphi 0, %s60
    %s78 = sphi 0, %s78
    %s80 = sphi 0, %s78
    %s81 = sphi 0, %s80
    %s95 = sphi 0, %s81
    %s99 = sphi 0, %s99
    %s101 = sphi 0, %s99
    %s102 = sphi 0, %s101
    %s116 = sphi 0, %s102
    %s120 = sphi 0, %s120
    %s122 = sphi 0, %s120
    %s123 = sphi 0, %s122
    %s137 = sphi 0, %s123
    %s141 = sphi 0, %s141
    %s143 = sphi 0, %s141
    %s144 = sphi 0, %s143
    %s158 = sphi 0, %s144
    %s162 = sphi 0, %s162
    %s164 = sphi 0, %s162
    %s165 = sphi 0, %s164
    %s179 = sphi 0, %s165
    %s183 = sphi 0, %s183
    %s185 = sphi 0, %s183
    %s186 = sphi 0, %s185
    %s200 = sphi 0, %s186
    %s204 = sphi 0, %s204
    %s206 = sphi 0, %s204
    %s207 = sphi 0, %s206
    %s221 = sphi 0, %s207
    %s225 = sphi 0, %s225
    %s227 = sphi 0, %s225
    %s228 = sphi 0, %s227
    %s242 = sphi 0, %s228
    %s246 = sphi 0, %s246
    %s248 = sphi 0, %s246
    %s249 = sphi 0, %s248
    %s263 = sphi 0, %s249
    %s267 = sphi 0, %s267
    %s269 = sphi 0, %s267
    %s270 = sphi 0, %s269
    %s284 = sphi 0, %s270
    %s288 = sphi 0, %s288
    %s290 = sphi 0, %s288
    %s291 = sphi 0, %s290
    %s305 = sphi 0, %s291
    %s309 = sphi 0, %s309
    %s311 = sphi 0, %s309
    %s312 = sphi 0, %s311
    %s326 = sphi 0, %s312
    %s330 = sphi 0, %s330
    %s332 = sphi 0, %s330
    %s333 = sphi 0, %s332
    %s347 = sphi 0, %s333
    %s353 = sphi 0, %s355
    %s356 = sphi 0, %s353
    %s357 = sphi 0, %s356
    %s373 = sphi 0, %s357
  $region4: #{unet_forward.1} parent=0 // loop_header_branch
    %26 = sbr.rel (%p24) target = $region8
  $region5: #{unet_forward.1} parent=0 // loop_body
    %s28 = ssub.s32 %s23, 1
    %s29 = ssub.s32 %s23, 2
    %s30 = sadd.s32 %s23, 1
    %s31 = ssub.s32 %s23, %s30
    %p32 = scmp.eq.s32.totalorder %s31, 0
    %s34 = sadd.s32 %s33, 1
    %s35 = scalar_select %p32, %s33, %s34
    %p38 = pneg %p32
    %p39 = scmp.eq.s32.totalorder %s23, 1
    %p40 = por %p38, %p39
    %p41 = scmp.ne.s32.totalorder %s33, %s36
    %p42 = scmp.eq.s32.totalorder %s23, 0
    %p43 = por %p41, %p42
    %p44 = scmp.ne.s32.totalorder %s33, %s36
    %p45 = scmp.eq.s32.totalorder %s28, 1
    %p46 = por %p44, %p45
    %p47 = scmp.ne.s32.totalorder %s36, %s37
    %p48 = scmp.eq.s32.totalorder %s28, 0
    %p49 = por %p47, %p48
    %p50 = scmp.ne.s32.totalorder %s36, %s37
    %p51 = scmp.eq.s32.totalorder %s29, 1
    %p52 = por %p50, %p51
    %p54 = scmp.ne.s32.totalorder %s37, %s53
    %p55 = scmp.eq.s32.totalorder %s29, 0
    %p56 = por %p54, %p55
    %s58 = sadd.s32 %s57, 1
    %p61 = scmp.eq.s32.totalorder %s23, 1
    %p62 = scmp.ne.s32.totalorder %s57, %s59
    %p63 = scmp.eq.s32.totalorder %s23, 0
    %p64 = por %p62, %p63
    %p65 = scmp.ne.s32.totalorder %s57, %s59
    %p66 = scmp.eq.s32.totalorder %s28, 1
    %p67 = por %p65, %p66
    %p68 = scmp.ne.s32.totalorder %s59, %s60
    %p69 = scmp.eq.s32.totalorder %s28, 0
    %p70 = por %p68, %p69
    %p71 = scmp.ne.s32.totalorder %s59, %s60
    %p72 = scmp.eq.s32.totalorder %s29, 1
    %p73 = por %p71, %p72
    %p75 = scmp.ne.s32.totalorder %s60, %s74
    %p76 = scmp.eq.s32.totalorder %s29, 0
    %p77 = por %p75, %p76
    %s79 = sadd.s32 %s78, 1
    %p82 = scmp.eq.s32.totalorder %s23, 1
    %p83 = scmp.ne.s32.totalorder %s78, %s80
    %p84 = scmp.eq.s32.totalorder %s23, 0
    %p85 = por %p83, %p84
    %p86 = scmp.ne.s32.totalorder %s78, %s80
    %p87 = scmp.eq.s32.totalorder %s28, 1
    %p88 = por %p86, %p87
    %p89 = scmp.ne.s32.totalorder %s80, %s81
    %p90 = scmp.eq.s32.totalorder %s28, 0
    %p91 = por %p89, %p90
    %p92 = scmp.ne.s32.totalorder %s80, %s81
    %p93 = scmp.eq.s32.totalorder %s29, 1
    %p94 = por %p92, %p93
    %p96 = scmp.ne.s32.totalorder %s81, %s95
    %p97 = scmp.eq.s32.totalorder %s29, 0
    %p98 = por %p96, %p97
    %s100 = sadd.s32 %s99, 1
    %p103 = scmp.eq.s32.totalorder %s23, 1
    %p104 = scmp.ne.s32.totalorder %s99, %s101
    %p105 = scmp.eq.s32.totalorder %s23, 0
    %p106 = por %p104, %p105
    %p107 = scmp.ne.s32.totalorder %s99, %s101
    %p108 = scmp.eq.s32.totalorder %s28, 1
    %p109 = por %p107, %p108
    %p110 = scmp.ne.s32.totalorder %s101, %s102
    %p111 = scmp.eq.s32.totalorder %s28, 0
    %p112 = por %p110, %p111
    %p113 = scmp.ne.s32.totalorder %s101, %s102
    %p114 = scmp.eq.s32.totalorder %s29, 1
    %p115 = por %p113, %p114
    %p117 = scmp.ne.s32.totalorder %s102, %s116
    %p118 = scmp.eq.s32.totalorder %s29, 0
    %p119 = por %p117, %p118
    %s121 = sadd.s32 %s120, 1
    %p124 = scmp.eq.s32.totalorder %s23, 1
    %p125 = scmp.ne.s32.totalorder %s120, %s122
    %p126 = scmp.eq.s32.totalorder %s23, 0
    %p127 = por %p125, %p126
    %p128 = scmp.ne.s32.totalorder %s120, %s122
    %p129 = scmp.eq.s32.totalorder %s28, 1
    %p130 = por %p128, %p129
    %p131 = scmp.ne.s32.totalorder %s122, %s123
    %p132 = scmp.eq.s32.totalorder %s28, 0
    %p133 = por %p131, %p132
    %p134 = scmp.ne.s32.totalorder %s122, %s123
    %p135 = scmp.eq.s32.totalorder %s29, 1
    %p136 = por %p134, %p135
    %p138 = scmp.ne.s32.totalorder %s123, %s137
    %p139 = scmp.eq.s32.totalorder %s29, 0
    %p140 = por %p138, %p139
    %s142 = sadd.s32 %s141, 1
    %p145 = scmp.eq.s32.totalorder %s23, 1
    %p146 = scmp.ne.s32.totalorder %s141, %s143
    %p147 = scmp.eq.s32.totalorder %s23, 0
    %p148 = por %p146, %p147
    %p149 = scmp.ne.s32.totalorder %s141, %s143
    %p150 = scmp.eq.s32.totalorder %s28, 1
    %p151 = por %p149, %p150
    %p152 = scmp.ne.s32.totalorder %s143, %s144
    %p153 = scmp.eq.s32.totalorder %s28, 0
    %p154 = por %p152, %p153
    %p155 = scmp.ne.s32.totalorder %s143, %s144
    %p156 = scmp.eq.s32.totalorder %s29, 1
    %p157 = por %p155, %p156
    %p159 = scmp.ne.s32.totalorder %s144, %s158
    %p160 = scmp.eq.s32.totalorder %s29, 0
    %p161 = por %p159, %p160
    %s163 = sadd.s32 %s162, 1
    %p166 = scmp.eq.s32.totalorder %s23, 1
    %p167 = scmp.ne.s32.totalorder %s162, %s164
    %p168 = scmp.eq.s32.totalorder %s23, 0
    %p169 = por %p167, %p168
    %p170 = scmp.ne.s32.totalorder %s162, %s164
    %p171 = scmp.eq.s32.totalorder %s28, 1
    %p172 = por %p170, %p171
    %p173 = scmp.ne.s32.totalorder %s164, %s165
    %p174 = scmp.eq.s32.totalorder %s28, 0
    %p175 = por %p173, %p174
    %p176 = scmp.ne.s32.totalorder %s164, %s165
    %p177 = scmp.eq.s32.totalorder %s29, 1
    %p178 = por %p176, %p177
    %p180 = scmp.ne.s32.totalorder %s165, %s179
    %p181 = scmp.eq.s32.totalorder %s29, 0
    %p182 = por %p180, %p181
    %s184 = sadd.s32 %s183, 1
    %p187 = scmp.eq.s32.totalorder %s23, 1
    %p188 = scmp.ne.s32.totalorder %s183, %s185
    %p189 = scmp.eq.s32.totalorder %s23, 0
    %p190 = por %p188, %p189
    %p191 = scmp.ne.s32.totalorder %s183, %s185
    %p192 = scmp.eq.s32.totalorder %s28, 1
    %p193 = por %p191, %p192
    %p194 = scmp.ne.s32.totalorder %s185, %s186
    %p195 = scmp.eq.s32.totalorder %s28, 0
    %p196 = por %p194, %p195
    %p197 = scmp.ne.s32.totalorder %s185, %s186
    %p198 = scmp.eq.s32.totalorder %s29, 1
    %p199 = por %p197, %p198
    %p201 = scmp.ne.s32.totalorder %s186, %s200
    %p202 = scmp.eq.s32.totalorder %s29, 0
    %p203 = por %p201, %p202
    %s205 = sadd.s32 %s204, 1
    %p208 = scmp.eq.s32.totalorder %s23, 1
    %p209 = scmp.ne.s32.totalorder %s204, %s206
    %p210 = scmp.eq.s32.totalorder %s23, 0
    %p211 = por %p209, %p210
    %p212 = scmp.ne.s32.totalorder %s204, %s206
    %p213 = scmp.eq.s32.totalorder %s28, 1
    %p214 = por %p212, %p213
    %p215 = scmp.ne.s32.totalorder %s206, %s207
    %p216 = scmp.eq.s32.totalorder %s28, 0
    %p217 = por %p215, %p216
    %p218 = scmp.ne.s32.totalorder %s206, %s207
    %p219 = scmp.eq.s32.totalorder %s29, 1
    %p220 = por %p218, %p219
    %p222 = scmp.ne.s32.totalorder %s207, %s221
    %p223 = scmp.eq.s32.totalorder %s29, 0
    %p224 = por %p222, %p223
    %s226 = sadd.s32 %s225, 1
    %p229 = scmp.eq.s32.totalorder %s23, 1
    %p230 = scmp.ne.s32.totalorder %s225, %s227
    %p231 = scmp.eq.s32.totalorder %s23, 0
    %p232 = por %p230, %p231
    %p233 = scmp.ne.s32.totalorder %s225, %s227
    %p234 = scmp.eq.s32.totalorder %s28, 1
    %p235 = por %p233, %p234
    %p236 = scmp.ne.s32.totalorder %s227, %s228
    %p237 = scmp.eq.s32.totalorder %s28, 0
    %p238 = por %p236, %p237
    %p239 = scmp.ne.s32.totalorder %s227, %s228
    %p240 = scmp.eq.s32.totalorder %s29, 1
    %p241 = por %p239, %p240
    %p243 = scmp.ne.s32.totalorder %s228, %s242
    %p244 = scmp.eq.s32.totalorder %s29, 0
    %p245 = por %p243, %p244
    %s247 = sadd.s32 %s246, 1
    %p250 = scmp.eq.s32.totalorder %s23, 1
    %p251 = scmp.ne.s32.totalorder %s246, %s248
    %p252 = scmp.eq.s32.totalorder %s23, 0
    %p253 = por %p251, %p252
    %p254 = scmp.ne.s32.totalorder %s246, %s248
    %p255 = scmp.eq.s32.totalorder %s28, 1
    %p256 = por %p254, %p255
    %p257 = scmp.ne.s32.totalorder %s248, %s249
    %p258 = scmp.eq.s32.totalorder %s28, 0
    %p259 = por %p257, %p258
    %p260 = scmp.ne.s32.totalorder %s248, %s249
    %p261 = scmp.eq.s32.totalorder %s29, 1
    %p262 = por %p260, %p261
    %p264 = scmp.ne.s32.totalorder %s249, %s263
    %p265 = scmp.eq.s32.totalorder %s29, 0
    %p266 = por %p264, %p265
    %s268 = sadd.s32 %s267, 1
    %p271 = scmp.eq.s32.totalorder %s23, 1
    %p272 = scmp.ne.s32.totalorder %s267, %s269
    %p273 = scmp.eq.s32.totalorder %s23, 0
    %p274 = por %p272, %p273
    %p275 = scmp.ne.s32.totalorder %s267, %s269
    %p276 = scmp.eq.s32.totalorder %s28, 1
    %p277 = por %p275, %p276
    %p278 = scmp.ne.s32.totalorder %s269, %s270
    %p279 = scmp.eq.s32.totalorder %s28, 0
    %p280 = por %p278, %p279
    %p281 = scmp.ne.s32.totalorder %s269, %s270
    %p282 = scmp.eq.s32.totalorder %s29, 1
    %p283 = por %p281, %p282
    %p285 = scmp.ne.s32.totalorder %s270, %s284
    %p286 = scmp.eq.s32.totalorder %s29, 0
    %p287 = por %p285, %p286
    %s289 = sadd.s32 %s288, 1
    %p292 = scmp.eq.s32.totalorder %s23, 1
    %p293 = scmp.ne.s32.totalorder %s288, %s290
    %p294 = scmp.eq.s32.totalorder %s23, 0
    %p295 = por %p293, %p294
    %p296 = scmp.ne.s32.totalorder %s288, %s290
    %p297 = scmp.eq.s32.totalorder %s28, 1
    %p298 = por %p296, %p297
    %p299 = scmp.ne.s32.totalorder %s290, %s291
    %p300 = scmp.eq.s32.totalorder %s28, 0
    %p301 = por %p299, %p300
    %p302 = scmp.ne.s32.totalorder %s290, %s291
    %p303 = scmp.eq.s32.totalorder %s29, 1
    %p304 = por %p302, %p303
    %p306 = scmp.ne.s32.totalorder %s291, %s305
    %p307 = scmp.eq.s32.totalorder %s29, 0
    %p308 = por %p306, %p307
    %s310 = sadd.s32 %s309, 1
    %p313 = scmp.eq.s32.totalorder %s23, 1
    %p314 = scmp.ne.s32.totalorder %s309, %s311
    %p315 = scmp.eq.s32.totalorder %s23, 0
    %p316 = por %p314, %p315
    %p317 = scmp.ne.s32.totalorder %s309, %s311
    %p318 = scmp.eq.s32.totalorder %s28, 1
    %p319 = por %p317, %p318
    %p320 = scmp.ne.s32.totalorder %s311, %s312
    %p321 = scmp.eq.s32.totalorder %s28, 0
    %p322 = por %p320, %p321
    %p323 = scmp.ne.s32.totalorder %s311, %s312
    %p324 = scmp.eq.s32.totalorder %s29, 1
    %p325 = por %p323, %p324
    %p327 = scmp.ne.s32.totalorder %s312, %s326
    %p328 = scmp.eq.s32.totalorder %s29, 0
    %p329 = por %p327, %p328
    %s331 = sadd.s32 %s330, 1
    %p334 = scmp.eq.s32.totalorder %s23, 1
    %p335 = scmp.ne.s32.totalorder %s330, %s332
    %p336 = scmp.eq.s32.totalorder %s23, 0
    %p337 = por %p335, %p336
    %p338 = scmp.ne.s32.totalorder %s330, %s332
    %p339 = scmp.eq.s32.totalorder %s28, 1
    %p340 = por %p338, %p339
    %p341 = scmp.ne.s32.totalorder %s332, %s333
    %p342 = scmp.eq.s32.totalorder %s28, 0
    %p343 = por %p341, %p342
    %p344 = scmp.ne.s32.totalorder %s332, %s333
    %p345 = scmp.eq.s32.totalorder %s29, 1
    %p346 = por %p344, %p345
    %p348 = scmp.ne.s32.totalorder %s333, %s347
    %p349 = scmp.eq.s32.totalorder %s29, 0
    %p350 = por %p348, %p349
    %s351 = ssub.s32 %s23, %s30
    %p352 = scmp.eq.s32.totalorder %s351, 0
    %s354 = sadd.s32 %s353, 1
    %s355 = scalar_select %p352, %s353, %s354
    %p358 = pneg %p352
    %p359 = scmp.eq.s32.totalorder %s23, 1
    %p360 = por %p358, %p359
    %p361 = scmp.ne.s32.totalorder %s353, %s356
    %p362 = scmp.eq.s32.totalorder %s23, 0
    %p363 = por %p361, %p362
    %p364 = scmp.ne.s32.totalorder %s353, %s356
    %p365 = scmp.eq.s32.totalorder %s28, 1
    %p366 = por %p364, %p365
    %p367 = scmp.ne.s32.totalorder %s356, %s357
    %p368 = scmp.eq.s32.totalorder %s28, 0
    %p369 = por %p367, %p368
    %p370 = scmp.ne.s32.totalorder %s356, %s357
    %p371 = scmp.eq.s32.totalorder %s29, 1
    %p372 = por %p370, %p371
    %p374 = scmp.ne.s32.totalorder %s357, %s373
    %p375 = scmp.eq.s32.totalorder %s29, 0
    %p376 = por %p374, %p375
    %p377 = scmp.le.s32.totalorder 1, %s23
    %p378 = scmp.lt.s32.totalorder %s23, 3
    %p379 = pnand %p377, %p378
    %p380 = pneg %p379
    // Predicated region
    $region9: #{unet_forward.1} parent=5 // pred_check
      _
    $region10: #{unet_forward.1} parent=5 // pred_check_branch
      %382 = sbr.rel (%p379) target = $region12
    $region11: #{unet_forward.1} parent=5 // pred_region
      %s383 = ssub.s32 %s23, 1
      // Predicated region
      $region13: #{unet_forward.1} parent=11 // pred_check
        %p384 = pneg %p70
      $region14: #{unet_forward.1} parent=11 // pred_check_branch
        %386 = sbr.rel (%p384) target = $region16
      $region15: #{unet_forward.1} parent=11 // pred_region
        _
      $region16: #{unet_forward.1} parent=11 // pred_fallthru
        _
      // Predicated region
      $region17: #{unet_forward.1} parent=11 // pred_check
        %p387 = pneg %p91
      $region18: #{unet_forward.1} parent=11 // pred_check_branch
        %389 = sbr.rel (%p387) target = $region20
      $region19: #{unet_forward.1} parent=11 // pred_region
        _
      $region20: #{unet_forward.1} parent=11 // pred_fallthru
        _
      // Predicated region
      $region21: #{unet_forward.1} parent=11 // pred_check
        %p390 = pneg %p112
      $region22: #{unet_forward.1} parent=11 // pred_check_branch
        %392 = sbr.rel (%p390) target = $region24
      $region23: #{unet_forward.1} parent=11 // pred_region
        _
      $region24: #{unet_forward.1} parent=11 // pred_fallthru
        _
      // Predicated region
      $region25: #{unet_forward.1} parent=11 // pred_check
        %p393 = pneg %p133
      $region26: #{unet_forward.1} parent=11 // pred_check_branch
        %395 = sbr.rel (%p393) target = $region28
      $region27: #{unet_forward.1} parent=11 // pred_region
        _
      $region28: #{unet_forward.1} parent=11 // pred_fallthru
        _
      // Predicated region
      $region29: #{unet_forward.1} parent=11 // pred_check
        %p396 = pneg %p154
      $region30: #{unet_forward.1} parent=11 // pred_check_branch
        %398 = sbr.rel (%p396) target = $region32
      $region31: #{unet_forward.1} parent=11 // pred_region
        _
      $region32: #{unet_forward.1} parent=11 // pred_fallthru
        _
      // Predicated region
      $region33: #{unet_forward.1} parent=11 // pred_check
        %p399 = pneg %p175
      $region34: #{unet_forward.1} parent=11 // pred_check_branch
        %401 = sbr.rel (%p399) target = $region36
      $region35: #{unet_forward.1} parent=11 // pred_region
        _
      $region36: #{unet_forward.1} parent=11 // pred_fallthru
        _
      // Predicated region
      $region37: #{unet_forward.1} parent=11 // pred_check
        %p402 = pneg %p196
      $region38: #{unet_forward.1} parent=11 // pred_check_branch
        %404 = sbr.rel (%p402) target = $region40
      $region39: #{unet_forward.1} parent=11 // pred_region
        _
      $region40: #{unet_forward.1} parent=11 // pred_fallthru
        _
      // Predicated region
      $region41: #{unet_forward.1} parent=11 // pred_check
        %p405 = pneg %p217
      $region42: #{unet_forward.1} parent=11 // pred_check_branch
        %407 = sbr.rel (%p405) target = $region44
      $region43: #{unet_forward.1} parent=11 // pred_region
        _
      $region44: #{unet_forward.1} parent=11 // pred_fallthru
        _
      // Predicated region
      $region45: #{unet_forward.1} parent=11 // pred_check
        %p408 = pneg %p238
      $region46: #{unet_forward.1} parent=11 // pred_check_branch
        %410 = sbr.rel (%p408) target = $region48
      $region47: #{unet_forward.1} parent=11 // pred_region
        _
      $region48: #{unet_forward.1} parent=11 // pred_fallthru
        _
      // Predicated region
      $region49: #{unet_forward.1} parent=11 // pred_check
        %p411 = pneg %p259
      $region50: #{unet_forward.1} parent=11 // pred_check_branch
        %413 = sbr.rel (%p411) target = $region52
      $region51: #{unet_forward.1} parent=11 // pred_region
        _
      $region52: #{unet_forward.1} parent=11 // pred_fallthru
        _
      // Predicated region
      $region53: #{unet_forward.1} parent=11 // pred_check
        %p414 = pneg %p280
      $region54: #{unet_forward.1} parent=11 // pred_check_branch
        %416 = sbr.rel (%p414) target = $region56
      $region55: #{unet_forward.1} parent=11 // pred_region
        _
      $region56: #{unet_forward.1} parent=11 // pred_fallthru
        _
      // Predicated region
      $region57: #{unet_forward.1} parent=11 // pred_check
        %p417 = pneg %p301
      $region58: #{unet_forward.1} parent=11 // pred_check_branch
        %419 = sbr.rel (%p417) target = $region60
      $region59: #{unet_forward.1} parent=11 // pred_region
        _
      $region60: #{unet_forward.1} parent=11 // pred_fallthru
        _
      // Predicated region
      $region61: #{unet_forward.1} parent=11 // pred_check
        %p420 = pneg %p322
      $region62: #{unet_forward.1} parent=11 // pred_check_branch
        %422 = sbr.rel (%p420) target = $region64
      $region63: #{unet_forward.1} parent=11 // pred_region
        _
      $region64: #{unet_forward.1} parent=11 // pred_fallthru
        _
      // Predicated region
      $region65: #{unet_forward.1} parent=11 // pred_check
        %p423 = pneg %p343
      $region66: #{unet_forward.1} parent=11 // pred_check_branch
        %425 = sbr.rel (%p423) target = $region68
      $region67: #{unet_forward.1} parent=11 // pred_region
        _
      $region68: #{unet_forward.1} parent=11 // pred_fallthru
        _
    $region12: #{unet_forward.1} parent=5 // pred_fallthru
      _
    %p426 = scmp.lt.s32.totalorder %s23, 2
    // Predicated region
    $region69: #{unet_forward.1} parent=5 // pred_check
      %p427 = pneg %p426
    $region70: #{unet_forward.1} parent=5 // pred_check_branch
      %429 = sbr.rel (%p427) target = $region72
    $region71: #{unet_forward.1} parent=5 // pred_region
      // Predicated region
      $region73: #{unet_forward.1} parent=71 // pred_check
        %p430 = pneg %p43
      $region74: #{unet_forward.1} parent=71 // pred_check_branch
        %432 = sbr.rel (%p430) target = $region76
      $region75: #{unet_forward.1} parent=71 // pred_region
        %p433 = scmp.lt.s32.totalorder %s23, 1
        %s434 = scalar_select %p433, %s23, 1
        %s435 = smul.addr %s434, 2
        %s436 = scalar_lea.vmem %s0, %s435
      $region76: #{unet_forward.1} parent=71 // pred_fallthru
        _
    $region72: #{unet_forward.1} parent=5 // pred_fallthru
      _
    %p437 = scmp.le.s32.totalorder 1, %s23
    %p438 = scmp.lt.s32.totalorder %s23, 3
    %p439 = pnand %p437, %p438
    %p440 = pneg %p439
    // Predicated region
    $region77: #{unet_forward.1} parent=5 // pred_check
      _
    $region78: #{unet_forward.1} parent=5 // pred_check_branch
      %442 = sbr.rel (%p439) target = $region80
    $region79: #{unet_forward.1} parent=5 // pred_region
      %s443 = ssub.s32 %s23, 1
      %p444 = scmp.lt.s32.totalorder %s28, 1
      %s445 = scalar_select %p444, %s28, 1
      %s446 = smul.addr %s445, 2
      %s447 = scalar_lea.vmem %s0, %s446
      %p448 = pneg %p49
      %p449 = pneg %p46
      %p450 = pneg %p70
      %p451 = pneg %p67
      %p452 = pneg %p91
      %p453 = pneg %p88
      %p454 = pneg %p112
      %p455 = pneg %p109
      %p456 = pneg %p133
      %p457 = pneg %p130
      %p458 = pneg %p154
      %p459 = pneg %p151
      %p460 = pneg %p175
      %p461 = pneg %p172
      %p462 = pneg %p196
      %p463 = pneg %p193
      %p464 = pneg %p217
      %p465 = pneg %p214
      %p466 = pneg %p238
      %p467 = pneg %p235
      %p468 = pneg %p259
      %p469 = pneg %p256
      %p470 = pneg %p280
      %p471 = pneg %p277
      %p472 = pneg %p301
      %p473 = pneg %p298
      %p474 = pneg %p322
      %p475 = pneg %p319
      %p476 = pneg %p343
      %p477 = pneg %p340
      %p478 = pneg %p369
      %p479 = pneg %p366
      %p480 = scmp.lt.s32.totalorder %s28, 1
      %s481 = scalar_select %p480, %s28, 1
      %s482 = smul.addr %s481, 2
      %s483 = scalar_lea.vmem %s15, %s482
      %p484 = scmp.lt.s32.totalorder %s28, 1
      %s485 = scalar_select %p484, %s28, 1
      %s486 = smul.addr %s485, 2
      %s487 = scalar_lea.vmem %s0, %s486
      %p488 = scmp.lt.s32.totalorder %s28, 1
      %s489 = scalar_select %p488, %s28, 1
      %s490 = smul.addr %s489, 2
      %s491 = scalar_lea.vmem %s15, %s490
      %v493 = vld [vmem:[%s487] sm:$0x3]
      %v494 = vld [vmem:[%s1] sm:$0xf]
      %v495 = vld [vmem:[%s8] sm:$0xff]
      %v496 = vld [vmem:[%s8 + $0x8] sm:$0xff]
      %v497 = vld [vmem:[%s8 + $0x10] sm:$0x1]
      %v498 = vld [vmem:[%s8 + $0x18] sm:$0x1]
      %v500 = vlaneseq
      %v501 = vshrl.u32 %v500, 7
      %v502 = vsub.s32 1, %v501
      %v503 = vrot.slane %v493, %v502
      %504 = vrot.lane.b32.xlu0 %v503, 17
      %v505 = vpop.permute.xlu0 %504
      %v507 = vlaneseq
      %v508 = vshrl.u32 %v507, 7
      %v509 = vsub.s32 0, %v508
      %v510 = vrot.slane %v493, %v509
      %511 = vrot.lane.b32.xlu0 %v510, 17
      %v512 = vpop.permute.xlu0 %511
      %vm513 = vcmask 138240
      %v514 = vsel %vm513, %v512, %v505
      %v517 = vsel %vm513, %v505, %v512
      %v518 = vmul.f32 %v517, %v495
      %v519 = vmul.f32 %v514, %v496
      %520 = vrot.lane.b32.xlu0 %v503, 16
      %v521 = vpop.permute.xlu0 %520
      %523 = vrot.lane.b32.xlu0 %v510, 16
      %v524 = vpop.permute.xlu0 %523
      %vm525 = vcmask 130048
      %v526 = vsel %vm525, %v524, %v521
      %v529 = vsel %vm525, %v521, %v524
      %v532 = vrot.slane %v495, 1
      %v533 = vrot.slane %v496, 1
      %v536 = vmul.f32 %v529, %v532
      %v537 = vmul.f32 %v526, %v533
      %538 = vrot.lane.b32.xlu0 %v503, 15
      %v539 = vpop.permute.xlu0 %538
      %541 = vrot.lane.b32.xlu0 %v510, 15
      %v542 = vpop.permute.xlu0 %541
      %vm543 = vcmask 121856
      %v544 = vsel %vm543, %v542, %v539
      %v547 = vsel %vm543, %v539, %v542
      %v548 = vrot.slane %v495, 2
      %v549 = vrot.slane %v496, 2
      %v552 = vmul.f32 %v547, %v548
      %v553 = vmul.f32 %v544, %v549
      %554 = vrot.lane.b32.xlu0 %v503, 1
      %v555 = vpop.permute.xlu0 %554
      %557 = vrot.lane.b32.xlu0 %v510, 1
      %v558 = vpop.permute.xlu0 %557
      %vm559 = vcmask 7168
      %v560 = vsel %vm559, %v558, %v555
      %v563 = vsel %vm559, %v555, %v558
      %v564 = vrot.slane %v495, 3
      %v565 = vrot.slane %v496, 3
      %v568 = vmul.f32 %v563, %v564
      %v569 = vmul.f32 %v560, %v565
      %570 = vrot.lane.b32.xlu0 %v510, 127
      %v571 = vpop.permute.xlu0 %570
      %572 = vrot.lane.b32.xlu0 %v503, 127
      %v573 = vpop.permute.xlu0 %572
      %vm574 = vcmask 1039360
      %v575 = vsel %vm574, %v571, %v573
      %v579 = vsel %vm574, %v573, %v571
      %v580 = vrot.slane %v495, 5
      %v581 = vrot.slane %v496, 5
      %v584 = vmul.f32 %v575, %v580
      %v585 = vmul.f32 %v579, %v581
      %586 = vrot.lane.b32.xlu0 %v510, 113
      %v587 = vpop.permute.xlu0 %586
      %588 = vrot.lane.b32.xlu0 %v503, 113
      %v589 = vpop.permute.xlu0 %588
      %vm590 = vcmask 924672
      %v591 = vsel %vm590, %v587, %v589
      %v595 = vsel %vm590, %v589, %v587
      %v596 = vrot.slane %v495, 6
      %v597 = vrot.slane %v496, 6
      %v600 = vmul.f32 %v591, %v596
      %v601 = vmul.f32 %v595, %v597
      %602 = vrot.lane.b32.xlu0 %v510, 112
      %v603 = vpop.permute.xlu0 %602
      %604 = vrot.lane.b32.xlu0 %v503, 112
      %v605 = vpop.permute.xlu0 %604
      %vm606 = vcmask 916480
      %v607 = vsel %vm606, %v603, %v605
      %v611 = vsel %vm606, %v605, %v603
      %v612 = vrot.slane %v495, 7
      %v613 = vrot.slane %v496, 7
      %v616 = vmul.f32 %v607, %v612
      %v617 = vmul.f32 %v611, %v613
      %618 = vrot.lane.b32.xlu0 %v510, 111
      %v619 = vpop.permute.xlu0 %618
      %620 = vrot.lane.b32.xlu0 %v503, 111
      %v621 = vpop.permute.xlu0 %620
      %vm622 = vcmask 908288
      %v623 = vsel %vm622, %v619, %v621
      %v627 = vsel %vm622, %v621, %v619
      %v628 = vmul.f32 %v623, %v497
      %v629 = vmul.f32 %v627, %v498
      %v632 = vrot.slane %v536, 7
      %v633 = vrot.slane %v537, 7
      %v638 = vrot.slane %v552, 6
      %v639 = vrot.slane %v553, 6
      %v644 = vrot.slane %v568, 5
      %v645 = vrot.slane %v569, 5
      %v652 = vrot.slane %v584, 3
      %v653 = vrot.slane %v585, 3
      %v658 = vrot.slane %v600, 2
      %v659 = vrot.slane %v601, 2
      %v664 = vrot.slane %v616, 1
      %v665 = vrot.slane %v617, 1
      %vm668 = vcmask 1040384
      %v669 = vsel %vm668, %v518, %v632
      %v670 = vsel %vm668, %v519, %v633
      %vm671 = vcmask 1041408
      %v672 = vsel %vm671, %v669, %v638
      %v673 = vsel %vm671, %v670, %v639
      %vm674 = vcmask 1042432
      %v675 = vsel %vm674, %v672, %v644
      %v676 = vsel %vm674, %v673, %v645
      %vm677 = vcmask 1043456
      %v678 = vsel %vm677, %v675, %v510
      %v679 = vsel %vm677, %v676, %v503
      %vm680 = vcmask 1044480
      %v681 = vsel %vm680, %v678, %v652
      %v682 = vsel %vm680, %v679, %v653
      %vm683 = vcmask 1045504
      %v684 = vsel %vm683, %v681, %v658
      %v685 = vsel %vm683, %v682, %v659
      %vm686 = vcmask 1046528
      %v687 = vsel %vm686, %v684, %v664
      %v688 = vsel %vm686, %v685, %v665
      %v689 = vpack.c.bf16 %v628, %v687
      %v690 = vpack.c.bf16 %v629, %v688
      %vm691 = vcmask 72704
      %v693 = vsel %vm691, %v494, 0
      %v695 = vsel %vm677, 4294967295, 65535
      %v696 = vsel %vm680, %v695, 0
      %v698 = vand.u32 %v689, %v696
      %v701 = vand.u32 %v690, %v696
      %703 = vmatprep.subr.bf16.mxu0 %v701
      %704 = vmatpush1.bf16.msra.mxu0 %v698
      %705 = vmatprep.subr.bf16.mxu0 0
      %706 = vmatpush1.bf16.msra.mxu0 0
      %707 = vmatprep.subr.bf16.mxu0 0
      %708 = vmatpush1.bf16.msra.mxu0 0
      %709 = vmatprep.subr.bf16.mxu0 0
      %710 = vmatpush1.bf16.msra.mxu0 0
      %711 = vmatprep.subr.bf16.mxu0 0
      %712 = vmatpush1.bf16.msra.mxu0 0
      %713 = vmatprep.subr.bf16.mxu0 0
      %714 = vmatpush1.bf16.msra.mxu0 0
      %715 = vmatprep.subr.bf16.mxu0 0
      %716 = vmatpush1.bf16.msra.mxu0 0
      %717 = vmatprep.subr.bf16.mxu0 0
      %718 = vmatpush1.bf16.msra.mxu0 0
      %719 = vmatprep.subr.bf16.mxu0 0
      %720 = vmatpush1.bf16.msra.mxu0 0
      %721 = vmatprep.subr.bf16.mxu0 0
      %722 = vmatpush1.bf16.msra.mxu0 0
      %723 = vmatprep.subr.bf16.mxu0 0
      %724 = vmatpush1.bf16.msra.mxu0 0
      %725 = vmatprep.subr.bf16.mxu0 0
      %726 = vmatpush1.bf16.msra.mxu0 0
      %727 = vmatprep.subr.bf16.mxu0 0
      %728 = vmatpush1.bf16.msra.mxu0 0
      %729 = vmatprep.subr.bf16.mxu0 0
      %730 = vmatpush1.bf16.msra.mxu0 0
      %731 = vmatprep.subr.bf16.mxu0 0
      %732 = vmatpush1.bf16.msra.mxu0 0
      %733 = vmatprep.subr.bf16.mxu0 0
      %734 = vmatpush1.bf16.msra.mxu0 0
      %735 = vmatprep.mubr.bf16.mxu0 0
      %736 = vmatmul.mubr.bf16.gmra.mrb[0].mxu0 %v693
      %v737 = vpop.f32.mrb[0].mxu0
      %v738 = vadd.f32 0.0, %v737
      %v739 = vpop.f32.mrb[0].mxu0
      %v740 = vadd.f32 0.0, %v739
      %v741 = vpop.f32.mrb[0].mxu0
      %v742 = vpop.f32.mrb[0].mxu0
      %743 = vdwg.mxu0
      %v744 = vadd.f32 %v738, %v740
      %745 = vadd.xlane.f32.xlu0 %v744
      %v746 = vpop.xlane.xlu0 %745
      %v747 = vmul.f32 %v746, 0.00390625
      %v748 = vmul.f32 %v738, %v738
      %v749 = vmul.f32 %v740, %v740
      %v750 = vadd.f32 %v748, %v749
      %751 = vadd.xlane.f32.xlu0 %v750
      %v752 = vpop.xlane.xlu0 %751
      %v753 = vmul.f32 %v752, 0.00390625
      %v754 = vmul.f32 %v747, %v747
      %v755 = vsub.f32 %v753, %v754
      %v756 = vmax.f32 %v755, 0.0
      %v757 = vsub.f32 %v738, %v747
      %v758 = vsub.f32 %v740, %v747
      %v759 = vadd.f32 %v756, 1e-05
      %v760 = vrsqrt.pop %v759
      %v761 = vmul.f32 %v757, %v760
      %v762 = vmul.f32 %v758, %v760
      %v763 = vmax.f32 %v761, 0.0
      %v764 = vmax.f32 %v762, 0.0
      %v765 = vld [vmem:[%s11] sm:$0xff]
      %v766 = vld [vmem:[%s11 + $0x8] sm:$0xff]
      %v767 = vld [vmem:[%s11 + $0x10] sm:$0xff]
      %v768 = vld [vmem:[%s11 + $0x18] sm:$0xff]
      %v769 = vld [vmem:[%s11 + $0x20] sm:$0xff]
      %v770 = vld [vmem:[%s11 + $0x28] sm:$0xff]
      %v771 = vld [vmem:[%s11 + $0x30] sm:$0xff]
      %v772 = vld [vmem:[%s11 + $0x38] sm:$0xff]
      %v773 = vld [vmem:[%s11 + $0x40] sm:$0xff]
      %v774 = vld [vmem:[%s11 + $0x48] sm:$0xff]
      %v775 = vld [vmem:[%s11 + $0x50] sm:$0xff]
      %v776 = vld [vmem:[%s11 + $0x58] sm:$0xff]
      %v777 = vld [vmem:[%s11 + $0x60] sm:$0xff]
      %v778 = vld [vmem:[%s11 + $0x68] sm:$0xff]
      %v779 = vld [vmem:[%s11 + $0x70] sm:$0xff]
      %v780 = vld [vmem:[%s11 + $0x78] sm:$0xff]
      %v781 = vld [vmem:[%s11 + $0x80] sm:$0xff]
      %v782 = vld [vmem:[%s11 + $0x88] sm:$0xff]
      %v783 = vld [vmem:[%s11 + $0x90] sm:$0xff]
      %v784 = vld [vmem:[%s11 + $0x98] sm:$0xff]
      %v785 = vld [vmem:[%s11 + $0xa0] sm:$0xff]
      %v786 = vld [vmem:[%s11 + $0xa8] sm:$0xff]
      %v787 = vld [vmem:[%s11 + $0xb0] sm:$0xff]
      %v788 = vld [vmem:[%s11 + $0xb8] sm:$0xff]
      %v789 = vld [vmem:[%s11 + $0xc0] sm:$0xff]
      %v790 = vld [vmem:[%s11 + $0xc8] sm:$0xff]
      %v791 = vld [vmem:[%s11 + $0xd0] sm:$0xff]
      %v792 = vld [vmem:[%s11 + $0xd8] sm:$0xff]
      %v793 = vld [vmem:[%s11 + $0xe0] sm:$0xff]
      %v794 = vld [vmem:[%s11 + $0xe8] sm:$0xff]
      %v795 = vld [vmem:[%s11 + $0xf0] sm:$0xff]
      %v796 = vld [vmem:[%s11 + $0xf8] sm:$0xff]
      %799 = vrot.lane.b32.xlu0 %v763, 127
      %v800 = vpop.permute.xlu0 %799
      %801 = vrot.lane.b32.xlu0 %v764, 127
      %v802 = vpop.permute.xlu0 %801
      %v803 = vsel %vm574, %v800, %v802
      %v807 = vsel %vm574, %v802, %v800
      %v808 = vmax.f32 %v763, %v803
      %v809 = vmax.f32 %v764, %v807
      %810 = vrot.lane.b32.xlu0 %v763, 112
      %v811 = vpop.permute.xlu0 %810
      %812 = vrot.lane.b32.xlu0 %v764, 112
      %v813 = vpop.permute.xlu0 %812
      %v814 = vsel %vm606, %v811, %v813
      %v818 = vsel %vm606, %v813, %v811
      %819 = vrot.lane.b32.xlu0 %v763, 111
      %v820 = vpop.permute.xlu0 %819
      %821 = vrot.lane.b32.xlu0 %v764, 111
      %v822 = vpop.permute.xlu0 %821
      %v823 = vsel %vm622, %v820, %v822
      %v827 = vsel %vm622, %v822, %v820
      %v828 = vmax.f32 %v814, %v823
      %v829 = vmax.f32 %v818, %v827
      %v830 = vmax.f32 %v808, %v828
      %v831 = vmax.f32 %v809, %v829
      %832 = vmatprep.subr.mxu0 0.0
      %833 = vmatpush1.msra.mxu0 %v765
      %834 = vmatprep.subr.mxu0 0.0
      %835 = vmatpush1.msra.mxu0 %v766
      %836 = vmatprep.subr.mxu0 0.0
      %837 = vmatpush1.msra.mxu0 %v767
      %838 = vmatprep.subr.mxu0 0.0
      %839 = vmatpush1.msra.mxu0 %v768
      %840 = vmatprep.subr.mxu0 0.0
      %841 = vmatpush1.msra.mxu0 %v769
      %842 = vmatprep.subr.mxu0 0.0
      %843 = vmatpush1.msra.mxu0 %v770
      %844 = vmatprep.subr.mxu0 0.0
      %845 = vmatpush1.msra.mxu0 %v771
      %846 = vmatprep.subr.mxu0 0.0
      %847 = vmatpush1.msra.mxu0 %v772
      %848 = vmatprep.subr.mxu0 0.0
      %849 = vmatpush1.msra.mxu0 %v773
      %850 = vmatprep.subr.mxu0 0.0
      %851 = vmatpush1.msra.mxu0 %v774
      %852 = vmatprep.subr.mxu0 0.0
      %853 = vmatpush1.msra.mxu0 %v775
      %854 = vmatprep.subr.mxu0 0.0
      %855 = vmatpush1.msra.mxu0 %v776
      %856 = vmatprep.subr.mxu0 0.0
      %857 = vmatpush1.msra.mxu0 %v777
      %858 = vmatprep.subr.mxu0 0.0
      %859 = vmatpush1.msra.mxu0 %v778
      %860 = vmatprep.subr.mxu0 0.0
      %861 = vmatpush1.msra.mxu0 %v779
      %862 = vmatprep.subr.mxu0 0.0
      %863 = vmatpush1.msra.mxu0 %v780
      %864 = vmatprep.subr.mxu0 0.0
      %865 = vmatpush1.msra.mxu0 %v781
      %866 = vmatprep.subr.mxu0 0.0
      %867 = vmatpush1.msra.mxu0 %v782
      %868 = vmatprep.subr.mxu0 0.0
      %869 = vmatpush1.msra.mxu0 %v783
      %870 = vmatprep.subr.mxu0 0.0
      %871 = vmatpush1.msra.mxu0 %v784
      %872 = vmatprep.subr.mxu0 0.0
      %873 = vmatpush1.msra.mxu0 %v785
      %874 = vmatprep.subr.mxu0 0.0
      %875 = vmatpush1.msra.mxu0 %v786
      %876 = vmatprep.subr.mxu0 0.0
      %877 = vmatpush1.msra.mxu0 %v787
      %878 = vmatprep.subr.mxu0 0.0
      %879 = vmatpush1.msra.mxu0 %v788
      %880 = vmatprep.subr.mxu0 0.0
      %881 = vmatpush1.msra.mxu0 %v789
      %882 = vmatprep.subr.mxu0 0.0
      %883 = vmatpush1.msra.mxu0 %v790
      %884 = vmatprep.subr.mxu0 0.0
      %885 = vmatpush1.msra.mxu0 %v791
      %886 = vmatprep.subr.mxu0 0.0
      %887 = vmatpush1.msra.mxu0 %v792
      %888 = vmatprep.subr.mxu0 0.0
      %889 = vmatpush1.msra.mxu0 %v793
      %890 = vmatprep.subr.mxu0 0.0
      %891 = vmatpush1.msra.mxu0 %v794
      %892 = vmatprep.subr.mxu0 0.0
      %893 = vmatpush1.msra.mxu0 %v795
      %894 = vmatprep.subr.mxu0 0.0
      %895 = vmatpush1.msra.mxu0 %v796
      %896 = vmatprep.mubr.f32.mxu0 %v831
      %897 = vmatmul.mubr.f32.gmra.mrb[0].mxu0 %v830
      %v898 = vpop.f32.mrb[0].mxu0
      %v899 = vadd.f32 0.0, %v898
      %v900 = vpop.f32.mrb[0].mxu0
      %901 = vdwg.mxu0
      %v902 = vld [vmem:[%s2] sm:$0xf]
      %v903 = vld [vmem:[%s2 + $0x4] sm:$0xf]
      %v904 = vld [vmem:[%s9] sm:$0xff]
      %v905 = vld [vmem:[%s9 + $0x8] sm:$0x1]
      %907 = vrot.lane.b32.xlu0 %v899, 73
      %v908 = vpop.permute.xlu0 %907
      %910 = vrot.lane.b32.xlu0 %v899, 9
      %v911 = vpop.permute.xlu0 %910
      %v913 = vsel %vm691, %v908, %v911
      %v914 = vlaneseq
      %v915 = vshrl.u32 %v914, 7
      %v916 = vsub.s32 0, %v915
      %v917 = vrot.slane %v904, %v916
      %v918 = vmul.f32 %v913, %v917
      %919 = vrot.lane.b32.xlu0 %v899, 72
      %v920 = vpop.permute.xlu0 %919
      %922 = vrot.lane.b32.xlu0 %v899, 8
      %v923 = vpop.permute.xlu0 %922
      %vm925 = vcmask 64512
      %v926 = vsel %vm925, %v920, %v923
      %v927 = vlaneseq
      %v928 = vshrl.u32 %v927, 7
      %v929 = vsub.s32 1, %v928
      %v930 = vrot.slane %v904, %v929
      %v931 = vmul.f32 %v926, %v930
      %932 = vrot.lane.b32.xlu0 %v899, 71
      %v933 = vpop.permute.xlu0 %932
      %935 = vrot.lane.b32.xlu0 %v899, 7
      %v936 = vpop.permute.xlu0 %935
      %vm938 = vcmask 56320
      %v939 = vsel %vm938, %v933, %v936
      %v940 = vlaneseq
      %v941 = vshrl.u32 %v940, 7
      %v942 = vsub.s32 2, %v941
      %v943 = vrot.slane %v904, %v942
      %v944 = vmul.f32 %v939, %v943
      %945 = vrot.lane.b32.xlu0 %v899, 65
      %v946 = vpop.permute.xlu0 %945
      %948 = vrot.lane.b32.xlu0 %v899, 1
      %v949 = vpop.permute.xlu0 %948
      %v951 = vsel %vm559, %v946, %v949
      %v952 = vlaneseq
      %v953 = vshrl.u32 %v952, 7
      %v954 = vsub.s32 3, %v953
      %v955 = vrot.slane %v904, %v954
      %v956 = vmul.f32 %v951, %v955
      %957 = vrot.lane.b32.xlu0 %v899, 127
      %v958 = vpop.permute.xlu0 %957
      %960 = vrot.lane.b32.xlu0 %v899, 63
      %v961 = vpop.permute.xlu0 %960
      %vm963 = vcmask 515072
      %v964 = vsel %vm963, %v958, %v961
      %v965 = vlaneseq
      %v966 = vshrl.u32 %v965, 7
      %v967 = vsub.s32 5, %v966
      %v968 = vrot.slane %v904, %v967
      %v969 = vmul.f32 %v964, %v968
      %970 = vrot.lane.b32.xlu0 %v899, 121
      %v971 = vpop.permute.xlu0 %970
      %973 = vrot.lane.b32.xlu0 %v899, 57
      %v974 = vpop.permute.xlu0 %973
      %vm976 = vcmask 465920
      %v977 = vsel %vm976, %v971, %v974
      %v978 = vlaneseq
      %v979 = vshrl.u32 %v978, 7
      %v980 = vsub.s32 6, %v979
      %v981 = vrot.slane %v904, %v980
      %v982 = vmul.f32 %v977, %v981
      %983 = vrot.lane.b32.xlu0 %v899, 120
      %v984 = vpop.permute.xlu0 %983
      %986 = vrot.lane.b32.xlu0 %v899, 56
      %v987 = vpop.permute.xlu0 %986
      %vm989 = vcmask 457728
      %v990 = vsel %vm989, %v984, %v987
      %v991 = vlaneseq
      %v992 = vshrl.u32 %v991, 7
      %v993 = vsub.s32 7, %v992
      %v994 = vrot.slane %v904, %v993
      %v995 = vmul.f32 %v990, %v994
      %996 = vrot.lane.b32.xlu0 %v899, 119
      %v997 = vpop.permute.xlu0 %996
      %999 = vrot.lane.b32.xlu0 %v899, 55
      %v1000 = vpop.permute.xlu0 %999
      %vm1002 = vcmask 449536
      %v1003 = vsel %vm1002, %v997, %v1000
      %v1004 = vlaneseq
      %v1005 = vshrl.u32 %v1004, 7
      %v1006 = vsub.s32 0, %v1005
      %v1007 = vrot.slane %v905, %v1006
      %v1008 = vmul.f32 %v1003, %v1007
      %v1009 = vpack.c.bf16 %v931, %v918
      %v1010 = vpack.c.bf16 %v956, %v944
      %v1011 = vpack.c.bf16 %v969, %v899
      %v1012 = vpack.c.bf16 %v995, %v982
      %v1013 = vpack.c.bf16 %v1008, %v1008
      %v1016 = vunpack.c.l.b16 %v902
      %v1017 = vunpack.c.l.b16 %v903
      %v1018 = vpack.c.b16 %v1017, %v1016
      %vm1019 = vcmask 588800
      %v1021 = vsel %vm1019, %v1018, 0
      %v1024 = vsel %vm677, %v1013, 0
      %1026 = vmatprep.subr.bf16.mxu0 0
      %1027 = vmatpush1.bf16.msra.mxu0 %v1009
      %1028 = vmatprep.subr.bf16.mxu0 0
      %1029 = vmatpush1.bf16.msra.mxu0 %v1010
      %1030 = vmatprep.subr.bf16.mxu0 0
      %1031 = vmatpush1.bf16.msra.mxu0 %v1011
      %1032 = vmatprep.subr.bf16.mxu0 0
      %1033 = vmatpush1.bf16.msra.mxu0 %v1012
      %1034 = vmatprep.subr.bf16.mxu0 0
      %1035 = vmatpush1.bf16.msra.mxu0 %v1024
      %1036 = vmatprep.subr.bf16.mxu0 0
      %1037 = vmatpush1.bf16.msra.mxu0 0
      %1038 = vmatprep.subr.bf16.mxu0 0
      %1039 = vmatpush1.bf16.msra.mxu0 0
      %1040 = vmatprep.subr.bf16.mxu0 0
      %1041 = vmatpush1.bf16.msra.mxu0 0
      %1042 = vmatprep.subr.bf16.mxu0 0
      %1043 = vmatpush1.bf16.msra.mxu0 0
      %1044 = vmatprep.subr.bf16.mxu0 0
      %1045 = vmatpush1.bf16.msra.mxu0 0
      %1046 = vmatprep.subr.bf16.mxu0 0
      %1047 = vmatpush1.bf16.msra.mxu0 0
      %1048 = vmatprep.subr.bf16.mxu0 0
      %1049 = vmatpush1.bf16.msra.mxu0 0
      %1050 = vmatprep.subr.bf16.mxu0 0
      %1051 = vmatpush1.bf16.msra.mxu0 0
      %1052 = vmatprep.subr.bf16.mxu0 0
      %1053 = vmatpush1.bf16.msra.mxu0 0
      %1054 = vmatprep.subr.bf16.mxu0 0
      %1055 = vmatpush1.bf16.msra.mxu0 0
      %1056 = vmatprep.subr.bf16.mxu0 0
      %1057 = vmatpush1.bf16.msra.mxu0 0
      %1058 = vmatprep.mubr.bf16.mxu0 0
      %1059 = vmatmul.mubr.bf16.gmra.mrb[0].mxu0 %v1021
      %v1060 = vpop.f32.mrb[0].mxu0
      %v1061 = vadd.f32 0.0, %v1060
      %v1062 = vpop.f32.mrb[0].mxu0
      %v1063 = vpop.f32.mrb[0].mxu0
      %v1064 = vadd.f32 0.0, %v1063
      %v1065 = vpop.f32.mrb[0].mxu0
      %1066 = vdwg.mxu0
      %vm1067 = vcmask 523264
      %v1068 = vsel %vm1067, %v1061, 0.0
      %1069 = vadd.xlane.f32.xlu0 %v1068
      %v1070 = vpop.xlane.xlu0 %1069
      %v1071 = vsel %vm1067, %v1064, 0.0
      %1072 = vadd.xlane.f32.xlu0 %v1071
      %v1073 = vpop.xlane.xlu0 %1072
      %v1074 = vmul.f32 %v1070, 0.015625
      %v1075 = vmul.f32 %v1073, 0.015625
      %v1076 = vmul.f32 %v1061, %v1061
      %v1077 = vmul.f32 %v1064, %v1064
      %v1078 = vsel %vm1067, %v1076, 0.0
      %1079 = vadd.xlane.f32.xlu0 %v1078
      %v1080 = vpop.xlane.xlu0 %1079
      %v1081 = vsel %vm1067, %v1077, 0.0
      %1082 = vadd.xlane.f32.xlu0 %v1081
      %v1083 = vpop.xlane.xlu0 %1082
      %v1084 = vmul.f32 %v1080, 0.015625
      %v1085 = vmul.f32 %v1083, 0.015625
      %v1086 = vmul.f32 %v1074, %v1074
      %v1087 = vmul.f32 %v1075, %v1075
      %v1088 = vsub.f32 %v1084, %v1086
      %v1089 = vsub.f32 %v1085, %v1087
      %v1090 = vmax.f32 %v1088, 0.0
      %v1091 = vmax.f32 %v1089, 0.0
      %v1092 = vsub.f32 %v1061, %v1074
      %v1093 = vsub.f32 %v1064, %v1075
      %v1094 = vadd.f32 %v1090, 1e-05
      %v1095 = vadd.f32 %v1091, 1e-05
      %v1096 = vrsqrt.pop %v1094
      %v1097 = vrsqrt.pop %v1095
      %v1098 = vmul.f32 %v1092, %v1096
      %v1099 = vmul.f32 %v1093, %v1097
      %v1100 = vmax.f32 %v1098, 0.0
      %v1101 = vmax.f32 %v1099, 0.0
      %v1102 = vld [vmem:[%s12] sm:$0xff]
      %v1103 = vld [vmem:[%s12 + $0x8] sm:$0xff]
      %v1104 = vld [vmem:[%s12 + $0x10] sm:$0xff]
      %v1105 = vld [vmem:[%s12 + $0x18] sm:$0xff]
      %v1106 = vld [vmem:[%s12 + $0x20] sm:$0xff]
      %v1107 = vld [vmem:[%s12 + $0x28] sm:$0xff]
      %v1108 = vld [vmem:[%s12 + $0x30] sm:$0xff]
      %v1109 = vld [vmem:[%s12 + $0x38] sm:$0xff]
      %1112 = vrot.lane.b32.xlu0 %v1100, 127
      %v1113 = vpop.permute.xlu0 %1112
      %1114 = vrot.lane.b32.xlu0 %v1101, 127
      %v1115 = vpop.permute.xlu0 %1114
      %1118 = vrot.lane.b32.xlu0 %v1100, 63
      %v1119 = vpop.permute.xlu0 %1118
      %1120 = vrot.lane.b32.xlu0 %v1101, 63
      %v1121 = vpop.permute.xlu0 %1120
      %v1124 = vsel %vm963, %v1113, %v1119
      %v1125 = vsel %vm963, %v1115, %v1121
      %v1126 = vmax.f32 %v1100, %v1124
      %v1127 = vmax.f32 %v1101, %v1125
      %1128 = vrot.lane.b32.xlu0 %v1100, 120
      %v1129 = vpop.permute.xlu0 %1128
      %1130 = vrot.lane.b32.xlu0 %v1101, 120
      %v1131 = vpop.permute.xlu0 %1130
      %1134 = vrot.lane.b32.xlu0 %v1100, 56
      %v1135 = vpop.permute.xlu0 %1134
      %1136 = vrot.lane.b32.xlu0 %v1101, 56
      %v1137 = vpop.permute.xlu0 %1136
      %v1140 = vsel %vm989, %v1129, %v1135
      %v1141 = vsel %vm989, %v1131, %v1137
      %1142 = vrot.lane.b32.xlu0 %v1100, 119
      %v1143 = vpop.permute.xlu0 %1142
      %1144 = vrot.lane.b32.xlu0 %v1101, 119
      %v1145 = vpop.permute.xlu0 %1144
      %1148 = vrot.lane.b32.xlu0 %v1100, 55
      %v1149 = vpop.permute.xlu0 %1148
      %1150 = vrot.lane.b32.xlu0 %v1101, 55
      %v1151 = vpop.permute.xlu0 %1150
      %v1154 = vsel %vm1002, %v1143, %v1149
      %v1155 = vsel %vm1002, %v1145, %v1151
      %v1156 = vmax.f32 %v1140, %v1154
      %v1157 = vmax.f32 %v1141, %v1155
      %v1158 = vmax.f32 %v1126, %v1156
      %v1159 = vmax.f32 %v1127, %v1157
      %v1161 = vsel %vm1067, %v1158, 0
      %v1164 = vsel %vm1067, %v1159, 0
      %1166 = vmatprep.subr.mxu0 0.0
      %1167 = vmatpush1.msra.mxu0 %v1102
      %1168 = vmatprep.subr.mxu0 0.0
      %1169 = vmatpush1.msra.mxu0 %v1103
      %1170 = vmatprep.subr.mxu0 0.0
      %1171 = vmatpush1.msra.mxu0 %v1104
      %1172 = vmatprep.subr.mxu0 0.0
      %1173 = vmatpush1.msra.mxu0 %v1105
      %1174 = vmatprep.subr.mxu0 0.0
      %1175 = vmatpush1.msra.mxu0 %v1106
      %1176 = vmatprep.subr.mxu0 0.0
      %1177 = vmatpush1.msra.mxu0 %v1107
      %1178 = vmatprep.subr.mxu0 0.0
      %1179 = vmatpush1.msra.mxu0 %v1108
      %1180 = vmatprep.subr.mxu0 0.0
      %1181 = vmatpush1.msra.mxu0 %v1109
      %1182 = vmatprep.subr.mxu0 0.0
      %1183 = vmatpush1.msra.mxu0 0.0
      %1184 = vmatprep.subr.mxu0 0.0
      %1185 = vmatpush1.msra.mxu0 0.0
      %1186 = vmatprep.subr.mxu0 0.0
      %1187 = vmatpush1.msra.mxu0 0.0
      %1188 = vmatprep.subr.mxu0 0.0
      %1189 = vmatpush1.msra.mxu0 0.0
      %1190 = vmatprep.subr.mxu0 0.0
      %1191 = vmatpush1.msra.mxu0 0.0
      %1192 = vmatprep.subr.mxu0 0.0
      %1193 = vmatpush1.msra.mxu0 0.0
      %1194 = vmatprep.subr.mxu0 0.0
      %1195 = vmatpush1.msra.mxu0 0.0
      %1196 = vmatprep.subr.mxu0 0.0
      %1197 = vmatpush1.msra.mxu0 0.0
      %1198 = vmatprep.subr.mxu0 0.0
      %1199 = vmatpush1.msra.mxu0 0.0
      %1200 = vmatprep.subr.mxu0 0.0
      %1201 = vmatpush1.msra.mxu0 0.0
      %1202 = vmatprep.subr.mxu0 0.0
      %1203 = vmatpush1.msra.mxu0 0.0
      %1204 = vmatprep.subr.mxu0 0.0
      %1205 = vmatpush1.msra.mxu0 0.0
      %1206 = vmatprep.subr.mxu0 0.0
      %1207 = vmatpush1.msra.mxu0 0.0
      %1208 = vmatprep.subr.mxu0 0.0
      %1209 = vmatpush1.msra.mxu0 0.0
      %1210 = vmatprep.subr.mxu0 0.0
      %1211 = vmatpush1.msra.mxu0 0.0
      %1212 = vmatprep.subr.mxu0 0.0
      %1213 = vmatpush1.msra.mxu0 0.0
      %1214 = vmatprep.subr.mxu0 0.0
      %1215 = vmatpush1.msra.mxu0 0.0
      %1216 = vmatprep.subr.mxu0 0.0
      %1217 = vmatpush1.msra.mxu0 0.0
      %1218 = vmatprep.subr.mxu0 0.0
      %1219 = vmatpush1.msra.mxu0 0.0
      %1220 = vmatprep.subr.mxu0 0.0
      %1221 = vmatpush1.msra.mxu0 0.0
      %1222 = vmatprep.subr.mxu0 0.0
      %1223 = vmatpush1.msra.mxu0 0.0
      %1224 = vmatprep.subr.mxu0 0.0
      %1225 = vmatpush1.msra.mxu0 0.0
      %1226 = vmatprep.subr.mxu0 0.0
      %1227 = vmatpush1.msra.mxu0 0.0
      %1228 = vmatprep.subr.mxu0 0.0
      %1229 = vmatpush1.msra.mxu0 0.0
      %1230 = vmatprep.mubr.f32.mxu0 0.0
      %1231 = vmatmul.mubr.f32.gmra.mrb[0].mxu0 %v1161
      %v1232 = vpop.f32.mrb[0].mxu0
      %v1233 = vadd.f32 0.0, %v1232
      %v1234 = vpop.f32.mrb[0].mxu0
      %1235 = vmatprep.mubr.f32.mxu0 0.0
      %1236 = vmatmul.mubr.f32.gmra.mrb[0].mxu0 %v1164
      %v1237 = vpop.f32.mrb[0].mxu0
      %v1238 = vadd.f32 0.0, %v1237
      %v1239 = vpop.f32.mrb[0].mxu0
      %1240 = vdwg.mxu0
      %v1241 = vld [vmem:[%s3] sm:$0xff]
      %v1242 = vld [vmem:[%s3 + $0x8] sm:$0xff]
      %v1243 = vld [vmem:[%s10] sm:$0xff]
      %v1244 = vld [vmem:[%s10 + $0x8] sm:$0x1]
      %1247 = vrot.lane.b32.xlu0 %v1233, 117
      %v1248 = vpop.permute.xlu0 %1247
      %1249 = vrot.lane.b32.xlu0 %v1238, 117
      %v1250 = vpop.permute.xlu0 %1249
      %1253 = vrot.lane.b32.xlu0 %v1233, 5
      %v1254 = vpop.permute.xlu0 %1253
      %1255 = vrot.lane.b32.xlu0 %v1238, 5
      %v1256 = vpop.permute.xlu0 %1255
      %vm1259 = vcmask 39936
      %v1260 = vsel %vm1259, %v1248, %v1254
      %v1261 = vsel %vm1259, %v1250, %v1256
      %v1262 = vlaneseq
      %v1263 = vshrl.u32 %v1262, 7
      %v1264 = vsub.s32 0, %v1263
      %v1265 = vrot.slane %v1243, %v1264
      %v1266 = vmul.f32 %v1260, %v1265
      %v1267 = vmul.f32 %v1261, %v1265
      %1268 = vrot.lane.b32.xlu0 %v1233, 116
      %v1269 = vpop.permute.xlu0 %1268
      %1270 = vrot.lane.b32.xlu0 %v1238, 116
      %v1271 = vpop.permute.xlu0 %1270
      %1274 = vrot.lane.b32.xlu0 %v1233, 4
      %v1275 = vpop.permute.xlu0 %1274
      %1276 = vrot.lane.b32.xlu0 %v1238, 4
      %v1277 = vpop.permute.xlu0 %1276
      %vm1280 = vcmask 31744
      %v1281 = vsel %vm1280, %v1269, %v1275
      %v1282 = vsel %vm1280, %v1271, %v1277
      %v1283 = vlaneseq
      %v1284 = vshrl.u32 %v1283, 7
      %v1285 = vsub.s32 1, %v1284
      %v1286 = vrot.slane %v1243, %v1285
      %v1287 = vmul.f32 %v1281, %v1286
      %v1288 = vmul.f32 %v1282, %v1286
      %1289 = vrot.lane.b32.xlu0 %v1233, 115
      %v1290 = vpop.permute.xlu0 %1289
      %1291 = vrot.lane.b32.xlu0 %v1238, 115
      %v1292 = vpop.permute.xlu0 %1291
      %1295 = vrot.lane.b32.xlu0 %v1233, 3
      %v1296 = vpop.permute.xlu0 %1295
      %1297 = vrot.lane.b32.xlu0 %v1238, 3
      %v1298 = vpop.permute.xlu0 %1297
      %vm1301 = vcmask 23552
      %v1302 = vsel %vm1301, %v1290, %v1296
      %v1303 = vsel %vm1301, %v1292, %v1298
      %v1304 = vlaneseq
      %v1305 = vshrl.u32 %v1304, 7
      %v1306 = vsub.s32 2, %v1305
      %v1307 = vrot.slane %v1243, %v1306
      %v1308 = vmul.f32 %v1302, %v1307
      %v1309 = vmul.f32 %v1303, %v1307
      %1310 = vrot.lane.b32.xlu0 %v1233, 113
      %v1311 = vpop.permute.xlu0 %1310
      %1312 = vrot.lane.b32.xlu0 %v1238, 113
      %v1313 = vpop.permute.xlu0 %1312
      %1316 = vrot.lane.b32.xlu0 %v1233, 1
      %v1317 = vpop.permute.xlu0 %1316
      %1318 = vrot.lane.b32.xlu0 %v1238, 1
      %v1319 = vpop.permute.xlu0 %1318
      %v1322 = vsel %vm559, %v1311, %v1317
      %v1323 = vsel %vm559, %v1313, %v1319
      %v1324 = vlaneseq
      %v1325 = vshrl.u32 %v1324, 7
      %v1326 = vsub.s32 3, %v1325
      %v1327 = vrot.slane %v1243, %v1326
      %v1328 = vmul.f32 %v1322, %v1327
      %v1329 = vmul.f32 %v1323, %v1327
      %1330 = vrot.lane.b32.xlu0 %v1233, 127
      %v1331 = vpop.permute.xlu0 %1330
      %1332 = vrot.lane.b32.xlu0 %v1238, 127
      %v1333 = vpop.permute.xlu0 %1332
      %1336 = vrot.lane.b32.xlu0 %v1233, 15
      %v1337 = vpop.permute.xlu0 %1336
      %1338 = vrot.lane.b32.xlu0 %v1238, 15
      %v1339 = vpop.permute.xlu0 %1338
      %v1342 = vsel %vm543, %v1331, %v1337
      %v1343 = vsel %vm543, %v1333, %v1339
      %v1344 = vlaneseq
      %v1345 = vshrl.u32 %v1344, 7
      %v1346 = vsub.s32 5, %v1345
      %v1347 = vrot.slane %v1243, %v1346
      %v1348 = vmul.f32 %v1342, %v1347
      %v1349 = vmul.f32 %v1343, %v1347
      %1350 = vrot.lane.b32.xlu0 %v1233, 125
      %v1351 = vpop.permute.xlu0 %1350
      %1352 = vrot.lane.b32.xlu0 %v1238, 125
      %v1353 = vpop.permute.xlu0 %1352
      %1356 = vrot.lane.b32.xlu0 %v1233, 13
      %v1357 = vpop.permute.xlu0 %1356
      %1358 = vrot.lane.b32.xlu0 %v1238, 13
      %v1359 = vpop.permute.xlu0 %1358
      %vm1362 = vcmask 105472
      %v1363 = vsel %vm1362, %v1351, %v1357
      %v1364 = vsel %vm1362, %v1353, %v1359
      %v1365 = vlaneseq
      %v1366 = vshrl.u32 %v1365, 7
      %v1367 = vsub.s32 6, %v1366
      %v1368 = vrot.slane %v1243, %v1367
      %v1369 = vmul.f32 %v1363, %v1368
      %v1370 = vmul.f32 %v1364, %v1368
      %1371 = vrot.lane.b32.xlu0 %v1233, 124
      %v1372 = vpop.permute.xlu0 %1371
      %1373 = vrot.lane.b32.xlu0 %v1238, 124
      %v1374 = vpop.permute.xlu0 %1373
      %1377 = vrot.lane.b32.xlu0 %v1233, 12
      %v1378 = vpop.permute.xlu0 %1377
      %1379 = vrot.lane.b32.xlu0 %v1238, 12
      %v1380 = vpop.permute.xlu0 %1379
      %vm1383 = vcmask 97280
      %v1384 = vsel %vm1383, %v1372, %v1378
      %v1385 = vsel %vm1383, %v1374, %v1380
      %v1386 = vlaneseq
      %v1387 = vshrl.u32 %v1386, 7
      %v1388 = vsub.s32 7, %v1387
      %v1389 = vrot.slane %v1243, %v1388
      %v1390 = vmul.f32 %v1384, %v1389
      %v1391 = vmul.f32 %v1385, %v1389
      %1392 = vrot.lane.b32.xlu0 %v1233, 123
      %v1393 = vpop.permute.xlu0 %1392
      %1394 = vrot.lane.b32.xlu0 %v1238, 123
      %v1395 = vpop.permute.xlu0 %1394
      %1398 = vrot.lane.b32.xlu0 %v1233, 11
      %v1399 = vpop.permute.xlu0 %1398
      %1400 = vrot.lane.b32.xlu0 %v1238, 11
      %v1401 = vpop.permute.xlu0 %1400
      %vm1404 = vcmask 89088
      %v1405 = vsel %vm1404, %v1393, %v1399
      %v1406 = vsel %vm1404, %v1395, %v1401
      %v1407 = vlaneseq
      %v1408 = vshrl.u32 %v1407, 7
      %v1409 = vsub.s32 0, %v1408
      %v1410 = vrot.slane %v1244, %v1409
      %v1411 = vmul.f32 %v1405, %v1410
      %v1412 = vmul.f32 %v1406, %v1410
      %v1413 = vpack.c.bf16 %v1267, %v1266
      %v1414 = vpack.c.bf16 %v1288, %v1287
      %v1415 = vpack.c.bf16 %v1309, %v1308
      %v1416 = vpack.c.bf16 %v1329, %v1328
      %v1417 = vpack.c.bf16 %v1238, %v1233
      %v1418 = vpack.c.bf16 %v1349, %v1348
      %v1419 = vpack.c.bf16 %v1370, %v1369
      %v1420 = vpack.c.bf16 %v1391, %v1390
      %v1421 = vpack.c.bf16 %v1412, %v1411
      %v1424 = vunpack.c.l.b16 %v1241
      %v1425 = vunpack.c.h.b16 %v1241
      %v1426 = vunpack.c.l.b16 %v1242
      %v1427 = vunpack.c.h.b16 %v1242
      %v1428 = vpack.c.b16 %v1426, %v1424
      %v1429 = vpack.c.b16 %v1427, %v1425
      %v1432 = vsel %vm525, %v1429, 0
      %1434 = vmatprep.subr.bf16.mxu0 0
      %1435 = vmatpush1.bf16.msra.mxu0 %v1413
      %1436 = vmatprep.subr.bf16.mxu0 0
      %1437 = vmatpush1.bf16.msra.mxu0 %v1414
      %1438 = vmatprep.subr.bf16.mxu0 0
      %1439 = vmatpush1.bf16.msra.mxu0 %v1415
      %1440 = vmatprep.subr.bf16.mxu0 0
      %1441 = vmatpush1.bf16.msra.mxu0 %v1416
      %1442 = vmatprep.subr.bf16.mxu0 0
      %1443 = vmatpush1.bf16.msra.mxu0 %v1417
      %1444 = vmatprep.subr.bf16.mxu0 0
      %1445 = vmatpush1.bf16.msra.mxu0 %v1418
      %1446 = vmatprep.subr.bf16.mxu0 0
      %1447 = vmatpush1.bf16.msra.mxu0 %v1419
      %1448 = vmatprep.subr.bf16.mxu0 0
      %1449 = vmatpush1.bf16.msra.mxu0 %v1420
      %1450 = vmatprep.subr.bf16.mxu0 0
      %1451 = vmatpush1.bf16.msra.mxu0 %v1421
      %1452 = vmatprep.subr.bf16.mxu0 0
      %1453 = vmatpush1.bf16.msra.mxu0 0
      %1454 = vmatprep.subr.bf16.mxu0 0
      %1455 = vmatpush1.bf16.msra.mxu0 0
      %1456 = vmatprep.subr.bf16.mxu0 0
      %1457 = vmatpush1.bf16.msra.mxu0 0
      %1458 = vmatprep.subr.bf16.mxu0 0
      %1459 = vmatpush1.bf16.msra.mxu0 0
      %1460 = vmatprep.subr.bf16.mxu0 0
      %1461 = vmatpush1.bf16.msra.mxu0 0
      %1462 = vmatprep.subr.bf16.mxu0 0
      %1463 = vmatpush1.bf16.msra.mxu0 0
      %1464 = vmatprep.subr.bf16.mxu0 0
      %1465 = vmatpush1.bf16.msra.mxu0 0
      %1466 = vmatprep.mubr.bf16.mxu0 %v1432
      %1467 = vmatmul.mubr.bf16.gmra.mrb[0].mxu0 %v1428
      %v1468 = vpop.f32.mrb[0].mxu0
      %v1469 = vadd.f32 0.0, %v1468
      %v1470 = vpop.f32.mrb[0].mxu0
      %v1471 = vpop.f32.mrb[0].mxu0
      %v1472 = vadd.f32 0.0, %v1471
      %v1473 = vpop.f32.mrb[0].mxu0
      %1474 = vdwg.mxu0
      %v1475 = vsel %vm525, %v1469, 0.0
      %1476 = vadd.xlane.f32.xlu0 %v1475
      %v1477 = vpop.xlane.xlu0 %1476
      %v1478 = vsel %vm525, %v1472, 0.0
      %1479 = vadd.xlane.f32.xlu0 %v1478
      %v1480 = vpop.xlane.xlu0 %1479
      %v1481 = vmul.f32 %v1477, 0.0625
      %v1482 = vmul.f32 %v1480, 0.0625
      %v1483 = vmul.f32 %v1469, %v1469
      %v1484 = vmul.f32 %v1472, %v1472
      %v1485 = vsel %vm525, %v1483, 0.0
      %1486 = vadd.xlane.f32.xlu0 %v1485
      %v1487 = vpop.xlane.xlu0 %1486
      %v1488 = vsel %vm525, %v1484, 0.0
      %1489 = vadd.xlane.f32.xlu0 %v1488
      %v1490 = vpop.xlane.xlu0 %1489
      %v1491 = vmul.f32 %v1487, 0.0625
      %v1492 = vmul.f32 %v1490, 0.0625
      %v1493 = vmul.f32 %v1481, %v1481
      %v1494 = vmul.f32 %v1482, %v1482
      %v1495 = vsub.f32 %v1491, %v1493
      %v1496 = vsub.f32 %v1492, %v1494
      %v1497 = vmax.f32 %v1495, 0.0
      %v1498 = vmax.f32 %v1496, 0.0
      %v1499 = vsub.f32 %v1469, %v1481
      %v1500 = vsub.f32 %v1472, %v1482
      %v1501 = vadd.f32 %v1497, 1e-05
      %v1502 = vadd.f32 %v1498, 1e-05
      %v1503 = vrsqrt.pop %v1501
      %v1504 = vrsqrt.pop %v1502
      %v1505 = vmul.f32 %v1499, %v1503
      %v1506 = vmul.f32 %v1500, %v1504
      %v1507 = vmax.f32 %v1505, 0.0
      %v1508 = vmax.f32 %v1506, 0.0
      %v1509 = vld [vmem:[%s13] sm:$0xff]
      %v1510 = vld [vmem:[%s13 + $0x8] sm:$0xff]
      %v1512 = vsel %vm525, %v1507, 0
      %v1515 = vsel %vm525, %v1508, 0
      %1517 = vmatprep.subr.mxu0 0.0
      %1518 = vmatpush1.msra.mxu0 %v1509
      %1519 = vmatprep.subr.mxu0 0.0
      %1520 = vmatpush1.msra.mxu0 %v1510
      %1521 = vmatprep.subr.mxu0 0.0
      %1522 = vmatpush1.msra.mxu0 0.0
      %1523 = vmatprep.subr.mxu0 0.0
      %1524 = vmatpush1.msra.mxu0 0.0
      %1525 = vmatprep.subr.mxu0 0.0
      %1526 = vmatpush1.msra.mxu0 0.0
      %1527 = vmatprep.subr.mxu0 0.0
      %1528 = vmatpush1.msra.mxu0 0.0
      %1529 = vmatprep.subr.mxu0 0.0
      %1530 = vmatpush1.msra.mxu0 0.0
      %1531 = vmatprep.subr.mxu0 0.0
      %1532 = vmatpush1.msra.mxu0 0.0
      %1533 = vmatprep.subr.mxu0 0.0
      %1534 = vmatpush1.msra.mxu0 0.0
      %1535 = vmatprep.subr.mxu0 0.0
      %1536 = vmatpush1.msra.mxu0 0.0
      %1537 = vmatprep.subr.mxu0 0.0
      %1538 = vmatpush1.msra.mxu0 0.0
      %1539 = vmatprep.subr.mxu0 0.0
      %1540 = vmatpush1.msra.mxu0 0.0
      %1541 = vmatprep.subr.mxu0 0.0
      %1542 = vmatpush1.msra.mxu0 0.0
      %1543 = vmatprep.subr.mxu0 0.0
      %1544 = vmatpush1.msra.mxu0 0.0
      %1545 = vmatprep.subr.mxu0 0.0
      %1546 = vmatpush1.msra.mxu0 0.0
      %1547 = vmatprep.subr.mxu0 0.0
      %1548 = vmatpush1.msra.mxu0 0.0
      %1549 = vmatprep.subr.mxu0 0.0
      %1550 = vmatpush1.msra.mxu0 0.0
      %1551 = vmatprep.subr.mxu0 0.0
      %1552 = vmatpush1.msra.mxu0 0.0
      %1553 = vmatprep.subr.mxu0 0.0
      %1554 = vmatpush1.msra.mxu0 0.0
      %1555 = vmatprep.subr.mxu0 0.0
      %1556 = vmatpush1.msra.mxu0 0.0
      %1557 = vmatprep.subr.mxu0 0.0
      %1558 = vmatpush1.msra.mxu0 0.0
      %1559 = vmatprep.subr.mxu0 0.0
      %1560 = vmatpush1.msra.mxu0 0.0
      %1561 = vmatprep.subr.mxu0 0.0
      %1562 = vmatpush1.msra.mxu0 0.0
      %1563 = vmatprep.subr.mxu0 0.0
      %1564 = vmatpush1.msra.mxu0 0.0
      %1565 = vmatprep.subr.mxu0 0.0
      %1566 = vmatpush1.msra.mxu0 0.0
      %1567 = vmatprep.subr.mxu0 0.0
      %1568 = vmatpush1.msra.mxu0 0.0
      %1569 = vmatprep.subr.mxu0 0.0
      %1570 = vmatpush1.msra.mxu0 0.0
      %1571 = vmatprep.subr.mxu0 0.0
      %1572 = vmatpush1.msra.mxu0 0.0
      %1573 = vmatprep.subr.mxu0 0.0
      %1574 = vmatpush1.msra.mxu0 0.0
      %1575 = vmatprep.subr.mxu0 0.0
      %1576 = vmatpush1.msra.mxu0 0.0
      %1577 = vmatprep.subr.mxu0 0.0
      %1578 = vmatpush1.msra.mxu0 0.0
      %1579 = vmatprep.subr.mxu0 0.0
      %1580 = vmatpush1.msra.mxu0 0.0
      %1581 = vmatprep.mubr.f32.mxu0 0.0
      %1582 = vmatmul.mubr.f32.gmra.mrb[0].mxu0 %v1512
      %v1583 = vpop.f32.mrb[0].mxu0
      %v1584 = vadd.f32 0.0, %v1583
      %v1585 = vpop.f32.mrb[0].mxu0
      %1586 = vmatprep.mubr.f32.mxu0 0.0
      %1587 = vmatmul.mubr.f32.gmra.mrb[0].mxu0 %v1515
      %v1588 = vpop.f32.mrb[0].mxu0
      %v1589 = vadd.f32 0.0, %v1588
      %v1590 = vpop.f32.mrb[0].mxu0
      %1591 = vdwg.mxu0
      %v1592 = vld [vmem:[%s4] sm:$0xff]
      %v1593 = vld [vmem:[%s4 + $0x8] sm:$0xf]
      %1596 = vrot.lane.b32.xlu0 %v1584, 73
      %v1597 = vpop.permute.xlu0 %1596
      %1598 = vrot.lane.b32.xlu0 %v1589, 73
      %v1599 = vpop.permute.xlu0 %1598
      %1600 = vrot.lane.b32.xlu0 %v1100, 73
      %v1601 = vpop.permute.xlu0 %1600
      %1602 = vrot.lane.b32.xlu0 %v1101, 73
      %v1603 = vpop.permute.xlu0 %1602
      %1608 = vrot.lane.b32.xlu0 %v1584, 9
      %v1609 = vpop.permute.xlu0 %1608
      %1610 = vrot.lane.b32.xlu0 %v1589, 9
      %v1611 = vpop.permute.xlu0 %1610
      %1612 = vrot.lane.b32.xlu0 %v1100, 9
      %v1613 = vpop.permute.xlu0 %1612
      %1614 = vrot.lane.b32.xlu0 %v1101, 9
      %v1615 = vpop.permute.xlu0 %1614
      %v1620 = vsel %vm691, %v1597, %v1609
      %v1621 = vsel %vm691, %v1599, %v1611
      %v1622 = vsel %vm691, %v1601, %v1613
      %v1623 = vsel %vm691, %v1603, %v1615
      %v1624 = vmul.f32 %v1620, %v917
      %v1625 = vmul.f32 %v1621, %v917
      %v1626 = vmul.f32 %v1622, %v917
      %v1627 = vmul.f32 %v1623, %v917
      %1628 = vrot.lane.b32.xlu0 %v1584, 72
      %v1629 = vpop.permute.xlu0 %1628
      %1630 = vrot.lane.b32.xlu0 %v1589, 72
      %v1631 = vpop.permute.xlu0 %1630
      %1632 = vrot.lane.b32.xlu0 %v1100, 72
      %v1633 = vpop.permute.xlu0 %1632
      %1634 = vrot.lane.b32.xlu0 %v1101, 72
      %v1635 = vpop.permute.xlu0 %1634
      %1640 = vrot.lane.b32.xlu0 %v1584, 8
      %v1641 = vpop.permute.xlu0 %1640
      %1642 = vrot.lane.b32.xlu0 %v1589, 8
      %v1643 = vpop.permute.xlu0 %1642
      %1644 = vrot.lane.b32.xlu0 %v1100, 8
      %v1645 = vpop.permute.xlu0 %1644
      %1646 = vrot.lane.b32.xlu0 %v1101, 8
      %v1647 = vpop.permute.xlu0 %1646
      %v1652 = vsel %vm925, %v1629, %v1641
      %v1653 = vsel %vm925, %v1631, %v1643
      %v1654 = vsel %vm925, %v1633, %v1645
      %v1655 = vsel %vm925, %v1635, %v1647
      %v1656 = vmul.f32 %v1652, %v930
      %v1657 = vmul.f32 %v1653, %v930
      %v1658 = vmul.f32 %v1654, %v930
      %v1659 = vmul.f32 %v1655, %v930
      %1660 = vrot.lane.b32.xlu0 %v1584, 71
      %v1661 = vpop.permute.xlu0 %1660
      %1662 = vrot.lane.b32.xlu0 %v1589, 71
      %v1663 = vpop.permute.xlu0 %1662
      %1664 = vrot.lane.b32.xlu0 %v1100, 71
      %v1665 = vpop.permute.xlu0 %1664
      %1666 = vrot.lane.b32.xlu0 %v1101, 71
      %v1667 = vpop.permute.xlu0 %1666
      %1672 = vrot.lane.b32.xlu0 %v1584, 7
      %v1673 = vpop.permute.xlu0 %1672
      %1674 = vrot.lane.b32.xlu0 %v1589, 7
      %v1675 = vpop.permute.xlu0 %1674
      %1676 = vrot.lane.b32.xlu0 %v1100, 7
      %v1677 = vpop.permute.xlu0 %1676
      %1678 = vrot.lane.b32.xlu0 %v1101, 7
      %v1679 = vpop.permute.xlu0 %1678
      %v1684 = vsel %vm938, %v1661, %v1673
      %v1685 = vsel %vm938, %v1663, %v1675
      %v1686 = vsel %vm938, %v1665, %v1677
      %v1687 = vsel %vm938, %v1667, %v1679
      %v1688 = vmul.f32 %v1684, %v943
      %v1689 = vmul.f32 %v1685, %v943
      %v1690 = vmul.f32 %v1686, %v943
      %v1691 = vmul.f32 %v1687, %v943
      %1692 = vrot.lane.b32.xlu0 %v1584, 65
      %v1693 = vpop.permute.xlu0 %1692
      %1694 = vrot.lane.b32.xlu0 %v1589, 65
      %v1695 = vpop.permute.xlu0 %1694
      %1696 = vrot.lane.b32.xlu0 %v1100, 65
      %v1697 = vpop.permute.xlu0 %1696
      %1698 = vrot.lane.b32.xlu0 %v1101, 65
      %v1699 = vpop.permute.xlu0 %1698
      %1704 = vrot.lane.b32.xlu0 %v1584, 1
      %v1705 = vpop.permute.xlu0 %1704
      %1706 = vrot.lane.b32.xlu0 %v1589, 1
      %v1707 = vpop.permute.xlu0 %1706
      %1708 = vrot.lane.b32.xlu0 %v1100, 1
      %v1709 = vpop.permute.xlu0 %1708
      %1710 = vrot.lane.b32.xlu0 %v1101, 1
      %v1711 = vpop.permute.xlu0 %1710
      %v1716 = vsel %vm559, %v1693, %v1705
      %v1717 = vsel %vm559, %v1695, %v1707
      %v1718 = vsel %vm559, %v1697, %v1709
      %v1719 = vsel %vm559, %v1699, %v1711
      %v1720 = vmul.f32 %v1716, %v955
      %v1721 = vmul.f32 %v1717, %v955
      %v1722 = vmul.f32 %v1718, %v955
      %v1723 = vmul.f32 %v1719, %v955
      %1724 = vrot.lane.b32.xlu0 %v1584, 127
      %v1725 = vpop.permute.xlu0 %1724
      %1726 = vrot.lane.b32.xlu0 %v1589, 127
      %v1727 = vpop.permute.xlu0 %1726
      %1730 = vrot.lane.b32.xlu0 %v1584, 63
      %v1731 = vpop.permute.xlu0 %1730
      %1732 = vrot.lane.b32.xlu0 %v1589, 63
      %v1733 = vpop.permute.xlu0 %1732
      %v1736 = vsel %vm963, %v1725, %v1731
      %v1737 = vsel %vm963, %v1727, %v1733
      %v1738 = vmul.f32 %v1736, %v968
      %v1739 = vmul.f32 %v1737, %v968
      %v1740 = vmul.f32 %v1124, %v968
      %v1741 = vmul.f32 %v1125, %v968
      %1742 = vrot.lane.b32.xlu0 %v1584, 121
      %v1743 = vpop.permute.xlu0 %1742
      %1744 = vrot.lane.b32.xlu0 %v1589, 121
      %v1745 = vpop.permute.xlu0 %1744
      %1746 = vrot.lane.b32.xlu0 %v1100, 121
      %v1747 = vpop.permute.xlu0 %1746
      %1748 = vrot.lane.b32.xlu0 %v1101, 121
      %v1749 = vpop.permute.xlu0 %1748
      %1754 = vrot.lane.b32.xlu0 %v1584, 57
      %v1755 = vpop.permute.xlu0 %1754
      %1756 = vrot.lane.b32.xlu0 %v1589, 57
      %v1757 = vpop.permute.xlu0 %1756
      %1758 = vrot.lane.b32.xlu0 %v1100, 57
      %v1759 = vpop.permute.xlu0 %1758
      %1760 = vrot.lane.b32.xlu0 %v1101, 57
      %v1761 = vpop.permute.xlu0 %1760
      %v1766 = vsel %vm976, %v1743, %v1755
      %v1767 = vsel %vm976, %v1745, %v1757
      %v1768 = vsel %vm976, %v1747, %v1759
      %v1769 = vsel %vm976, %v1749, %v1761
      %v1770 = vmul.f32 %v1766, %v981
      %v1771 = vmul.f32 %v1767, %v981
      %v1772 = vmul.f32 %v1768, %v981
      %v1773 = vmul.f32 %v1769, %v981
      %1774 = vrot.lane.b32.xlu0 %v1584, 120
      %v1775 = vpop.permute.xlu0 %1774
      %1776 = vrot.lane.b32.xlu0 %v1589, 120
      %v1777 = vpop.permute.xlu0 %1776
      %1780 = vrot.lane.b32.xlu0 %v1584, 56
      %v1781 = vpop.permute.xlu0 %1780
      %1782 = vrot.lane.b32.xlu0 %v1589, 56
      %v1783 = vpop.permute.xlu0 %1782
      %v1786 = vsel %vm989, %v1775, %v1781
      %v1787 = vsel %vm989, %v1777, %v1783
      %v1788 = vmul.f32 %v1786, %v994
      %v1789 = vmul.f32 %v1787, %v994
      %v1790 = vmul.f32 %v1140, %v994
      %v1791 = vmul.f32 %v1141, %v994
      %1792 = vrot.lane.b32.xlu0 %v1584, 119
      %v1793 = vpop.permute.xlu0 %1792
      %1794 = vrot.lane.b32.xlu0 %v1589, 119
      %v1795 = vpop.permute.xlu0 %1794
      %1798 = vrot.lane.b32.xlu0 %v1584, 55
      %v1799 = vpop.permute.xlu0 %1798
      %1800 = vrot.lane.b32.xlu0 %v1589, 55
      %v1801 = vpop.permute.xlu0 %1800
      %v1804 = vsel %vm1002, %v1793, %v1799
      %v1805 = vsel %vm1002, %v1795, %v1801
      %v1806 = vmul.f32 %v1804, %v1007
      %v1807 = vmul.f32 %v1805, %v1007
      %v1808 = vmul.f32 %v1154, %v1007
      %v1809 = vmul.f32 %v1155, %v1007
      %v1810 = vpack.c.bf16 %v1625, %v1624
      %v1811 = vpack.c.bf16 %v1627, %v1626
      %v1812 = vpack.c.bf16 %v1657, %v1656
      %v1813 = vpack.c.bf16 %v1659, %v1658
      %v1814 = vpack.c.bf16 %v1689, %v1688
      %v1815 = vpack.c.bf16 %v1691, %v1690
      %v1816 = vpack.c.bf16 %v1721, %v1720
      %v1817 = vpack.c.bf16 %v1723, %v1722
      %v1818 = vpack.c.bf16 %v1589, %v1584
      %v1819 = vpack.c.bf16 %v1101, %v1100
      %v1820 = vpack.c.bf16 %v1739, %v1738
      %v1821 = vpack.c.bf16 %v1741, %v1740
      %v1822 = vpack.c.bf16 %v1771, %v1770
      %v1823 = vpack.c.bf16 %v1773, %v1772
      %v1824 = vpack.c.bf16 %v1789, %v1788
      %v1825 = vpack.c.bf16 %v1791, %v1790
      %v1826 = vpack.c.bf16 %v1807, %v1806
      %v1827 = vpack.c.bf16 %v1809, %v1808
      %v1830 = vunpack.c.l.b16 %v1592
      %v1831 = vunpack.c.h.b16 %v1592
      %v1832 = vunpack.c.l.b16 %v1593
      %v1833 = vpack.c.b16 %v1830, %v1830
      %v1834 = vpack.c.b16 %v1831, %v1831
      %v1835 = vpack.c.b16 %v1832, %v1832
      %vm1838 = vcmask 261120
      %v1840 = vsel %vm1838, %v1835, 0
      %1842 = vmatprep.subr.bf16.mxu0 0
      %1843 = vmatpush1.bf16.msra.mxu0 %v1810
      %1844 = vmatprep.subr.bf16.mxu0 0
      %1845 = vmatpush1.bf16.msra.mxu0 %v1811
      %1846 = vmatprep.subr.bf16.mxu0 0
      %1847 = vmatpush1.bf16.msra.mxu0 %v1812
      %1848 = vmatprep.subr.bf16.mxu0 0
      %1849 = vmatpush1.bf16.msra.mxu0 %v1813
      %1850 = vmatprep.subr.bf16.mxu0 0
      %1851 = vmatpush1.bf16.msra.mxu0 %v1814
      %1852 = vmatprep.subr.bf16.mxu0 0
      %1853 = vmatpush1.bf16.msra.mxu0 %v1815
      %1854 = vmatprep.subr.bf16.mxu0 0
      %1855 = vmatpush1.bf16.msra.mxu0 %v1816
      %1856 = vmatprep.subr.bf16.mxu0 0
      %1857 = vmatpush1.bf16.msra.mxu0 %v1817
      %1858 = vmatprep.subr.bf16.mxu0 0
      %1859 = vmatpush1.bf16.msra.mxu0 %v1818
      %1860 = vmatprep.subr.bf16.mxu0 0
      %1861 = vmatpush1.bf16.msra.mxu0 %v1819
      %1862 = vmatprep.subr.bf16.mxu0 0
      %1863 = vmatpush1.bf16.msra.mxu0 %v1820
      %1864 = vmatprep.subr.bf16.mxu0 0
      %1865 = vmatpush1.bf16.msra.mxu0 %v1821
      %1866 = vmatprep.subr.bf16.mxu0 0
      %1867 = vmatpush1.bf16.msra.mxu0 %v1822
      %1868 = vmatprep.subr.bf16.mxu0 0
      %1869 = vmatpush1.bf16.msra.mxu0 %v1823
      %1870 = vmatprep.subr.bf16.mxu0 0
      %1871 = vmatpush1.bf16.msra.mxu0 %v1824
      %1872 = vmatprep.subr.bf16.mxu0 0
      %1873 = vmatpush1.bf16.msra.mxu0 %v1825
      %1874 = vmatprep.mubr.bf16.mxu0 %v1834
      %1875 = vmatmul.mubr.bf16.gmra.mrb[0].mxu0 %v1833
      %v1876 = vpop.f32.mrb[0].mxu0
      %v1877 = vadd.f32 0.0, %v1876
      %v1878 = vpop.f32.mrb[0].mxu0
      %v1879 = vpop.f32.mrb[0].mxu0
      %v1880 = vpop.f32.mrb[0].mxu0
      %1881 = vdwg.mxu0
      %1882 = vmatprep.subr.bf16.mxu0 0
      %1883 = vmatpush1.bf16.msra.mxu0 %v1826
      %1884 = vmatprep.subr.bf16.mxu0 0
      %1885 = vmatpush1.bf16.msra.mxu0 %v1827
      %1886 = vmatprep.subr.bf16.mxu0 0
      %1887 = vmatpush1.bf16.msra.mxu0 0
      %1888 = vmatprep.subr.bf16.mxu0 0
      %1889 = vmatpush1.bf16.msra.mxu0 0
      %1890 = vmatprep.subr.bf16.mxu0 0
      %1891 = vmatpush1.bf16.msra.mxu0 0
      %1892 = vmatprep.subr.bf16.mxu0 0
      %1893 = vmatpush1.bf16.msra.mxu0 0
      %1894 = vmatprep.subr.bf16.mxu0 0
      %1895 = vmatpush1.bf16.msra.mxu0 0
      %1896 = vmatprep.subr.bf16.mxu0 0
      %1897 = vmatpush1.bf16.msra.mxu0 0
      %1898 = vmatprep.subr.bf16.mxu0 0
      %1899 = vmatpush1.bf16.msra.mxu0 0
      %1900 = vmatprep.subr.bf16.mxu0 0
      %1901 = vmatpush1.bf16.msra.mxu0 0
      %1902 = vmatprep.subr.bf16.mxu0 0
      %1903 = vmatpush1.bf16.msra.mxu0 0
      %1904 = vmatprep.subr.bf16.mxu0 0
      %1905 = vmatpush1.bf16.msra.mxu0 0
      %1906 = vmatprep.subr.bf16.mxu0 0
      %1907 = vmatpush1.bf16.msra.mxu0 0
      %1908 = vmatprep.subr.bf16.mxu0 0
      %1909 = vmatpush1.bf16.msra.mxu0 0
      %1910 = vmatprep.subr.bf16.mxu0 0
      %1911 = vmatpush1.bf16.msra.mxu0 0
      %1912 = vmatprep.subr.bf16.mxu0 0
      %1913 = vmatpush1.bf16.msra.mxu0 0
      %1914 = vmatprep.mubr.bf16.mxu0 0
      %1915 = vmatmul.mubr.bf16.gmra.mrb[0].mxu0 %v1840
      %v1916 = vpop.f32.mrb[0].mxu0
      %v1917 = vadd.f32 %v1877, %v1916
      %v1918 = vpop.f32.mrb[0].mxu0
      %v1919 = vpop.f32.mrb[0].mxu0
      %v1920 = vpop.f32.mrb[0].mxu0
      %1921 = vdwg.mxu0
      %v1922 = vsel %vm1067, %v1917, 0.0
      %1923 = vadd.xlane.f32.xlu0 %v1922
      %v1924 = vpop.xlane.xlu0 %1923
      %v1925 = vmul.f32 %v1924, 0.015625
      %v1926 = vmul.f32 %v1917, %v1917
      %v1927 = vsel %vm1067, %v1926, 0.0
      %1928 = vadd.xlane.f32.xlu0 %v1927
      %v1929 = vpop.xlane.xlu0 %1928
      %v1930 = vmul.f32 %v1929, 0.015625
      %v1931 = vmul.f32 %v1925, %v1925
      %v1932 = vsub.f32 %v1930, %v1931
      %v1933 = vmax.f32 %v1932, 0.0
      %v1934 = vsub.f32 %v1917, %v1925
      %v1935 = vadd.f32 %v1933, 1e-05
      %v1936 = vrsqrt.pop %v1935
      %v1937 = vmul.f32 %v1934, %v1936
      %v1938 = vmax.f32 %v1937, 0.0
      %v1939 = vld [vmem:[%s14] sm:$0xff]
      %v1940 = vld [vmem:[%s14 + $0x8] sm:$0xff]
      %v1941 = vld [vmem:[%s14 + $0x10] sm:$0xff]
      %v1942 = vld [vmem:[%s14 + $0x18] sm:$0xff]
      %v1943 = vld [vmem:[%s14 + $0x20] sm:$0xff]
      %v1944 = vld [vmem:[%s14 + $0x28] sm:$0xff]
      %v1945 = vld [vmem:[%s14 + $0x30] sm:$0xff]
      %v1946 = vld [vmem:[%s14 + $0x38] sm:$0xff]
      %v1947 = vld [vmem:[%s14 + $0x40] sm:$0xff]
      %v1948 = vld [vmem:[%s14 + $0x48] sm:$0xff]
      %v1949 = vld [vmem:[%s14 + $0x50] sm:$0xff]
      %v1950 = vld [vmem:[%s14 + $0x58] sm:$0xff]
      %v1951 = vld [vmem:[%s14 + $0x60] sm:$0xff]
      %v1952 = vld [vmem:[%s14 + $0x68] sm:$0xff]
      %v1953 = vld [vmem:[%s14 + $0x70] sm:$0xff]
      %v1954 = vld [vmem:[%s14 + $0x78] sm:$0xff]
      %v1956 = vsel %vm1067, %v1938, 0
      %1958 = vmatprep.subr.mxu0 %v1940
      %1959 = vmatpush1.msra.mxu0 %v1939
      %1960 = vmatprep.subr.mxu0 %v1942
      %1961 = vmatpush1.msra.mxu0 %v1941
      %1962 = vmatprep.subr.mxu0 %v1944
      %1963 = vmatpush1.msra.mxu0 %v1943
      %1964 = vmatprep.subr.mxu0 %v1946
      %1965 = vmatpush1.msra.mxu0 %v1945
      %1966 = vmatprep.subr.mxu0 %v1948
      %1967 = vmatpush1.msra.mxu0 %v1947
      %1968 = vmatprep.subr.mxu0 %v1950
      %1969 = vmatpush1.msra.mxu0 %v1949
      %1970 = vmatprep.subr.mxu0 %v1952
      %1971 = vmatpush1.msra.mxu0 %v1951
      %1972 = vmatprep.subr.mxu0 %v1954
      %1973 = vmatpush1.msra.mxu0 %v1953
      %1974 = vmatprep.subr.mxu0 0.0
      %1975 = vmatpush1.msra.mxu0 0.0
      %1976 = vmatprep.subr.mxu0 0.0
      %1977 = vmatpush1.msra.mxu0 0.0
      %1978 = vmatprep.subr.mxu0 0.0
      %1979 = vmatpush1.msra.mxu0 0.0
      %1980 = vmatprep.subr.mxu0 0.0
      %1981 = vmatpush1.msra.mxu0 0.0
      %1982 = vmatprep.subr.mxu0 0.0
      %1983 = vmatpush1.msra.mxu0 0.0
      %1984 = vmatprep.subr.mxu0 0.0
      %1985 = vmatpush1.msra.mxu0 0.0
      %1986 = vmatprep.subr.mxu0 0.0
      %1987 = vmatpush1.msra.mxu0 0.0
      %1988 = vmatprep.subr.mxu0 0.0
      %1989 = vmatpush1.msra.mxu0 0.0
      %1990 = vmatprep.subr.mxu0 0.0
      %1991 = vmatpush1.msra.mxu0 0.0
      %1992 = vmatprep.subr.mxu0 0.0
      %1993 = vmatpush1.msra.mxu0 0.0
      %1994 = vmatprep.subr.mxu0 0.0
      %1995 = vmatpush1.msra.mxu0 0.0
      %1996 = vmatprep.subr.mxu0 0.0
      %1997 = vmatpush1.msra.mxu0 0.0
      %1998 = vmatprep.subr.mxu0 0.0
      %1999 = vmatpush1.msra.mxu0 0.0
      %2000 = vmatprep.subr.mxu0 0.0
      %2001 = vmatpush1.msra.mxu0 0.0
      %2002 = vmatprep.subr.mxu0 0.0
      %2003 = vmatpush1.msra.mxu0 0.0
      %2004 = vmatprep.subr.mxu0 0.0
      %2005 = vmatpush1.msra.mxu0 0.0
      %2006 = vmatprep.subr.mxu0 0.0
      %2007 = vmatpush1.msra.mxu0 0.0
      %2008 = vmatprep.subr.mxu0 0.0
      %2009 = vmatpush1.msra.mxu0 0.0
      %2010 = vmatprep.subr.mxu0 0.0
      %2011 = vmatpush1.msra.mxu0 0.0
      %2012 = vmatprep.subr.mxu0 0.0
      %2013 = vmatpush1.msra.mxu0 0.0
      %2014 = vmatprep.subr.mxu0 0.0
      %2015 = vmatpush1.msra.mxu0 0.0
      %2016 = vmatprep.subr.mxu0 0.0
      %2017 = vmatpush1.msra.mxu0 0.0
      %2018 = vmatprep.subr.mxu0 0.0
      %2019 = vmatpush1.msra.mxu0 0.0
      %2020 = vmatprep.subr.mxu0 0.0
      %2021 = vmatpush1.msra.mxu0 0.0
      %2022 = vmatprep.mubr.f32.mxu0 0.0
      %2023 = vmatmul.mubr.f32.gmra.mrb[0].mxu0 %v1956
      %v2024 = vpop.f32.mrb[0].mxu0
      %v2025 = vadd.f32 0.0, %v2024
      %v2026 = vpop.f32.mrb[0].mxu0
      %v2027 = vadd.f32 0.0, %v2026
      %2028 = vdwg.mxu0
      %v2029 = vld [vmem:[%s5] sm:$0xff]
      %2031 = vrot.lane.b32.xlu0 %v2027, 17
      %v2032 = vpop.permute.xlu0 %2031
      %2033 = vrot.lane.b32.xlu0 %v764, 17
      %v2034 = vpop.permute.xlu0 %2033
      %2038 = vrot.lane.b32.xlu0 %v2025, 17
      %v2039 = vpop.permute.xlu0 %2038
      %2040 = vrot.lane.b32.xlu0 %v763, 17
      %v2041 = vpop.permute.xlu0 %2040
      %v2042 = vsel %vm513, %v2039, %v2032
      %v2043 = vsel %vm513, %v2041, %v2034
      %v2048 = vsel %vm513, %v2032, %v2039
      %v2049 = vsel %vm513, %v2034, %v2041
      %v2050 = vlaneseq
      %v2051 = vshrl.u32 %v2050, 7
      %v2052 = vsub.s32 0, %v2051
      %v2053 = vrot.slane %v495, %v2052
      %v2054 = vlaneseq
      %v2055 = vshrl.u32 %v2054, 7
      %v2056 = vsub.s32 0, %v2055
      %v2057 = vrot.slane %v496, %v2056
      %v2058 = vmul.f32 %v2048, %v2053
      %v2059 = vmul.f32 %v2042, %v2057
      %v2060 = vmul.f32 %v2049, %v2053
      %v2061 = vmul.f32 %v2043, %v2057
      %2062 = vrot.lane.b32.xlu0 %v2027, 16
      %v2063 = vpop.permute.xlu0 %2062
      %2064 = vrot.lane.b32.xlu0 %v764, 16
      %v2065 = vpop.permute.xlu0 %2064
      %2068 = vrot.lane.b32.xlu0 %v2025, 16
      %v2069 = vpop.permute.xlu0 %2068
      %2070 = vrot.lane.b32.xlu0 %v763, 16
      %v2071 = vpop.permute.xlu0 %2070
      %v2072 = vsel %vm525, %v2069, %v2063
      %v2073 = vsel %vm525, %v2071, %v2065
      %v2078 = vsel %vm525, %v2063, %v2069
      %v2079 = vsel %vm525, %v2065, %v2071
      %v2080 = vlaneseq
      %v2081 = vshrl.u32 %v2080, 7
      %v2082 = vsub.s32 1, %v2081
      %v2083 = vrot.slane %v495, %v2082
      %v2084 = vlaneseq
      %v2085 = vshrl.u32 %v2084, 7
      %v2086 = vsub.s32 1, %v2085
      %v2087 = vrot.slane %v496, %v2086
      %v2088 = vmul.f32 %v2078, %v2083
      %v2089 = vmul.f32 %v2072, %v2087
      %v2090 = vmul.f32 %v2079, %v2083
      %v2091 = vmul.f32 %v2073, %v2087
      %2092 = vrot.lane.b32.xlu0 %v2027, 15
      %v2093 = vpop.permute.xlu0 %2092
      %2094 = vrot.lane.b32.xlu0 %v764, 15
      %v2095 = vpop.permute.xlu0 %2094
      %2098 = vrot.lane.b32.xlu0 %v2025, 15
      %v2099 = vpop.permute.xlu0 %2098
      %2100 = vrot.lane.b32.xlu0 %v763, 15
      %v2101 = vpop.permute.xlu0 %2100
      %v2102 = vsel %vm543, %v2099, %v2093
      %v2103 = vsel %vm543, %v2101, %v2095
      %v2108 = vsel %vm543, %v2093, %v2099
      %v2109 = vsel %vm543, %v2095, %v2101
      %v2110 = vlaneseq
      %v2111 = vshrl.u32 %v2110, 7
      %v2112 = vsub.s32 2, %v2111
      %v2113 = vrot.slane %v495, %v2112
      %v2114 = vlaneseq
      %v2115 = vshrl.u32 %v2114, 7
      %v2116 = vsub.s32 2, %v2115
      %v2117 = vrot.slane %v496, %v2116
      %v2118 = vmul.f32 %v2108, %v2113
      %v2119 = vmul.f32 %v2102, %v2117
      %v2120 = vmul.f32 %v2109, %v2113
      %v2121 = vmul.f32 %v2103, %v2117
      %2122 = vrot.lane.b32.xlu0 %v2027, 1
      %v2123 = vpop.permute.xlu0 %2122
      %2124 = vrot.lane.b32.xlu0 %v764, 1
      %v2125 = vpop.permute.xlu0 %2124
      %2128 = vrot.lane.b32.xlu0 %v2025, 1
      %v2129 = vpop.permute.xlu0 %2128
      %2130 = vrot.lane.b32.xlu0 %v763, 1
      %v2131 = vpop.permute.xlu0 %2130
      %v2132 = vsel %vm559, %v2129, %v2123
      %v2133 = vsel %vm559, %v2131, %v2125
      %v2138 = vsel %vm559, %v2123, %v2129
      %v2139 = vsel %vm559, %v2125, %v2131
      %v2140 = vlaneseq
      %v2141 = vshrl.u32 %v2140, 7
      %v2142 = vsub.s32 3, %v2141
      %v2143 = vrot.slane %v495, %v2142
      %v2144 = vlaneseq
      %v2145 = vshrl.u32 %v2144, 7
      %v2146 = vsub.s32 3, %v2145
      %v2147 = vrot.slane %v496, %v2146
      %v2148 = vmul.f32 %v2138, %v2143
      %v2149 = vmul.f32 %v2132, %v2147
      %v2150 = vmul.f32 %v2139, %v2143
      %v2151 = vmul.f32 %v2133, %v2147
      %2152 = vrot.lane.b32.xlu0 %v2025, 127
      %v2153 = vpop.permute.xlu0 %2152
      %2154 = vrot.lane.b32.xlu0 %v2027, 127
      %v2155 = vpop.permute.xlu0 %2154
      %v2156 = vsel %vm574, %v2153, %v2155
      %v2160 = vsel %vm574, %v2155, %v2153
      %v2161 = vlaneseq
      %v2162 = vshrl.u32 %v2161, 7
      %v2163 = vsub.s32 5, %v2162
      %v2164 = vrot.slane %v495, %v2163
      %v2165 = vlaneseq
      %v2166 = vshrl.u32 %v2165, 7
      %v2167 = vsub.s32 5, %v2166
      %v2168 = vrot.slane %v496, %v2167
      %v2169 = vmul.f32 %v2156, %v2164
      %v2170 = vmul.f32 %v2160, %v2168
      %v2171 = vmul.f32 %v803, %v2164
      %v2172 = vmul.f32 %v807, %v2168
      %2173 = vrot.lane.b32.xlu0 %v2025, 113
      %v2174 = vpop.permute.xlu0 %2173
      %2175 = vrot.lane.b32.xlu0 %v2027, 113
      %v2176 = vpop.permute.xlu0 %2175
      %2177 = vrot.lane.b32.xlu0 %v763, 113
      %v2178 = vpop.permute.xlu0 %2177
      %2179 = vrot.lane.b32.xlu0 %v764, 113
      %v2180 = vpop.permute.xlu0 %2179
      %v2181 = vsel %vm590, %v2174, %v2176
      %v2182 = vsel %vm590, %v2178, %v2180
      %v2189 = vsel %vm590, %v2176, %v2174
      %v2190 = vsel %vm590, %v2180, %v2178
      %v2191 = vlaneseq
      %v2192 = vshrl.u32 %v2191, 7
      %v2193 = vsub.s32 6, %v2192
      %v2194 = vrot.slane %v495, %v2193
      %v2195 = vlaneseq
      %v2196 = vshrl.u32 %v2195, 7
      %v2197 = vsub.s32 6, %v2196
      %v2198 = vrot.slane %v496, %v2197
      %v2199 = vmul.f32 %v2181, %v2194
      %v2200 = vmul.f32 %v2189, %v2198
      %v2201 = vmul.f32 %v2182, %v2194
      %v2202 = vmul.f32 %v2190, %v2198
      %2203 = vrot.lane.b32.xlu0 %v2025, 112
      %v2204 = vpop.permute.xlu0 %2203
      %2205 = vrot.lane.b32.xlu0 %v2027, 112
      %v2206 = vpop.permute.xlu0 %2205
      %v2207 = vsel %vm606, %v2204, %v2206
      %v2211 = vsel %vm606, %v2206, %v2204
      %v2212 = vlaneseq
      %v2213 = vshrl.u32 %v2212, 7
      %v2214 = vsub.s32 7, %v2213
      %v2215 = vrot.slane %v495, %v2214
      %v2216 = vlaneseq
      %v2217 = vshrl.u32 %v2216, 7
      %v2218 = vsub.s32 7, %v2217
      %v2219 = vrot.slane %v496, %v2218
      %v2220 = vmul.f32 %v2207, %v2215
      %v2221 = vmul.f32 %v2211, %v2219
      %v2222 = vmul.f32 %v814, %v2215
      %v2223 = vmul.f32 %v818, %v2219
      %2224 = vrot.lane.b32.xlu0 %v2025, 111
      %v2225 = vpop.permute.xlu0 %2224
      %2226 = vrot.lane.b32.xlu0 %v2027, 111
      %v2227 = vpop.permute.xlu0 %2226
      %v2228 = vsel %vm622, %v2225, %v2227
      %v2232 = vsel %vm622, %v2227, %v2225
      %v2233 = vlaneseq
      %v2234 = vshrl.u32 %v2233, 7
      %v2235 = vsub.s32 0, %v2234
      %v2236 = vrot.slane %v497, %v2235
      %v2237 = vlaneseq
      %v2238 = vshrl.u32 %v2237, 7
      %v2239 = vsub.s32 0, %v2238
      %v2240 = vrot.slane %v498, %v2239
      %v2241 = vmul.f32 %v2228, %v2236
      %v2242 = vmul.f32 %v2232, %v2240
      %v2243 = vmul.f32 %v823, %v2236
      %v2244 = vmul.f32 %v827, %v2240
      %v2245 = vpack.c.bf16 %v2060, %v2058
      %v2246 = vpack.c.bf16 %v2061, %v2059
      %v2247 = vpack.c.bf16 %v2090, %v2088
      %v2248 = vpack.c.bf16 %v2091, %v2089
      %v2249 = vpack.c.bf16 %v2120, %v2118
      %v2250 = vpack.c.bf16 %v2121, %v2119
      %v2251 = vpack.c.bf16 %v2150, %v2148
      %v2252 = vpack.c.bf16 %v2151, %v2149
      %v2253 = vpack.c.bf16 %v763, %v2025
      %v2254 = vpack.c.bf16 %v764, %v2027
      %v2255 = vpack.c.bf16 %v2171, %v2169
      %v2256 = vpack.c.bf16 %v2172, %v2170
      %v2257 = vpack.c.bf16 %v2201, %v2199
      %v2258 = vpack.c.bf16 %v2202, %v2200
      %v2259 = vpack.c.bf16 %v2222, %v2220
      %v2260 = vpack.c.bf16 %v2223, %v2221
      %v2261 = vpack.c.bf16 %v2243, %v2241
      %v2262 = vpack.c.bf16 %v2244, %v2242
      %v2264 = vunpack.c.l.b16 %v2029
      %v2265 = vunpack.c.h.b16 %v2029
      %v2266 = vpack.c.b16 %v2264, %v2264
      %v2267 = vpack.c.b16 %v2265, %v2265
      %v2270 = vsel %vm525, %v2267, 0
      %2272 = vmatprep.subr.bf16.mxu0 %v2246
      %2273 = vmatpush1.bf16.msra.mxu0 %v2245
      %2274 = vmatprep.subr.bf16.mxu0 %v2248
      %2275 = vmatpush1.bf16.msra.mxu0 %v2247
      %2276 = vmatprep.subr.bf16.mxu0 %v2250
      %2277 = vmatpush1.bf16.msra.mxu0 %v2249
      %2278 = vmatprep.subr.bf16.mxu0 %v2252
      %2279 = vmatpush1.bf16.msra.mxu0 %v2251
      %2280 = vmatprep.subr.bf16.mxu0 %v2254
      %2281 = vmatpush1.bf16.msra.mxu0 %v2253
      %2282 = vmatprep.subr.bf16.mxu0 %v2256
      %2283 = vmatpush1.bf16.msra.mxu0 %v2255
      %2284 = vmatprep.subr.bf16.mxu0 %v2258
      %2285 = vmatpush1.bf16.msra.mxu0 %v2257
      %2286 = vmatprep.subr.bf16.mxu0 %v2260
      %2287 = vmatpush1.bf16.msra.mxu0 %v2259
      %2288 = vmatprep.subr.bf16.mxu0 %v2262
      %2289 = vmatpush1.bf16.msra.mxu0 %v2261
      %2290 = vmatprep.subr.bf16.mxu0 0
      %2291 = vmatpush1.bf16.msra.mxu0 0
      %2292 = vmatprep.subr.bf16.mxu0 0
      %2293 = vmatpush1.bf16.msra.mxu0 0
      %2294 = vmatprep.subr.bf16.mxu0 0
      %2295 = vmatpush1.bf16.msra.mxu0 0
      %2296 = vmatprep.subr.bf16.mxu0 0
      %2297 = vmatpush1.bf16.msra.mxu0 0
      %2298 = vmatprep.subr.bf16.mxu0 0
      %2299 = vmatpush1.bf16.msra.mxu0 0
      %2300 = vmatprep.subr.bf16.mxu0 0
      %2301 = vmatpush1.bf16.msra.mxu0 0
      %2302 = vmatprep.subr.bf16.mxu0 0
      %2303 = vmatpush1.bf16.msra.mxu0 0
      %2304 = vmatprep.mubr.bf16.mxu0 %v2270
      %2305 = vmatmul.mubr.bf16.gmra.mrb[0].mxu0 %v2266
      %v2306 = vpop.f32.mrb[0].mxu0
      %v2307 = vadd.f32 0.0, %v2306
      %v2308 = vpop.f32.mrb[0].mxu0
      %v2309 = vadd.f32 0.0, %v2308
      %v2310 = vpop.f32.mrb[0].mxu0
      %v2311 = vpop.f32.mrb[0].mxu0
      %2312 = vdwg.mxu0
      %v2313 = vadd.f32 %v2307, %v2309
      %2314 = vadd.xlane.f32.xlu0 %v2313
      %v2315 = vpop.xlane.xlu0 %2314
      %v2316 = vmul.f32 %v2315, 0.00390625
      %v2317 = vmul.f32 %v2307, %v2307
      %v2318 = vmul.f32 %v2309, %v2309
      %v2319 = vadd.f32 %v2317, %v2318
      %2320 = vadd.xlane.f32.xlu0 %v2319
      %v2321 = vpop.xlane.xlu0 %2320
      %v2322 = vmul.f32 %v2321, 0.00390625
      %v2323 = vmul.f32 %v2316, %v2316
      %v2324 = vsub.f32 %v2322, %v2323
      %v2325 = vmax.f32 %v2324, 0.0
      %v2326 = vsub.f32 %v2307, %v2316
      %v2327 = vsub.f32 %v2309, %v2316
      %v2328 = vadd.f32 %v2325, 1e-05
      %v2329 = vrsqrt.pop %v2328
      %v2330 = vmul.f32 %v2326, %v2329
      %v2331 = vmul.f32 %v2327, %v2329
      %v2332 = vmax.f32 %v2330, 0.0
      %v2333 = vmax.f32 %v2331, 0.0
      %v2334 = vld [vmem:[%s6] sm:$0x1]
      %v2335 = vld [vmem:[#allocation2] sm:$0x1]
      %2337 = vset.pattern.permute.xlu0 0
      %2338 = vperm.xlu0 %2337, %v2335
      %v2339 = vpop.permute.xlu0 %2338
      %v2341 = vlaneseq
      %v2342 = vshrl.u32 %v2341, 7
      %v2343 = vsub.s32 0, %v2342
      %v2344 = vrot.slane %v2339, %v2343
      %v2346 = vsel %vm925, %v2334, 0
      %2348 = vmatprep.subr.mxu0 %v2333
      %2349 = vmatpush1.msra.mxu0 %v2332
      %2350 = vmatprep.subr.mxu0 0.0
      %2351 = vmatpush1.msra.mxu0 0.0
      %2352 = vmatprep.subr.mxu0 0.0
      %2353 = vmatpush1.msra.mxu0 0.0
      %2354 = vmatprep.subr.mxu0 0.0
      %2355 = vmatpush1.msra.mxu0 0.0
      %2356 = vmatprep.subr.mxu0 0.0
      %2357 = vmatpush1.msra.mxu0 0.0
      %2358 = vmatprep.subr.mxu0 0.0
      %2359 = vmatpush1.msra.mxu0 0.0
      %2360 = vmatprep.subr.mxu0 0.0
      %2361 = vmatpush1.msra.mxu0 0.0
      %2362 = vmatprep.subr.mxu0 0.0
      %2363 = vmatpush1.msra.mxu0 0.0
      %2364 = vmatprep.subr.mxu0 0.0
      %2365 = vmatpush1.msra.mxu0 0.0
      %2366 = vmatprep.subr.mxu0 0.0
      %2367 = vmatpush1.msra.mxu0 0.0
      %2368 = vmatprep.subr.mxu0 0.0
      %2369 = vmatpush1.msra.mxu0 0.0
      %2370 = vmatprep.subr.mxu0 0.0
      %2371 = vmatpush1.msra.mxu0 0.0
      %2372 = vmatprep.subr.mxu0 0.0
      %2373 = vmatpush1.msra.mxu0 0.0
      %2374 = vmatprep.subr.mxu0 0.0
      %2375 = vmatpush1.msra.mxu0 0.0
      %2376 = vmatprep.subr.mxu0 0.0
      %2377 = vmatpush1.msra.mxu0 0.0
      %2378 = vmatprep.subr.mxu0 0.0
      %2379 = vmatpush1.msra.mxu0 0.0
      %2380 = vmatprep.subr.mxu0 0.0
      %2381 = vmatpush1.msra.mxu0 0.0
      %2382 = vmatprep.subr.mxu0 0.0
      %2383 = vmatpush1.msra.mxu0 0.0
      %2384 = vmatprep.subr.mxu0 0.0
      %2385 = vmatpush1.msra.mxu0 0.0
      %2386 = vmatprep.subr.mxu0 0.0
      %2387 = vmatpush1.msra.mxu0 0.0
      %2388 = vmatprep.subr.mxu0 0.0
      %2389 = vmatpush1.msra.mxu0 0.0
      %2390 = vmatprep.subr.mxu0 0.0
      %2391 = vmatpush1.msra.mxu0 0.0
      %2392 = vmatprep.subr.mxu0 0.0
      %2393 = vmatpush1.msra.mxu0 0.0
      %2394 = vmatprep.subr.mxu0 0.0
      %2395 = vmatpush1.msra.mxu0 0.0
      %2396 = vmatprep.subr.mxu0 0.0
      %2397 = vmatpush1.msra.mxu0 0.0
      %2398 = vmatprep.subr.mxu0 0.0
      %2399 = vmatpush1.msra.mxu0 0.0
      %2400 = vmatprep.subr.mxu0 0.0
      %2401 = vmatpush1.msra.mxu0 0.0
      %2402 = vmatprep.subr.mxu0 0.0
      %2403 = vmatpush1.msra.mxu0 0.0
      %2404 = vmatprep.subr.mxu0 0.0
      %2405 = vmatpush1.msra.mxu0 0.0
      %2406 = vmatprep.subr.mxu0 0.0
      %2407 = vmatpush1.msra.mxu0 0.0
      %2408 = vmatprep.subr.mxu0 0.0
      %2409 = vmatpush1.msra.mxu0 0.0
      %2410 = vmatprep.subr.mxu0 0.0
      %2411 = vmatpush1.msra.mxu0 0.0
      %2412 = vmatprep.mubr.f32.mxu0 0.0
      %2413 = vmatmul.mubr.f32.gmra.mrb[0].mxu0 %v2346
      %v2414 = vpop.f32.mrb[0].mxu0
      %v2415 = vadd.f32 %v2344, %v2414
      %v2416 = vpop.f32.mrb[0].mxu0
      %v2417 = vadd.f32 %v2344, %v2416
      %2418 = vdwg.mxu0
      %v2419 = vadd.f32 %v2415, %v510
      %v2420 = vadd.f32 %v2417, %v503
      %v2423 = vcombine.low %v2419, %v2420
      %v2425 = vunpack.c.l.s4 1966171168
      %v2426 = vunpack.c.0.s8 %v2425
      %v2427 = vlaneseq
      %v2428 = vshrl.u32 %v2427, 7
      %v2429 = vsub.s32 %v2426, %v2428
      %v2430 = vrot.slane %v2423, %v2429
      %v2432 = vunpack.c.l.s4 1966171168
      %v2433 = vunpack.c.0.s8 %v2432
      %v2434 = vlaneseq
      %v2435 = vshrl.u32 %v2434, 7
      %v2436 = vsub.s32 %v2433, %v2435
      %v2437 = vrot.slane %v2430, %v2436
      %v2439 = vlaneseq
      %vm2440 = vcmp.ge.s32.totalorder %v2439, 0
      %vm2441 = vcmp.lt.s32.totalorder %v2439, 256
      %vm2442 = vmand %vm2440, %vm2441
      %2443 = vst.msk [vmem:[%s491] sm:$0x3] %vm2442, %v2437
      %p2444 = scmp.lt.s32.totalorder %s28, 1
      %s2445 = scalar_select %p2444, %s28, 1
      %s2446 = smul.addr %s2445, 2
      %s2447 = scalar_lea.vmem %s15, %s2446
      // Predicated region
      $region81: #{unet_forward.1} parent=79 // pred_check
        %p2448 = pneg %p366
      $region82: #{unet_forward.1} parent=79 // pred_check_branch
        %2450 = sbr.rel (%p2448) target = $region84
      $region83: #{unet_forward.1} parent=79 // pred_region
        _
      $region84: #{unet_forward.1} parent=79 // pred_fallthru
        _
    $region80: #{unet_forward.1} parent=5 // pred_fallthru
      _
    %p2451 = scmp.le.s32.totalorder 2, %s23
    // Predicated region
    $region85: #{unet_forward.1} parent=5 // pred_check
      %p2452 = pneg %p2451
    $region86: #{unet_forward.1} parent=5 // pred_check_branch
      %2454 = sbr.rel (%p2452) target = $region88
    $region87: #{unet_forward.1} parent=5 // pred_region
      %s2455 = ssub.s32 %s23, 2
      // Predicated region
      $region89: #{unet_forward.1} parent=87 // pred_check
        %p2456 = pneg %p372
      $region90: #{unet_forward.1} parent=87 // pred_check_branch
        %2458 = sbr.rel (%p2456) target = $region92
      $region91: #{unet_forward.1} parent=87 // pred_region
        %p2459 = scmp.lt.s32.totalorder %s29, 1
        %s2460 = scalar_select %p2459, %s29, 1
        %s2461 = smul.addr %s2460, 2
        %s2462 = scalar_lea.vmem %s15, %s2461
      $region92: #{unet_forward.1} parent=87 // pred_fallthru
        _
    $region88: #{unet_forward.1} parent=5 // pred_fallthru
      _
  $region6: #{unet_forward.1} parent=0 // loop_footer
    %s27 = sadd.s32 1, %s23
  $region7: #{unet_forward.1} parent=0 // loop_footer_branch
    %22 = sbr.rel target = $region3
  $region8: #{unet_forward.1} parent=0 // loop_exit
    _

</llo_original>
